<compile_context>
chip_gen: v7x
topology: tpu7x:2x2x1
jax: 0.10.0
libtpu: 0.0.40
codegen_flags: <defaults>
</compile_context>

<pallas_src>
import jax
import jax.numpy as jnp
from jax.experimental import pallas as pl
from jax.experimental.pallas import tpu as pltpu

HEADS = 2
EMB = 3                   # embedding_size
HC = HEADS * EMB          # 6
NEG_SLOPE = 0.2           # GATv2 leaky_relu slope
GN_EPS = 1e-5             # GraphNorm eps
PCOLS = 128               # lane width for packed buffers and padded q output


# ----------------------------- packing helpers (host) -----------------------------

def _pack_rows(named):
    """Stack 2-D f32 blocks into one [rows, 128] buffer.  Every block starts at an
    8-row (sublane-tile) aligned offset so all in-kernel static slices are tile-aligned."""
    off = {}
    blocks = []
    r = 0
    for name, a in named:
        a = jnp.asarray(a, jnp.float32)
        nr, nc = a.shape
        assert nc <= PCOLS, f"{name} wider than {PCOLS}"
        pad_r = (-nr) % 8
        blocks.append(jnp.pad(a, ((0, pad_r), (0, PCOLS - nc))))
        off[name] = (r, nr, nc)
        r += nr + pad_r
    return jnp.concatenate(blocks, axis=0), off


def _pack_params(params):
    """Pack all weights/biases (transposed where the kernel consumes them transposed)."""
    named = []
    idx = 0
    for l in (1, 2, 3):
        Wl, bl, Wr, br, We, att, bo = params[idx:idx + 7]
        idx += 7
        WlrT = jnp.concatenate([Wl, Wr], axis=1).T            # [2*HC, Din]
        blrT = jnp.concatenate([bl, br], axis=1).T            # [2*HC, 1]
        att_bd = jnp.zeros((HEADS, HC), jnp.float32)          # block-diagonal attention weights
        for h in range(HEADS):
            att_bd = att_bd.at[h, h * EMB:(h + 1) * EMB].set(att[h])
        named += [(f"WlrT{l}", WlrT), (f"blrT{l}", blrT), (f"WeT{l}", We.T),
                  (f"attbd{l}", att_bd), (f"boT{l}", bo.T)]
    for l in (1, 2, 3):
        gw, gb, gms = params[idx:idx + 3]
        idx += 3
        named += [(f"gwT{l}", gw.T), (f"gbT{l}", gb.T), (f"gmsT{l}", gms.T)]
    Wv1, bv1, Wv2, bv2, Wv3, bv3 = params[idx:idx + 6]; idx += 6
    Wa1, ba1, Wa2, ba2, Wa3, ba3 = params[idx:idx + 6]; idx += 6
    A = Wa3.shape[1]
    Wa3p = jnp.zeros((Wa3.shape[0], PCOLS), jnp.float32).at[:, :A].set(Wa3)   # lane-dense final
    ba3p = jnp.zeros((1, PCOLS), jnp.float32).at[:, :A].set(ba3)
    named += [("Wv1", Wv1), ("bv1", bv1), ("Wv2", Wv2), ("bv2", bv2), ("Wv3", Wv3), ("bv3", bv3),
              ("Wa1", Wa1), ("ba1", ba1), ("Wa2", Wa2), ("ba2", ba2), ("Wa3p", Wa3p), ("ba3p", ba3p)]
    return _pack_rows(named)


# --------------------------------- kernel factory ------------------------------------

def _make_kernel(poff, aoff, N, B, Fe, A):
    inv_A = 1.0 / float(A)

    def kernel(xT_ref, edFa_ref, aux_ref, p_ref, q_ref):
        xT0 = xT_ref[...]                            # [F, N]   node features, transposed
        edFa = edFa_ref[...]                         # [Fe+1, N*N] bf16: edge attrs + adj plane
        edF = edFa[0:Fe, :]                          # [Fe, N*N], column = target*N + source
        adjF = edFa[Fe:Fe + 1, :]                    # [1, N*N]  adjacency (incl. self loops)

        def getp(name):
            r0, nr, nc = poff[name]
            return p_ref[r0:r0 + nr, 0:nc]

        def geta(name):
            r0, nr, nc = aoff[name]
            return aux_ref[r0:r0 + nr, 0:nc]

        bhmT = geta("bhmT")                          # [N, B] mean-scaled graph membership (T)
        bh = geta("bh")                              # [B, N] one-hot graph membership
        selT = geta("selT")                          # [N, B] one-hot current node per graph (T)
        am = geta("am")                              # [B, 128] action mask, zero-padded

        # ---------------- GATv2Conv (concat heads), transposed [C, N] layout ----------------
        def gat(xT, l):
            WlrT = getp(f"WlrT{l}")                  # [2*HC, Din]
            blrT = getp(f"blrT{l}")                  # [2*HC, 1]
            WeT = getp(f"WeT{l}")                    # [HC, Fe]
            att_bd = getp(f"attbd{l}")               # [HEADS, HC] block-diagonal
            boT = getp(f"boT{l}")                    # [HC, 1]

            xlrT = jnp.dot(WlrT, xT, preferred_element_type=jnp.float32) + blrT   # [2*HC, N]
            xlT = xlrT[0:HC, :]                      # source transform (values + attn), [HC, Ns]
            xrT = xlrT[HC:2 * HC, :]                 # target transform (attn only),      [HC, Nt]

            # edge projection on the MXU (bf16 operands, f32 accumulate)
            ep = jnp.dot(WeT.astype(jnp.bfloat16), edF,
                         preferred_element_type=jnp.float32)                      # [HC, N*N]
            t = xrT[:, :, None] + xlT[:, None, :] + ep.reshape(HC, N, N)           # [HC, Nt, Ns]
            t = jnp.where(t > 0.0, t, NEG_SLOPE * t)                               # leaky_relu

            # attention scores for both heads in ONE matmul over the flattened edge tensor
            sc = jnp.dot(att_bd, t.reshape(HC, N * N),
                         preferred_element_type=jnp.float32)                       # [HEADS, N*N]
            sc = jnp.where(adjF > 0.0, sc, -1e9).reshape(HEADS, N, N)
            sc = sc - jnp.max(sc, axis=2, keepdims=True)
            p = jnp.exp(sc)
            inv = pl.reciprocal(jnp.sum(p, axis=2, keepdims=True), approx=True)
            alpha = (p * inv).astype(jnp.bfloat16)                                 # [HEADS, Nt, Ns]

            xl_b = xlT.astype(jnp.bfloat16)
            outs = [jnp.einsum('cs,ts->ct', xl_b[h * EMB:(h + 1) * EMB, :], alpha[h],
                               preferred_element_type=jnp.float32)
                    for h in range(HEADS)]
            return jnp.concatenate(outs, axis=0) + boT                             # [HC, N]

        # --------------------------------- GraphNorm ([C, N]) -------------------------------
        def gnorm(xT, l):
            gwT = getp(f"gwT{l}")
            gbT = getp(f"gbT{l}")
            gmsT = getp(f"gmsT{l}")
            seg_mean = jnp.dot(xT, bhmT, preferred_element_type=jnp.float32)        # [HC, B]
            centered = xT - jnp.dot(seg_mean, bh, preferred_element_type=jnp.float32) * gmsT
            seg_var = jnp.dot(centered * centered, bhmT, preferred_element_type=jnp.float32)
            inv_std = jax.lax.rsqrt(seg_var + GN_EPS)                               # [HC, B]
            inv_std_n = jnp.dot(inv_std, bh, preferred_element_type=jnp.float32)    # [HC, N]
            return gwT * centered * inv_std_n + gbT

        # conv -> norm -> relu (dropout is identity at inference)
        x1T = jax.nn.relu(gnorm(gat(xT0, 1), 1))
        x2T = jax.nn.relu(gnorm(gat(x1T, 2), 2))
        x3T = jax.nn.relu(gnorm(gat(x2T, 3), 3))

        # per-graph current-node gather (matmuls against the one-hot selector), then to [B, D]
        featT = jnp.concatenate(
            [jnp.dot(p_, selT, preferred_element_type=jnp.float32)
             for p_ in (xT0, x1T, x2T, x3T)], axis=0)                               # [F+3*HC, B]
        feat = featT.T                                                              # [B, F+3*HC]

        # dueling heads
        val = jax.nn.relu(jnp.dot(feat, getp("Wv1"), preferred_element_type=jnp.float32) + getp("bv1"))
        val = jax.nn.relu(jnp.dot(val, getp("Wv2"), preferred_element_type=jnp.float32) + getp("bv2"))
        val = jnp.dot(val, getp("Wv3"), preferred_element_type=jnp.float32) + getp("bv3")     # [B, 1]

        adv = jax.nn.relu(jnp.dot(feat, getp("Wa1"), preferred_element_type=jnp.float32) + getp("ba1"))
        adv = jax.nn.relu(jnp.dot(adv, getp("Wa2"), preferred_element_type=jnp.float32) + getp("ba2"))
        # final advantage weights/bias are zero-padded to 128 lanes -> lane-dense [B, 128] output
        adv = jnp.dot(adv, getp("Wa3p"), preferred_element_type=jnp.float32) + getp("ba3p")

        mean_adv = jnp.sum(adv, axis=1, keepdims=True) * inv_A   # padded lanes are exactly 0
        q = val + adv - mean_adv
        q = jnp.where(am == 0.0, -1e8, q)                        # padded lanes masked (sliced outside)
        q_ref[...] = q

    return kernel


# --------------------------------- glue / wrapper -------------------------------------

def graph_qnetwork_forward(params, x, edge_index, edge_attr, batch,
                           current_node_ids, action_mask, num_graphs):
    N, F = x.shape
    Fe = edge_attr.shape[1]
    A = action_mask.shape[1]
    B = num_graphs
    assert N <= PCOLS and B <= PCOLS, "pack_rows aux layout assumes N, B <= 128 (pad/tile for larger)"
    src = edge_index[0]
    dst = edge_index[1]

    # dense adjacency / edge attrs (target-major), self-loops with fill_value='mean'
    # (duplicate/parallel edges collapse under the dense scatter; PyG would softmax them separately)
    adj = jnp.zeros((N, N), jnp.float32).at[dst, src].set(1.0)
    e_dense = jnp.zeros((N, N, Fe), jnp.float32).at[dst, src].set(edge_attr.astype(jnp.float32))
    deg = jnp.zeros((N,), jnp.float32).at[dst].add(1.0)
    loop_attr = (jnp.zeros((N, Fe), jnp.float32).at[dst].add(edge_attr.astype(jnp.float32))
                 / jnp.maximum(deg, 1.0)[:, None])
    diag = jnp.arange(N)
    adj = adj.at[diag, diag].set(1.0)
    e_dense = e_dense.at[diag, diag].set(loop_attr)
    # [Fe+1, N*N] bf16: edge features + adjacency plane, column index = target*N + source
    edF = jnp.transpose(e_dense, (2, 0, 1)).reshape(Fe, N * N)
    edFa = jnp.concatenate([edF, adj.reshape(1, N * N)], axis=0).astype(jnp.bfloat16)

    # per-graph membership (mean-scaled transpose), one-hot membership, current-node selectors
    bh = (batch[None, :] == jnp.arange(B)[:, None]).astype(jnp.float32)        # [B, N]
    counts = jnp.sum(bh, axis=1, keepdims=True)
    bh_mean = bh / jnp.maximum(counts, 1.0)                                    # guard empty graphs
    offsets = jnp.concatenate([jnp.zeros((1,), jnp.int32),
                               jnp.cumsum(counts[:-1, 0]).astype(jnp.int32)])
    global_idx = current_node_ids.astype(jnp.int32) + offsets
    sel = (global_idx[:, None] == jnp.arange(N)[None, :]).astype(jnp.float32)  # [B, N]
    am_pad = jnp.zeros((B, PCOLS), jnp.float32).at[:, :A].set(action_mask.astype(jnp.float32))

    aux, aoff = _pack_rows([("bhmT", bh_mean.T), ("bh", bh),
                            ("selT", sel.T), ("am", am_pad)])                  # one aux DMA
    pbuf, poff = _pack_params(params)                                          # one param DMA

    kernel = _make_kernel(poff, aoff, N, B, Fe, A)
    vmem = pl.BlockSpec(memory_space=pltpu.MemorySpace.VMEM)
    inputs = [x.astype(jnp.float32).T, edFa, aux, pbuf]                        # 4 inputs total
    q_pad = pl.pallas_call(
        kernel,
        out_shape=jax.ShapeDtypeStruct((B, PCOLS), jnp.float32),
        in_specs=[vmem] * len(inputs),
        out_specs=vmem,
        compiler_params=pltpu.CompilerParams(vmem_limit_bytes=32 * 1024 * 1024),
    )(*inputs)
    return q_pad[:, :A]


def init_params(key, num_node_features, num_edge_features, num_actions):
    keys = jax.random.split(key, 64)
    ki = iter(keys)

    def w(shape, scale=0.3):
        return (scale * jax.random.normal(next(ki), shape)).astype(jnp.float32)

    params = []
    in_dims = [num_node_features, HC, HC]
    # 3x GATv2Conv: Wl, bl, Wr, br, We (edge, no bias), att [H, C], output bias
    for l in range(3):
        din = in_dims[l]
        params += [w((din, HC)), w((1, HC), 0.1),
                   w((din, HC)), w((1, HC), 0.1),
                   w((num_edge_features, HC)),
                   w((HEADS, EMB)),
                   w((1, HC), 0.1)]
    # 3x GraphNorm: weight=1, bias=0, mean_scale=1 (PyG defaults)
    for l in range(3):
        params += [jnp.ones((1, HC), jnp.float32),
                   jnp.zeros((1, HC), jnp.float32),
                   jnp.ones((1, HC), jnp.float32)]
    feat_dim = 3 * HC + num_node_features
    # value stream: feat->16->8->1
    params += [w((feat_dim, 16)), w((1, 16), 0.1),
               w((16, 8)), w((1, 8), 0.1),
               w((8, 1)), w((1, 1), 0.1)]
    # advantage stream: feat->64->64->num_actions
    params += [w((feat_dim, 64)), w((1, 64), 0.1),
               w((64, 64)), w((1, 64), 0.1),
               w((64, num_actions)), w((1, num_actions), 0.1)]
    return params


if __name__ == "__main__":
    num_node_features = 4
    num_edge_features = 4
    num_actions = 8
    num_graphs = 2
    nodes_per_graph = 6
    N = num_graphs * nodes_per_graph

    key = jax.random.PRNGKey(0)
    kx, ke, kp = jax.random.split(key, 3)

    x = jax.random.normal(kx, (N, num_node_features), jnp.float32)

    # bidirectional ring within each graph (no explicit self loops)
    src_list, dst_list = [], []
    for g in range(num_graphs):
        base = g * nodes_per_graph
        for u in range(nodes_per_graph):
            v = (u + 1) % nodes_per_graph
            src_list += [base + u, base + v]
            dst_list += [base + v, base + u]
    edge_index = jnp.array([src_list, dst_list], dtype=jnp.int32)
    edge_attr = jax.random.normal(ke, (edge_index.shape[1], num_edge_features), jnp.float32)

    batch = jnp.repeat(jnp.arange(num_graphs, dtype=jnp.int32), nodes_per_graph)
    current_node_ids = jnp.array([2, 4], dtype=jnp.int32)
    action_mask = jnp.array([[1, 1, 0, 1, 1, 0, 1, 1],
                             [0, 1, 1, 1, 0, 1, 1, 1]], dtype=jnp.int32)

    params = init_params(kp, num_node_features, num_edge_features, num_actions)

    q = graph_qnetwork_forward(params, x, edge_index, edge_attr, batch,
                               current_node_ids, action_mask, num_graphs)
    q = jax.block_until_ready(q)

    # torch code raises on NaN; replicate the check host-side.
    if bool(jnp.any(jnp.isnan(q))):
        raise ValueError("Qvals contains nan")
    print("KERNEL_OK")
</pallas_src>

<mosaic_0001>
module attributes {stable_mosaic.version = 11 : i64} {
  func.func @kernel(%arg0: memref<4x12xf32, #tpu.memory_space<vmem>>, %arg1: memref<5x144xbf16, #tpu.memory_space<vmem>>, %arg2: memref<48x128xf32, #tpu.memory_space<vmem>>, %arg3: memref<488x128xf32, #tpu.memory_space<vmem>>, %arg4: memref<2x128xf32, #tpu.memory_space<vmem>>) attributes {dimension_semantics = [], scalar_prefetch = 0 : i64, scratch_operands = 0 : i64, tpu.core_type = #tpu.core_type<tc>} {
    %c0 = arith.constant 0 : index
    %c0_0 = arith.constant 0 : index
    %0 = vector.load %arg0[%c0, %c0_0] : memref<4x12xf32, #tpu.memory_space<vmem>>, vector<4x12xf32>
    %c0_1 = arith.constant 0 : index
    %c0_2 = arith.constant 0 : index
    %1 = vector.load %arg1[%c0_1, %c0_2] : memref<5x144xbf16, #tpu.memory_space<vmem>>, vector<5x144xbf16>
    %2 = vector.extract_strided_slice %1 {offsets = [0, 0], sizes = [4, 144], strides = [1, 1]} : vector<5x144xbf16> to vector<4x144xbf16>
    %3 = vector.extract_strided_slice %1 {offsets = [4, 0], sizes = [1, 144], strides = [1, 1]} : vector<5x144xbf16> to vector<1x144xbf16>
    %c0_3 = arith.constant 0 : index
    %c0_4 = arith.constant 0 : index
    %4 = vector.load %arg2[%c0_3, %c0_4] : memref<48x128xf32, #tpu.memory_space<vmem>>, vector<12x2xf32>
    %c16 = arith.constant 16 : index
    %c0_5 = arith.constant 0 : index
    %5 = vector.load %arg2[%c16, %c0_5] : memref<48x128xf32, #tpu.memory_space<vmem>>, vector<2x12xf32>
    %c24 = arith.constant 24 : index
    %c0_6 = arith.constant 0 : index
    %6 = vector.load %arg2[%c24, %c0_6] : memref<48x128xf32, #tpu.memory_space<vmem>>, vector<12x2xf32>
    %c40 = arith.constant 40 : index
    %c0_7 = arith.constant 0 : index
    %7 = vector.load %arg2[%c40, %c0_7] : memref<48x128xf32, #tpu.memory_space<vmem>>, vector<2x128xf32>
    %c0_8 = arith.constant 0 : index
    %c0_9 = arith.constant 0 : index
    %8 = vector.load %arg3[%c0_8, %c0_9] : memref<488x128xf32, #tpu.memory_space<vmem>>, vector<12x4xf32>
    %c16_10 = arith.constant 16 : index
    %c0_11 = arith.constant 0 : index
    %9 = vector.load %arg3[%c16_10, %c0_11] : memref<488x128xf32, #tpu.memory_space<vmem>>, vector<12x1xf32>
    %c32 = arith.constant 32 : index
    %c0_12 = arith.constant 0 : index
    %10 = vector.load %arg3[%c32, %c0_12] : memref<488x128xf32, #tpu.memory_space<vmem>>, vector<6x4xf32>
    %c40_13 = arith.constant 40 : index
    %c0_14 = arith.constant 0 : index
    %11 = vector.load %arg3[%c40_13, %c0_14] : memref<488x128xf32, #tpu.memory_space<vmem>>, vector<2x6xf32>
    %c48 = arith.constant 48 : index
    %c0_15 = arith.constant 0 : index
    %12 = vector.load %arg3[%c48, %c0_15] : memref<488x128xf32, #tpu.memory_space<vmem>>, vector<6x1xf32>
    %cst = arith.constant dense<0.000000e+00> : vector<12x12xf32>
    %13 = tpu.matmul %8, %0, %cst {dimension_numbers = #tpu.dot_dimension_numbers<[1], [0], [0], [1], [0, 0, 1, 1], [], []>} : vector<12x4xf32>, vector<4x12xf32>, vector<12x12xf32> -> vector<12x12xf32>
    %14 = vector.broadcast %9 : vector<12x1xf32> to vector<12x12xf32>
    %15 = arith.addf %13, %14 : vector<12x12xf32>
    %16 = vector.extract_strided_slice %15 {offsets = [0, 0], sizes = [6, 12], strides = [1, 1]} : vector<12x12xf32> to vector<6x12xf32>
    %17 = vector.extract_strided_slice %15 {offsets = [6, 0], sizes = [6, 12], strides = [1, 1]} : vector<12x12xf32> to vector<6x12xf32>
    %18 = arith.truncf %10 : vector<6x4xf32> to vector<6x4xbf16>
    %cst_16 = arith.constant dense<0.000000e+00> : vector<6x144xf32>
    %19 = tpu.matmul %18, %2, %cst_16 {dimension_numbers = #tpu.dot_dimension_numbers<[1], [0], [0], [1], [0, 0, 1, 1], [], []>} : vector<6x4xbf16>, vector<4x144xbf16>, vector<6x144xf32> -> vector<6x144xf32>
    %20 = vector.shape_cast %17 : vector<6x12xf32> to vector<6x12x1xf32>
    %21 = vector.shape_cast %16 : vector<6x12xf32> to vector<6x1x12xf32>
    %22 = vector.broadcast %20 : vector<6x12x1xf32> to vector<6x12x12xf32>
    %23 = vector.broadcast %21 : vector<6x1x12xf32> to vector<6x12x12xf32>
    %24 = arith.addf %22, %23 : vector<6x12x12xf32>
    %25 = vector.shape_cast %19 : vector<6x144xf32> to vector<6x12x12xf32>
    %26 = arith.addf %24, %25 : vector<6x12x12xf32>
    %cst_17 = arith.constant 0.000000e+00 : f32
    %27 = vector.broadcast %cst_17 : f32 to vector<6x12x12xf32>
    %28 = arith.cmpf ogt, %26, %27 : vector<6x12x12xf32>
    %cst_18 = arith.constant 2.000000e-01 : f32
    %29 = vector.broadcast %cst_18 : f32 to vector<6x12x12xf32>
    %30 = arith.mulf %29, %26 : vector<6x12x12xf32>
    %31 = arith.select %28, %26, %30 : vector<6x12x12xi1>, vector<6x12x12xf32>
    %32 = vector.shape_cast %31 : vector<6x12x12xf32> to vector<6x144xf32>
    %cst_19 = arith.constant dense<0.000000e+00> : vector<2x144xf32>
    %33 = tpu.matmul %11, %32, %cst_19 {dimension_numbers = #tpu.dot_dimension_numbers<[1], [0], [0], [1], [0, 0, 1, 1], [], []>} : vector<2x6xf32>, vector<6x144xf32>, vector<2x144xf32> -> vector<2x144xf32>
    %cst_20 = arith.constant 0.000000e+00 : bf16
    %34 = vector.broadcast %cst_20 : bf16 to vector<1x144xbf16>
    %35 = arith.cmpf ogt, %3, %34 : vector<1x144xbf16>
    %cst_21 = arith.constant -1.000000e+09 : f32
    %36 = vector.shape_cast %35 : vector<1x144xi1> to vector<1x144xi1>
    %37 = vector.broadcast %36 : vector<1x144xi1> to vector<2x144xi1>
    %38 = vector.broadcast %cst_21 : f32 to vector<2x144xf32>
    %39 = arith.select %37, %33, %38 : vector<2x144xi1>, vector<2x144xf32>
    %40 = vector.shape_cast %39 : vector<2x144xf32> to vector<2x12x12xf32>
    %cst_22 = arith.constant dense<0xFF800000> : vector<2x12xf32>
    %41 = vector.multi_reduction <maximumf>, %40, %cst_22 [2] : vector<2x12x12xf32> to vector<2x12xf32>
    %42 = vector.shape_cast %41 : vector<2x12xf32> to vector<2x12x1xf32>
    %43 = vector.broadcast %42 : vector<2x12x1xf32> to vector<2x12x12xf32>
    %44 = arith.subf %40, %43 : vector<2x12x12xf32>
    %45 = math.exp %44 : vector<2x12x12xf32>
    %cst_23 = arith.constant dense<0.000000e+00> : vector<2x12xf32>
    %46 = vector.multi_reduction <add>, %45, %cst_23 [2] : vector<2x12x12xf32> to vector<2x12xf32>
    %47 = vector.shape_cast %46 : vector<2x12xf32> to vector<2x12x1xf32>
    %48 = tpu.reciprocal %47 {approx = true} : vector<2x12x1xf32> -> vector<2x12x1xf32>
    %49 = vector.broadcast %48 : vector<2x12x1xf32> to vector<2x12x12xf32>
    %50 = arith.mulf %45, %49 : vector<2x12x12xf32>
    %51 = arith.truncf %50 : vector<2x12x12xf32> to vector<2x12x12xbf16>
    %52 = arith.truncf %16 : vector<6x12xf32> to vector<6x12xbf16>
    %53 = vector.extract_strided_slice %52 {offsets = [0, 0], sizes = [3, 12], strides = [1, 1]} : vector<6x12xbf16> to vector<3x12xbf16>
    %54 = vector.extract_strided_slice %51 {offsets = [0, 0, 0], sizes = [1, 12, 12], strides = [1, 1, 1]} : vector<2x12x12xbf16> to vector<1x12x12xbf16>
    %55 = vector.shape_cast %54 : vector<1x12x12xbf16> to vector<12x12xbf16>
    "tpu.trace_start"() <{level = 10 : i32, message = "cs,ts->ct"}> : () -> ()
    %cst_24 = arith.constant dense<0.000000e+00> : vector<3x12xf32>
    %56 = tpu.matmul %53, %55, %cst_24 {dimension_numbers = #tpu.dot_dimension_numbers<[1], [1], [0], [0], [0, 0, 1, 0], [], []>} : vector<3x12xbf16>, vector<12x12xbf16>, vector<3x12xf32> -> vector<3x12xf32>
    "tpu.trace_stop"() : () -> ()
    %57 = vector.extract_strided_slice %52 {offsets = [3, 0], sizes = [3, 12], strides = [1, 1]} : vector<6x12xbf16> to vector<3x12xbf16>
    %58 = vector.extract_strided_slice %51 {offsets = [1, 0, 0], sizes = [1, 12, 12], strides = [1, 1, 1]} : vector<2x12x12xbf16> to vector<1x12x12xbf16>
    %59 = vector.shape_cast %58 : vector<1x12x12xbf16> to vector<12x12xbf16>
    "tpu.trace_start"() <{level = 10 : i32, message = "cs,ts->ct"}> : () -> ()
    %cst_25 = arith.constant dense<0.000000e+00> : vector<3x12xf32>
    %60 = tpu.matmul %57, %59, %cst_25 {dimension_numbers = #tpu.dot_dimension_numbers<[1], [1], [0], [0], [0, 0, 1, 0], [], []>} : vector<3x12xbf16>, vector<12x12xbf16>, vector<3x12xf32> -> vector<3x12xf32>
    "tpu.trace_stop"() : () -> ()
    %61 = tpu.concatenate %56, %60 in 0 : vector<3x12xf32>, vector<3x12xf32> -> vector<6x12xf32>
    %62 = vector.broadcast %12 : vector<6x1xf32> to vector<6x12xf32>
    %63 = arith.addf %61, %62 : vector<6x12xf32>
    %c168 = arith.constant 168 : index
    %c0_26 = arith.constant 0 : index
    %64 = vector.load %arg3[%c168, %c0_26] : memref<488x128xf32, #tpu.memory_space<vmem>>, vector<6x1xf32>
    %c176 = arith.constant 176 : index
    %c0_27 = arith.constant 0 : index
    %65 = vector.load %arg3[%c176, %c0_27] : memref<488x128xf32, #tpu.memory_space<vmem>>, vector<6x1xf32>
    %c184 = arith.constant 184 : index
    %c0_28 = arith.constant 0 : index
    %66 = vector.load %arg3[%c184, %c0_28] : memref<488x128xf32, #tpu.memory_space<vmem>>, vector<6x1xf32>
    %cst_29 = arith.constant dense<0.000000e+00> : vector<6x2xf32>
    %67 = tpu.matmul %63, %4, %cst_29 {dimension_numbers = #tpu.dot_dimension_numbers<[1], [0], [0], [1], [0, 0, 1, 1], [], []>} : vector<6x12xf32>, vector<12x2xf32>, vector<6x2xf32> -> vector<6x2xf32>
    %cst_30 = arith.constant dense<0.000000e+00> : vector<6x12xf32>
    %68 = tpu.matmul %67, %5, %cst_30 {dimension_numbers = #tpu.dot_dimension_numbers<[1], [0], [0], [1], [0, 0, 1, 1], [], []>} : vector<6x2xf32>, vector<2x12xf32>, vector<6x12xf32> -> vector<6x12xf32>
    %69 = vector.broadcast %66 : vector<6x1xf32> to vector<6x12xf32>
    %70 = arith.mulf %68, %69 : vector<6x12xf32>
    %71 = arith.subf %63, %70 : vector<6x12xf32>
    %72 = arith.mulf %71, %71 : vector<6x12xf32>
    %cst_31 = arith.constant dense<0.000000e+00> : vector<6x2xf32>
    %73 = tpu.matmul %72, %4, %cst_31 {dimension_numbers = #tpu.dot_dimension_numbers<[1], [0], [0], [1], [0, 0, 1, 1], [], []>} : vector<6x12xf32>, vector<12x2xf32>, vector<6x2xf32> -> vector<6x2xf32>
    %cst_32 = arith.constant 9.99999974E-6 : f32
    %74 = vector.broadcast %cst_32 : f32 to vector<6x2xf32>
    %75 = arith.addf %73, %74 : vector<6x2xf32>
    %76 = math.rsqrt %75 : vector<6x2xf32>
    %cst_33 = arith.constant dense<0.000000e+00> : vector<6x12xf32>
    %77 = tpu.matmul %76, %5, %cst_33 {dimension_numbers = #tpu.dot_dimension_numbers<[1], [0], [0], [1], [0, 0, 1, 1], [], []>} : vector<6x2xf32>, vector<2x12xf32>, vector<6x12xf32> -> vector<6x12xf32>
    %78 = vector.broadcast %64 : vector<6x1xf32> to vector<6x12xf32>
    %79 = arith.mulf %78, %71 : vector<6x12xf32>
    %80 = arith.mulf %79, %77 : vector<6x12xf32>
    %81 = vector.broadcast %65 : vector<6x1xf32> to vector<6x12xf32>
    %82 = arith.addf %80, %81 : vector<6x12xf32>
    %cst_34 = arith.constant 0.000000e+00 : f32
    %83 = vector.broadcast %cst_34 : f32 to vector<6x12xf32>
    %84 = arith.maximumf %82, %83 : vector<6x12xf32>
    %c56 = arith.constant 56 : index
    %c0_35 = arith.constant 0 : index
    %85 = vector.load %arg3[%c56, %c0_35] : memref<488x128xf32, #tpu.memory_space<vmem>>, vector<12x6xf32>
    %c72 = arith.constant 72 : index
    %c0_36 = arith.constant 0 : index
    %86 = vector.load %arg3[%c72, %c0_36] : memref<488x128xf32, #tpu.memory_space<vmem>>, vector<12x1xf32>
    %c88 = arith.constant 88 : index
    %c0_37 = arith.constant 0 : index
    %87 = vector.load %arg3[%c88, %c0_37] : memref<488x128xf32, #tpu.memory_space<vmem>>, vector<6x4xf32>
    %c96 = arith.constant 96 : index
    %c0_38 = arith.constant 0 : index
    %88 = vector.load %arg3[%c96, %c0_38] : memref<488x128xf32, #tpu.memory_space<vmem>>, vector<2x6xf32>
    %c104 = arith.constant 104 : index
    %c0_39 = arith.constant 0 : index
    %89 = vector.load %arg3[%c104, %c0_39] : memref<488x128xf32, #tpu.memory_space<vmem>>, vector<6x1xf32>
    %cst_40 = arith.constant dense<0.000000e+00> : vector<12x12xf32>
    %90 = tpu.matmul %85, %84, %cst_40 {dimension_numbers = #tpu.dot_dimension_numbers<[1], [0], [0], [1], [0, 0, 1, 1], [], []>} : vector<12x6xf32>, vector<6x12xf32>, vector<12x12xf32> -> vector<12x12xf32>
    %91 = vector.broadcast %86 : vector<12x1xf32> to vector<12x12xf32>
    %92 = arith.addf %90, %91 : vector<12x12xf32>
    %93 = vector.extract_strided_slice %92 {offsets = [0, 0], sizes = [6, 12], strides = [1, 1]} : vector<12x12xf32> to vector<6x12xf32>
    %94 = vector.extract_strided_slice %92 {offsets = [6, 0], sizes = [6, 12], strides = [1, 1]} : vector<12x12xf32> to vector<6x12xf32>
    %95 = arith.truncf %87 : vector<6x4xf32> to vector<6x4xbf16>
    %cst_41 = arith.constant dense<0.000000e+00> : vector<6x144xf32>
    %96 = tpu.matmul %95, %2, %cst_41 {dimension_numbers = #tpu.dot_dimension_numbers<[1], [0], [0], [1], [0, 0, 1, 1], [], []>} : vector<6x4xbf16>, vector<4x144xbf16>, vector<6x144xf32> -> vector<6x144xf32>
    %97 = vector.shape_cast %94 : vector<6x12xf32> to vector<6x12x1xf32>
    %98 = vector.shape_cast %93 : vector<6x12xf32> to vector<6x1x12xf32>
    %99 = vector.broadcast %97 : vector<6x12x1xf32> to vector<6x12x12xf32>
    %100 = vector.broadcast %98 : vector<6x1x12xf32> to vector<6x12x12xf32>
    %101 = arith.addf %99, %100 : vector<6x12x12xf32>
    %102 = vector.shape_cast %96 : vector<6x144xf32> to vector<6x12x12xf32>
    %103 = arith.addf %101, %102 : vector<6x12x12xf32>
    %cst_42 = arith.constant 0.000000e+00 : f32
    %104 = vector.broadcast %cst_42 : f32 to vector<6x12x12xf32>
    %105 = arith.cmpf ogt, %103, %104 : vector<6x12x12xf32>
    %cst_43 = arith.constant 2.000000e-01 : f32
    %106 = vector.broadcast %cst_43 : f32 to vector<6x12x12xf32>
    %107 = arith.mulf %106, %103 : vector<6x12x12xf32>
    %108 = arith.select %105, %103, %107 : vector<6x12x12xi1>, vector<6x12x12xf32>
    %109 = vector.shape_cast %108 : vector<6x12x12xf32> to vector<6x144xf32>
    %cst_44 = arith.constant dense<0.000000e+00> : vector<2x144xf32>
    %110 = tpu.matmul %88, %109, %cst_44 {dimension_numbers = #tpu.dot_dimension_numbers<[1], [0], [0], [1], [0, 0, 1, 1], [], []>} : vector<2x6xf32>, vector<6x144xf32>, vector<2x144xf32> -> vector<2x144xf32>
    %cst_45 = arith.constant 0.000000e+00 : bf16
    %111 = vector.broadcast %cst_45 : bf16 to vector<1x144xbf16>
    %112 = arith.cmpf ogt, %3, %111 : vector<1x144xbf16>
    %cst_46 = arith.constant -1.000000e+09 : f32
    %113 = vector.shape_cast %112 : vector<1x144xi1> to vector<1x144xi1>
    %114 = vector.broadcast %113 : vector<1x144xi1> to vector<2x144xi1>
    %115 = vector.broadcast %cst_46 : f32 to vector<2x144xf32>
    %116 = arith.select %114, %110, %115 : vector<2x144xi1>, vector<2x144xf32>
    %117 = vector.shape_cast %116 : vector<2x144xf32> to vector<2x12x12xf32>
    %cst_47 = arith.constant dense<0xFF800000> : vector<2x12xf32>
    %118 = vector.multi_reduction <maximumf>, %117, %cst_47 [2] : vector<2x12x12xf32> to vector<2x12xf32>
    %119 = vector.shape_cast %118 : vector<2x12xf32> to vector<2x12x1xf32>
    %120 = vector.broadcast %119 : vector<2x12x1xf32> to vector<2x12x12xf32>
    %121 = arith.subf %117, %120 : vector<2x12x12xf32>
    %122 = math.exp %121 : vector<2x12x12xf32>
    %cst_48 = arith.constant dense<0.000000e+00> : vector<2x12xf32>
    %123 = vector.multi_reduction <add>, %122, %cst_48 [2] : vector<2x12x12xf32> to vector<2x12xf32>
    %124 = vector.shape_cast %123 : vector<2x12xf32> to vector<2x12x1xf32>
    %125 = tpu.reciprocal %124 {approx = true} : vector<2x12x1xf32> -> vector<2x12x1xf32>
    %126 = vector.broadcast %125 : vector<2x12x1xf32> to vector<2x12x12xf32>
    %127 = arith.mulf %122, %126 : vector<2x12x12xf32>
    %128 = arith.truncf %127 : vector<2x12x12xf32> to vector<2x12x12xbf16>
    %129 = arith.truncf %93 : vector<6x12xf32> to vector<6x12xbf16>
    %130 = vector.extract_strided_slice %129 {offsets = [0, 0], sizes = [3, 12], strides = [1, 1]} : vector<6x12xbf16> to vector<3x12xbf16>
    %131 = vector.extract_strided_slice %128 {offsets = [0, 0, 0], sizes = [1, 12, 12], strides = [1, 1, 1]} : vector<2x12x12xbf16> to vector<1x12x12xbf16>
    %132 = vector.shape_cast %131 : vector<1x12x12xbf16> to vector<12x12xbf16>
    "tpu.trace_start"() <{level = 10 : i32, message = "cs,ts->ct"}> : () -> ()
    %cst_49 = arith.constant dense<0.000000e+00> : vector<3x12xf32>
    %133 = tpu.matmul %130, %132, %cst_49 {dimension_numbers = #tpu.dot_dimension_numbers<[1], [1], [0], [0], [0, 0, 1, 0], [], []>} : vector<3x12xbf16>, vector<12x12xbf16>, vector<3x12xf32> -> vector<3x12xf32>
    "tpu.trace_stop"() : () -> ()
    %134 = vector.extract_strided_slice %129 {offsets = [3, 0], sizes = [3, 12], strides = [1, 1]} : vector<6x12xbf16> to vector<3x12xbf16>
    %135 = vector.extract_strided_slice %128 {offsets = [1, 0, 0], sizes = [1, 12, 12], strides = [1, 1, 1]} : vector<2x12x12xbf16> to vector<1x12x12xbf16>
    %136 = vector.shape_cast %135 : vector<1x12x12xbf16> to vector<12x12xbf16>
    "tpu.trace_start"() <{level = 10 : i32, message = "cs,ts->ct"}> : () -> ()
    %cst_50 = arith.constant dense<0.000000e+00> : vector<3x12xf32>
    %137 = tpu.matmul %134, %136, %cst_50 {dimension_numbers = #tpu.dot_dimension_numbers<[1], [1], [0], [0], [0, 0, 1, 0], [], []>} : vector<3x12xbf16>, vector<12x12xbf16>, vector<3x12xf32> -> vector<3x12xf32>
    "tpu.trace_stop"() : () -> ()
    %138 = tpu.concatenate %133, %137 in 0 : vector<3x12xf32>, vector<3x12xf32> -> vector<6x12xf32>
    %139 = vector.broadcast %89 : vector<6x1xf32> to vector<6x12xf32>
    %140 = arith.addf %138, %139 : vector<6x12xf32>
    %c192 = arith.constant 192 : index
    %c0_51 = arith.constant 0 : index
    %141 = vector.load %arg3[%c192, %c0_51] : memref<488x128xf32, #tpu.memory_space<vmem>>, vector<6x1xf32>
    %c200 = arith.constant 200 : index
    %c0_52 = arith.constant 0 : index
    %142 = vector.load %arg3[%c200, %c0_52] : memref<488x128xf32, #tpu.memory_space<vmem>>, vector<6x1xf32>
    %c208 = arith.constant 208 : index
    %c0_53 = arith.constant 0 : index
    %143 = vector.load %arg3[%c208, %c0_53] : memref<488x128xf32, #tpu.memory_space<vmem>>, vector<6x1xf32>
    %cst_54 = arith.constant dense<0.000000e+00> : vector<6x2xf32>
    %144 = tpu.matmul %140, %4, %cst_54 {dimension_numbers = #tpu.dot_dimension_numbers<[1], [0], [0], [1], [0, 0, 1, 1], [], []>} : vector<6x12xf32>, vector<12x2xf32>, vector<6x2xf32> -> vector<6x2xf32>
    %cst_55 = arith.constant dense<0.000000e+00> : vector<6x12xf32>
    %145 = tpu.matmul %144, %5, %cst_55 {dimension_numbers = #tpu.dot_dimension_numbers<[1], [0], [0], [1], [0, 0, 1, 1], [], []>} : vector<6x2xf32>, vector<2x12xf32>, vector<6x12xf32> -> vector<6x12xf32>
    %146 = vector.broadcast %143 : vector<6x1xf32> to vector<6x12xf32>
    %147 = arith.mulf %145, %146 : vector<6x12xf32>
    %148 = arith.subf %140, %147 : vector<6x12xf32>
    %149 = arith.mulf %148, %148 : vector<6x12xf32>
    %cst_56 = arith.constant dense<0.000000e+00> : vector<6x2xf32>
    %150 = tpu.matmul %149, %4, %cst_56 {dimension_numbers = #tpu.dot_dimension_numbers<[1], [0], [0], [1], [0, 0, 1, 1], [], []>} : vector<6x12xf32>, vector<12x2xf32>, vector<6x2xf32> -> vector<6x2xf32>
    %cst_57 = arith.constant 9.99999974E-6 : f32
    %151 = vector.broadcast %cst_57 : f32 to vector<6x2xf32>
    %152 = arith.addf %150, %151 : vector<6x2xf32>
    %153 = math.rsqrt %152 : vector<6x2xf32>
    %cst_58 = arith.constant dense<0.000000e+00> : vector<6x12xf32>
    %154 = tpu.matmul %153, %5, %cst_58 {dimension_numbers = #tpu.dot_dimension_numbers<[1], [0], [0], [1], [0, 0, 1, 1], [], []>} : vector<6x2xf32>, vector<2x12xf32>, vector<6x12xf32> -> vector<6x12xf32>
    %155 = vector.broadcast %141 : vector<6x1xf32> to vector<6x12xf32>
    %156 = arith.mulf %155, %148 : vector<6x12xf32>
    %157 = arith.mulf %156, %154 : vector<6x12xf32>
    %158 = vector.broadcast %142 : vector<6x1xf32> to vector<6x12xf32>
    %159 = arith.addf %157, %158 : vector<6x12xf32>
    %cst_59 = arith.constant 0.000000e+00 : f32
    %160 = vector.broadcast %cst_59 : f32 to vector<6x12xf32>
    %161 = arith.maximumf %159, %160 : vector<6x12xf32>
    %c112 = arith.constant 112 : index
    %c0_60 = arith.constant 0 : index
    %162 = vector.load %arg3[%c112, %c0_60] : memref<488x128xf32, #tpu.memory_space<vmem>>, vector<12x6xf32>
    %c128 = arith.constant 128 : index
    %c0_61 = arith.constant 0 : index
    %163 = vector.load %arg3[%c128, %c0_61] : memref<488x128xf32, #tpu.memory_space<vmem>>, vector<12x1xf32>
    %c144 = arith.constant 144 : index
    %c0_62 = arith.constant 0 : index
    %164 = vector.load %arg3[%c144, %c0_62] : memref<488x128xf32, #tpu.memory_space<vmem>>, vector<6x4xf32>
    %c152 = arith.constant 152 : index
    %c0_63 = arith.constant 0 : index
    %165 = vector.load %arg3[%c152, %c0_63] : memref<488x128xf32, #tpu.memory_space<vmem>>, vector<2x6xf32>
    %c160 = arith.constant 160 : index
    %c0_64 = arith.constant 0 : index
    %166 = vector.load %arg3[%c160, %c0_64] : memref<488x128xf32, #tpu.memory_space<vmem>>, vector<6x1xf32>
    %cst_65 = arith.constant dense<0.000000e+00> : vector<12x12xf32>
    %167 = tpu.matmul %162, %161, %cst_65 {dimension_numbers = #tpu.dot_dimension_numbers<[1], [0], [0], [1], [0, 0, 1, 1], [], []>} : vector<12x6xf32>, vector<6x12xf32>, vector<12x12xf32> -> vector<12x12xf32>
    %168 = vector.broadcast %163 : vector<12x1xf32> to vector<12x12xf32>
    %169 = arith.addf %167, %168 : vector<12x12xf32>
    %170 = vector.extract_strided_slice %169 {offsets = [0, 0], sizes = [6, 12], strides = [1, 1]} : vector<12x12xf32> to vector<6x12xf32>
    %171 = vector.extract_strided_slice %169 {offsets = [6, 0], sizes = [6, 12], strides = [1, 1]} : vector<12x12xf32> to vector<6x12xf32>
    %172 = arith.truncf %164 : vector<6x4xf32> to vector<6x4xbf16>
    %cst_66 = arith.constant dense<0.000000e+00> : vector<6x144xf32>
    %173 = tpu.matmul %172, %2, %cst_66 {dimension_numbers = #tpu.dot_dimension_numbers<[1], [0], [0], [1], [0, 0, 1, 1], [], []>} : vector<6x4xbf16>, vector<4x144xbf16>, vector<6x144xf32> -> vector<6x144xf32>
    %174 = vector.shape_cast %171 : vector<6x12xf32> to vector<6x12x1xf32>
    %175 = vector.shape_cast %170 : vector<6x12xf32> to vector<6x1x12xf32>
    %176 = vector.broadcast %174 : vector<6x12x1xf32> to vector<6x12x12xf32>
    %177 = vector.broadcast %175 : vector<6x1x12xf32> to vector<6x12x12xf32>
    %178 = arith.addf %176, %177 : vector<6x12x12xf32>
    %179 = vector.shape_cast %173 : vector<6x144xf32> to vector<6x12x12xf32>
    %180 = arith.addf %178, %179 : vector<6x12x12xf32>
    %cst_67 = arith.constant 0.000000e+00 : f32
    %181 = vector.broadcast %cst_67 : f32 to vector<6x12x12xf32>
    %182 = arith.cmpf ogt, %180, %181 : vector<6x12x12xf32>
    %cst_68 = arith.constant 2.000000e-01 : f32
    %183 = vector.broadcast %cst_68 : f32 to vector<6x12x12xf32>
    %184 = arith.mulf %183, %180 : vector<6x12x12xf32>
    %185 = arith.select %182, %180, %184 : vector<6x12x12xi1>, vector<6x12x12xf32>
    %186 = vector.shape_cast %185 : vector<6x12x12xf32> to vector<6x144xf32>
    %cst_69 = arith.constant dense<0.000000e+00> : vector<2x144xf32>
    %187 = tpu.matmul %165, %186, %cst_69 {dimension_numbers = #tpu.dot_dimension_numbers<[1], [0], [0], [1], [0, 0, 1, 1], [], []>} : vector<2x6xf32>, vector<6x144xf32>, vector<2x144xf32> -> vector<2x144xf32>
    %cst_70 = arith.constant 0.000000e+00 : bf16
    %188 = vector.broadcast %cst_70 : bf16 to vector<1x144xbf16>
    %189 = arith.cmpf ogt, %3, %188 : vector<1x144xbf16>
    %cst_71 = arith.constant -1.000000e+09 : f32
    %190 = vector.shape_cast %189 : vector<1x144xi1> to vector<1x144xi1>
    %191 = vector.broadcast %190 : vector<1x144xi1> to vector<2x144xi1>
    %192 = vector.broadcast %cst_71 : f32 to vector<2x144xf32>
    %193 = arith.select %191, %187, %192 : vector<2x144xi1>, vector<2x144xf32>
    %194 = vector.shape_cast %193 : vector<2x144xf32> to vector<2x12x12xf32>
    %cst_72 = arith.constant dense<0xFF800000> : vector<2x12xf32>
    %195 = vector.multi_reduction <maximumf>, %194, %cst_72 [2] : vector<2x12x12xf32> to vector<2x12xf32>
    %196 = vector.shape_cast %195 : vector<2x12xf32> to vector<2x12x1xf32>
    %197 = vector.broadcast %196 : vector<2x12x1xf32> to vector<2x12x12xf32>
    %198 = arith.subf %194, %197 : vector<2x12x12xf32>
    %199 = math.exp %198 : vector<2x12x12xf32>
    %cst_73 = arith.constant dense<0.000000e+00> : vector<2x12xf32>
    %200 = vector.multi_reduction <add>, %199, %cst_73 [2] : vector<2x12x12xf32> to vector<2x12xf32>
    %201 = vector.shape_cast %200 : vector<2x12xf32> to vector<2x12x1xf32>
    %202 = tpu.reciprocal %201 {approx = true} : vector<2x12x1xf32> -> vector<2x12x1xf32>
    %203 = vector.broadcast %202 : vector<2x12x1xf32> to vector<2x12x12xf32>
    %204 = arith.mulf %199, %203 : vector<2x12x12xf32>
    %205 = arith.truncf %204 : vector<2x12x12xf32> to vector<2x12x12xbf16>
    %206 = arith.truncf %170 : vector<6x12xf32> to vector<6x12xbf16>
    %207 = vector.extract_strided_slice %206 {offsets = [0, 0], sizes = [3, 12], strides = [1, 1]} : vector<6x12xbf16> to vector<3x12xbf16>
    %208 = vector.extract_strided_slice %205 {offsets = [0, 0, 0], sizes = [1, 12, 12], strides = [1, 1, 1]} : vector<2x12x12xbf16> to vector<1x12x12xbf16>
    %209 = vector.shape_cast %208 : vector<1x12x12xbf16> to vector<12x12xbf16>
    "tpu.trace_start"() <{level = 10 : i32, message = "cs,ts->ct"}> : () -> ()
    %cst_74 = arith.constant dense<0.000000e+00> : vector<3x12xf32>
    %210 = tpu.matmul %207, %209, %cst_74 {dimension_numbers = #tpu.dot_dimension_numbers<[1], [1], [0], [0], [0, 0, 1, 0], [], []>} : vector<3x12xbf16>, vector<12x12xbf16>, vector<3x12xf32> -> vector<3x12xf32>
    "tpu.trace_stop"() : () -> ()
    %211 = vector.extract_strided_slice %206 {offsets = [3, 0], sizes = [3, 12], strides = [1, 1]} : vector<6x12xbf16> to vector<3x12xbf16>
    %212 = vector.extract_strided_slice %205 {offsets = [1, 0, 0], sizes = [1, 12, 12], strides = [1, 1, 1]} : vector<2x12x12xbf16> to vector<1x12x12xbf16>
    %213 = vector.shape_cast %212 : vector<1x12x12xbf16> to vector<12x12xbf16>
    "tpu.trace_start"() <{level = 10 : i32, message = "cs,ts->ct"}> : () -> ()
    %cst_75 = arith.constant dense<0.000000e+00> : vector<3x12xf32>
    %214 = tpu.matmul %211, %213, %cst_75 {dimension_numbers = #tpu.dot_dimension_numbers<[1], [1], [0], [0], [0, 0, 1, 0], [], []>} : vector<3x12xbf16>, vector<12x12xbf16>, vector<3x12xf32> -> vector<3x12xf32>
    "tpu.trace_stop"() : () -> ()
    %215 = tpu.concatenate %210, %214 in 0 : vector<3x12xf32>, vector<3x12xf32> -> vector<6x12xf32>
    %216 = vector.broadcast %166 : vector<6x1xf32> to vector<6x12xf32>
    %217 = arith.addf %215, %216 : vector<6x12xf32>
    %c216 = arith.constant 216 : index
    %c0_76 = arith.constant 0 : index
    %218 = vector.load %arg3[%c216, %c0_76] : memref<488x128xf32, #tpu.memory_space<vmem>>, vector<6x1xf32>
    %c224 = arith.constant 224 : index
    %c0_77 = arith.constant 0 : index
    %219 = vector.load %arg3[%c224, %c0_77] : memref<488x128xf32, #tpu.memory_space<vmem>>, vector<6x1xf32>
    %c232 = arith.constant 232 : index
    %c0_78 = arith.constant 0 : index
    %220 = vector.load %arg3[%c232, %c0_78] : memref<488x128xf32, #tpu.memory_space<vmem>>, vector<6x1xf32>
    %cst_79 = arith.constant dense<0.000000e+00> : vector<6x2xf32>
    %221 = tpu.matmul %217, %4, %cst_79 {dimension_numbers = #tpu.dot_dimension_numbers<[1], [0], [0], [1], [0, 0, 1, 1], [], []>} : vector<6x12xf32>, vector<12x2xf32>, vector<6x2xf32> -> vector<6x2xf32>
    %cst_80 = arith.constant dense<0.000000e+00> : vector<6x12xf32>
    %222 = tpu.matmul %221, %5, %cst_80 {dimension_numbers = #tpu.dot_dimension_numbers<[1], [0], [0], [1], [0, 0, 1, 1], [], []>} : vector<6x2xf32>, vector<2x12xf32>, vector<6x12xf32> -> vector<6x12xf32>
    %223 = vector.broadcast %220 : vector<6x1xf32> to vector<6x12xf32>
    %224 = arith.mulf %222, %223 : vector<6x12xf32>
    %225 = arith.subf %217, %224 : vector<6x12xf32>
    %226 = arith.mulf %225, %225 : vector<6x12xf32>
    %cst_81 = arith.constant dense<0.000000e+00> : vector<6x2xf32>
    %227 = tpu.matmul %226, %4, %cst_81 {dimension_numbers = #tpu.dot_dimension_numbers<[1], [0], [0], [1], [0, 0, 1, 1], [], []>} : vector<6x12xf32>, vector<12x2xf32>, vector<6x2xf32> -> vector<6x2xf32>
    %cst_82 = arith.constant 9.99999974E-6 : f32
    %228 = vector.broadcast %cst_82 : f32 to vector<6x2xf32>
    %229 = arith.addf %227, %228 : vector<6x2xf32>
    %230 = math.rsqrt %229 : vector<6x2xf32>
    %cst_83 = arith.constant dense<0.000000e+00> : vector<6x12xf32>
    %231 = tpu.matmul %230, %5, %cst_83 {dimension_numbers = #tpu.dot_dimension_numbers<[1], [0], [0], [1], [0, 0, 1, 1], [], []>} : vector<6x2xf32>, vector<2x12xf32>, vector<6x12xf32> -> vector<6x12xf32>
    %232 = vector.broadcast %218 : vector<6x1xf32> to vector<6x12xf32>
    %233 = arith.mulf %232, %225 : vector<6x12xf32>
    %234 = arith.mulf %233, %231 : vector<6x12xf32>
    %235 = vector.broadcast %219 : vector<6x1xf32> to vector<6x12xf32>
    %236 = arith.addf %234, %235 : vector<6x12xf32>
    %cst_84 = arith.constant 0.000000e+00 : f32
    %237 = vector.broadcast %cst_84 : f32 to vector<6x12xf32>
    %238 = arith.maximumf %236, %237 : vector<6x12xf32>
    %cst_85 = arith.constant dense<0.000000e+00> : vector<4x2xf32>
    %239 = tpu.matmul %0, %6, %cst_85 {dimension_numbers = #tpu.dot_dimension_numbers<[1], [0], [0], [1], [0, 0, 1, 1], [], []>} : vector<4x12xf32>, vector<12x2xf32>, vector<4x2xf32> -> vector<4x2xf32>
    %cst_86 = arith.constant dense<0.000000e+00> : vector<6x2xf32>
    %240 = tpu.matmul %84, %6, %cst_86 {dimension_numbers = #tpu.dot_dimension_numbers<[1], [0], [0], [1], [0, 0, 1, 1], [], []>} : vector<6x12xf32>, vector<12x2xf32>, vector<6x2xf32> -> vector<6x2xf32>
    %cst_87 = arith.constant dense<0.000000e+00> : vector<6x2xf32>
    %241 = tpu.matmul %161, %6, %cst_87 {dimension_numbers = #tpu.dot_dimension_numbers<[1], [0], [0], [1], [0, 0, 1, 1], [], []>} : vector<6x12xf32>, vector<12x2xf32>, vector<6x2xf32> -> vector<6x2xf32>
    %cst_88 = arith.constant dense<0.000000e+00> : vector<6x2xf32>
    %242 = tpu.matmul %238, %6, %cst_88 {dimension_numbers = #tpu.dot_dimension_numbers<[1], [0], [0], [1], [0, 0, 1, 1], [], []>} : vector<6x12xf32>, vector<12x2xf32>, vector<6x2xf32> -> vector<6x2xf32>
    %243 = tpu.concatenate %239, %240, %241, %242 in 0 : vector<4x2xf32>, vector<6x2xf32>, vector<6x2xf32>, vector<6x2xf32> -> vector<22x2xf32>
    %244 = tpu.transpose %243, [1, 0] : vector<22x2xf32> -> vector<2x22xf32>
    %c240 = arith.constant 240 : index
    %c0_89 = arith.constant 0 : index
    %245 = vector.load %arg3[%c240, %c0_89] : memref<488x128xf32, #tpu.memory_space<vmem>>, vector<22x16xf32>
    %cst_90 = arith.constant dense<0.000000e+00> : vector<2x16xf32>
    %246 = tpu.matmul %244, %245, %cst_90 {dimension_numbers = #tpu.dot_dimension_numbers<[1], [0], [0], [1], [0, 0, 1, 1], [], []>} : vector<2x22xf32>, vector<22x16xf32>, vector<2x16xf32> -> vector<2x16xf32>
    %c264 = arith.constant 264 : index
    %c0_91 = arith.constant 0 : index
    %247 = vector.load %arg3[%c264, %c0_91] : memref<488x128xf32, #tpu.memory_space<vmem>>, vector<1x16xf32>
    %248 = vector.broadcast %247 : vector<1x16xf32> to vector<2x16xf32>
    %249 = arith.addf %246, %248 : vector<2x16xf32>
    %cst_92 = arith.constant 0.000000e+00 : f32
    %250 = vector.broadcast %cst_92 : f32 to vector<2x16xf32>
    %251 = arith.maximumf %249, %250 : vector<2x16xf32>
    %c272 = arith.constant 272 : index
    %c0_93 = arith.constant 0 : index
    %252 = vector.load %arg3[%c272, %c0_93] : memref<488x128xf32, #tpu.memory_space<vmem>>, vector<16x8xf32>
    %cst_94 = arith.constant dense<0.000000e+00> : vector<2x8xf32>
    %253 = tpu.matmul %251, %252, %cst_94 {dimension_numbers = #tpu.dot_dimension_numbers<[1], [0], [0], [1], [0, 0, 1, 1], [], []>} : vector<2x16xf32>, vector<16x8xf32>, vector<2x8xf32> -> vector<2x8xf32>
    %c288 = arith.constant 288 : index
    %c0_95 = arith.constant 0 : index
    %254 = vector.load %arg3[%c288, %c0_95] : memref<488x128xf32, #tpu.memory_space<vmem>>, vector<1x8xf32>
    %255 = vector.broadcast %254 : vector<1x8xf32> to vector<2x8xf32>
    %256 = arith.addf %253, %255 : vector<2x8xf32>
    %cst_96 = arith.constant 0.000000e+00 : f32
    %257 = vector.broadcast %cst_96 : f32 to vector<2x8xf32>
    %258 = arith.maximumf %256, %257 : vector<2x8xf32>
    %c296 = arith.constant 296 : index
    %c0_97 = arith.constant 0 : index
    %259 = vector.load %arg3[%c296, %c0_97] : memref<488x128xf32, #tpu.memory_space<vmem>>, vector<8x1xf32>
    %cst_98 = arith.constant dense<0.000000e+00> : vector<2x1xf32>
    %260 = tpu.matmul %258, %259, %cst_98 {dimension_numbers = #tpu.dot_dimension_numbers<[1], [0], [0], [1], [0, 0, 1, 1], [], []>} : vector<2x8xf32>, vector<8x1xf32>, vector<2x1xf32> -> vector<2x1xf32>
    %c304 = arith.constant 304 : index
    %c0_99 = arith.constant 0 : index
    %261 = vector.load %arg3[%c304, %c0_99] : memref<488x128xf32, #tpu.memory_space<vmem>>, vector<1x1xf32>
    %262 = vector.broadcast %261 : vector<1x1xf32> to vector<2x1xf32>
    %263 = arith.addf %260, %262 : vector<2x1xf32>
    %c312 = arith.constant 312 : index
    %c0_100 = arith.constant 0 : index
    %264 = vector.load %arg3[%c312, %c0_100] : memref<488x128xf32, #tpu.memory_space<vmem>>, vector<22x64xf32>
    %cst_101 = arith.constant dense<0.000000e+00> : vector<2x64xf32>
    %265 = tpu.matmul %244, %264, %cst_101 {dimension_numbers = #tpu.dot_dimension_numbers<[1], [0], [0], [1], [0, 0, 1, 1], [], []>} : vector<2x22xf32>, vector<22x64xf32>, vector<2x64xf32> -> vector<2x64xf32>
    %c336 = arith.constant 336 : index
    %c0_102 = arith.constant 0 : index
    %266 = vector.load %arg3[%c336, %c0_102] : memref<488x128xf32, #tpu.memory_space<vmem>>, vector<1x64xf32>
    %267 = vector.broadcast %266 : vector<1x64xf32> to vector<2x64xf32>
    %268 = arith.addf %265, %267 : vector<2x64xf32>
    %cst_103 = arith.constant 0.000000e+00 : f32
    %269 = vector.broadcast %cst_103 : f32 to vector<2x64xf32>
    %270 = arith.maximumf %268, %269 : vector<2x64xf32>
    %c344 = arith.constant 344 : index
    %c0_104 = arith.constant 0 : index
    %271 = vector.load %arg3[%c344, %c0_104] : memref<488x128xf32, #tpu.memory_space<vmem>>, vector<64x64xf32>
    %cst_105 = arith.constant dense<0.000000e+00> : vector<2x64xf32>
    %272 = tpu.matmul %270, %271, %cst_105 {dimension_numbers = #tpu.dot_dimension_numbers<[1], [0], [0], [1], [0, 0, 1, 1], [], []>} : vector<2x64xf32>, vector<64x64xf32>, vector<2x64xf32> -> vector<2x64xf32>
    %c408 = arith.constant 408 : index
    %c0_106 = arith.constant 0 : index
    %273 = vector.load %arg3[%c408, %c0_106] : memref<488x128xf32, #tpu.memory_space<vmem>>, vector<1x64xf32>
    %274 = vector.broadcast %273 : vector<1x64xf32> to vector<2x64xf32>
    %275 = arith.addf %272, %274 : vector<2x64xf32>
    %cst_107 = arith.constant 0.000000e+00 : f32
    %276 = vector.broadcast %cst_107 : f32 to vector<2x64xf32>
    %277 = arith.maximumf %275, %276 : vector<2x64xf32>
    %c416 = arith.constant 416 : index
    %c0_108 = arith.constant 0 : index
    %278 = vector.load %arg3[%c416, %c0_108] : memref<488x128xf32, #tpu.memory_space<vmem>>, vector<64x128xf32>
    %cst_109 = arith.constant dense<0.000000e+00> : vector<2x128xf32>
    %279 = tpu.matmul %277, %278, %cst_109 {dimension_numbers = #tpu.dot_dimension_numbers<[1], [0], [0], [1], [0, 0, 1, 1], [], []>} : vector<2x64xf32>, vector<64x128xf32>, vector<2x128xf32> -> vector<2x128xf32>
    %c480 = arith.constant 480 : index
    %c0_110 = arith.constant 0 : index
    %280 = vector.load %arg3[%c480, %c0_110] : memref<488x128xf32, #tpu.memory_space<vmem>>, vector<1x128xf32>
    %281 = vector.broadcast %280 : vector<1x128xf32> to vector<2x128xf32>
    %282 = arith.addf %279, %281 : vector<2x128xf32>
    %cst_111 = arith.constant dense<0.000000e+00> : vector<2xf32>
    %283 = vector.multi_reduction <add>, %282, %cst_111 [1] : vector<2x128xf32> to vector<2xf32>
    %284 = vector.shape_cast %283 : vector<2xf32> to vector<2x1xf32>
    %cst_112 = arith.constant 1.250000e-01 : f32
    %285 = vector.broadcast %cst_112 : f32 to vector<2x1xf32>
    %286 = arith.mulf %284, %285 : vector<2x1xf32>
    %287 = vector.broadcast %263 : vector<2x1xf32> to vector<2x128xf32>
    %288 = arith.addf %287, %282 : vector<2x128xf32>
    %289 = vector.broadcast %286 : vector<2x1xf32> to vector<2x128xf32>
    %290 = arith.subf %288, %289 : vector<2x128xf32>
    %cst_113 = arith.constant 0.000000e+00 : f32
    %291 = vector.broadcast %cst_113 : f32 to vector<2x128xf32>
    %292 = arith.cmpf oeq, %7, %291 : vector<2x128xf32>
    %cst_114 = arith.constant -1.000000e+08 : f32
    %293 = vector.broadcast %cst_114 : f32 to vector<2x128xf32>
    %294 = arith.select %292, %293, %290 : vector<2x128xi1>, vector<2x128xf32>
    %c0_115 = arith.constant 0 : index
    %c0_116 = arith.constant 0 : index
    %295 = vector.load %arg4[%c0_115, %c0_116] : memref<2x128xf32, #tpu.memory_space<vmem>>, vector<2x128xf32>
    tpu.vector_store %arg4[%c0_115, %c0_116], %294 {strides = array<i32>} : memref<2x128xf32, #tpu.memory_space<vmem>>, vector<2x128xf32>,
    return
  }
}

</mosaic_0001>

<llo_original>
// kernel: tpu_custom_call.1
$region0: #{tpu_custom_call.1}
  #allocation0 [shape = 'u32[]', space=smem, size = 0x4, offset = 0x4, fixed_abs, tag = 'smem constant byte address 0x4 - core index']
  #allocation1 [shape = 'u32[144,128]{1,0:T(1,128)}', space=vmem, size = 0x12000, scoped, tag = 'internal scratch']
  %s0 = inlined_call_operand.hbm [shape: f32[4,12], index: 0, kind: input, shape index: {}]
  %s1 = inlined_call_operand.hbm [shape: bf16[5,144], index: 1, kind: input, shape index: {}]
  %s2 = inlined_call_operand.hbm [shape: f32[48,128], index: 2, kind: input, shape index: {}]
  %s3 = inlined_call_operand.hbm [shape: f32[488,128], index: 3, kind: input, shape index: {}]
  %s4 = inlined_call_operand.hbm [shape: f32[2,128], index: 4, kind: output, shape index: {}]
  %s5 = sld [smem:[#allocation0]]
  $region42: #{tpu_custom_call.1} parent=0
    _
  %s7 = ssub.s32 1, %s5
  %s8 = scalar_select 0, %s7, %s5
  $region1: #{tpu_custom_call.1} parent=0
    #allocation2 [shape = 'u8[2048]{0}', space=vmem, size = 0x800, scoped, tag = 'input window, operand 0, single buffered']
    #allocation3 [shape = 's32[1]{0}', space=sflag, size = 0x4, scoped, tag = 'scoped memory for tpu_custom_call.1']
    #allocation4 [shape = 's32[1]{0}', space=sflag, size = 0x4, scoped, tag = 'scoped memory for tpu_custom_call.1']
    #allocation5 [shape = 'u8[4096]{0}', space=vmem, size = 0x1000, scoped, tag = 'input window, operand 1, single buffered']
    #allocation6 [shape = 's32[1]{0}', space=sflag, size = 0x4, scoped, tag = 'scoped memory for tpu_custom_call.1']
    #allocation7 [shape = 'u8[24576]{0}', space=vmem, size = 0x6000, scoped, tag = 'input window, operand 2, single buffered']
    #allocation8 [shape = 'u8[249856]{0}', space=vmem, size = 0x3d000, scoped, tag = 'input window, operand 3, single buffered']
    #allocation9 [shape = 's32[1]{0}', space=sflag, size = 0x4, scoped, tag = 'scoped memory for tpu_custom_call.1']
    #allocation10 [shape = 'u8[1024]{0}', space=vmem, size = 0x400, scoped, tag = 'output window, operand 0, single buffered']
    %9 = vsyncpa [#allocation3], 0
    %10 = vsyncpa [#allocation6], 0
    %11 = vsyncpa [#allocation9], 0
    %12 = vsyncpa [#allocation4], 0
    // Predicated region
    $region2: #{tpu_custom_call.1} parent=1 // pred_check
      _
    $region3: #{tpu_custom_call.1} parent=1 // pred_check_branch
      %14 = sbr.rel (0) target = $region5
    $region4: #{tpu_custom_call.1} parent=1 // pred_region
      %s16 = ssub.s32 64, 64
      %17 = vsyncadd [#allocation3], %s16
      %s19 = sshll.u32 [#allocation2], 4
      %s20 = int_to_ptr.vmem [resolvable:$true] %s19
      %22 = dma.hbm_to_vmem [thread:$0]  %s0, 64, %s20, [#allocation3]
    $region5: #{tpu_custom_call.1} parent=1 // pred_fallthru
      _
    // Predicated region
    $region6: #{tpu_custom_call.1} parent=1 // pred_check
      _
    $region7: #{tpu_custom_call.1} parent=1 // pred_check_branch
      %24 = sbr.rel (0) target = $region9
    $region8: #{tpu_custom_call.1} parent=1 // pred_region
      %s26 = ssub.s32 128, 128
      %27 = vsyncadd [#allocation6], %s26
      %s29 = sshll.u32 [#allocation5], 4
      %s30 = int_to_ptr.vmem [resolvable:$true] %s29
      %32 = dma.hbm_to_vmem [thread:$0]  %s1, 128, %s30, [#allocation6]
    $region9: #{tpu_custom_call.1} parent=1 // pred_fallthru
      _
    // Predicated region
    $region10: #{tpu_custom_call.1} parent=1 // pred_check
      _
    $region11: #{tpu_custom_call.1} parent=1 // pred_check_branch
      %34 = sbr.rel (0) target = $region13
    $region12: #{tpu_custom_call.1} parent=1 // pred_region
      %s36 = ssub.s32 768, 768
      %37 = vsyncadd [#allocation6], %s36
      %s38 = sshll.u32 [#allocation7], 4
      %s39 = int_to_ptr.vmem [resolvable:$true] %s38
      %44 = dma.hbm_to_vmem [thread:$0]  %s2, 768, %s39, [#allocation6], 128, 128, 8
    $region13: #{tpu_custom_call.1} parent=1 // pred_fallthru
      _
    // Predicated region
    $region14: #{tpu_custom_call.1} parent=1 // pred_check
      _
    $region15: #{tpu_custom_call.1} parent=1 // pred_check_branch
      %46 = sbr.rel (0) target = $region17
    $region16: #{tpu_custom_call.1} parent=1 // pred_region
      %s48 = ssub.s32 7808, 7808
      %49 = vsyncadd [#allocation9], %s48
      %s50 = sshll.u32 [#allocation8], 4
      %s51 = int_to_ptr.vmem [resolvable:$true] %s50
      %56 = dma.hbm_to_vmem [thread:$0]  %s3, 7808, %s51, [#allocation9], 128, 128, 8
    $region17: #{tpu_custom_call.1} parent=1 // pred_fallthru
      _
    // Predicated region
    $region18: #{tpu_custom_call.1} parent=1 // pred_check
      _
    $region19: #{tpu_custom_call.1} parent=1 // pred_check_branch
      %58 = sbr.rel (0) target = $region21
    $region20: #{tpu_custom_call.1} parent=1 // pred_region
      %59 = dma.done [#allocation3], 64
    $region21: #{tpu_custom_call.1} parent=1 // pred_fallthru
      _
    // Predicated region
    $region22: #{tpu_custom_call.1} parent=1 // pred_check
      _
    $region23: #{tpu_custom_call.1} parent=1 // pred_check_branch
      %61 = sbr.rel (0) target = $region25
    $region24: #{tpu_custom_call.1} parent=1 // pred_region
      %62 = dma.done [#allocation6], 128
    $region25: #{tpu_custom_call.1} parent=1 // pred_fallthru
      _
    // Predicated region
    $region26: #{tpu_custom_call.1} parent=1 // pred_check
      _
    $region27: #{tpu_custom_call.1} parent=1 // pred_check_branch
      %64 = sbr.rel (0) target = $region29
    $region28: #{tpu_custom_call.1} parent=1 // pred_region
      %65 = dma.done [#allocation6], 768
    $region29: #{tpu_custom_call.1} parent=1 // pred_fallthru
      _
    // Predicated region
    $region30: #{tpu_custom_call.1} parent=1 // pred_check
      _
    $region31: #{tpu_custom_call.1} parent=1 // pred_check_branch
      %67 = sbr.rel (0) target = $region33
    $region32: #{tpu_custom_call.1} parent=1 // pred_region
      %68 = dma.done [#allocation9], 7808
    $region33: #{tpu_custom_call.1} parent=1 // pred_fallthru
      _
    %v72 = vld [vmem:[#allocation2] sm:$0xf]
    %v73 = vld [vmem:[#allocation5] sm:$0x77]
    %v74 = vld [vmem:[#allocation7] sm:$0xff]
    %v75 = vld [vmem:[#allocation7 + $0x8] sm:$0xf]
    %v76 = vld [vmem:[#allocation7 + $0x10] sm:$0x3]
    %v77 = vld [vmem:[#allocation7 + $0x18] sm:$0xff]
    %v78 = vld [vmem:[#allocation7 + $0x20] sm:$0xf]
    %v79 = vld [vmem:[#allocation7 + $0x28] sm:$0x3]
    %v80 = vld [vmem:[#allocation8] sm:$0xff]
    %v81 = vld [vmem:[#allocation8 + $0x8] sm:$0xf]
    %v82 = vld [vmem:[#allocation8 + $0x10] sm:$0xff]
    %v83 = vld [vmem:[#allocation8 + $0x18] sm:$0xf]
    %v84 = vld [vmem:[#allocation8 + $0x20] sm:$0x3f]
    %v85 = vld [vmem:[#allocation8 + $0x28] sm:$0x3]
    %v86 = vld [vmem:[#allocation8 + $0x30] sm:$0x3f]
    %88 = vset.pattern.permute.xlu0 0
    %89 = vperm.xlu0 %88, %v82
    %v90 = vpop.permute.xlu0 %89
    %93 = vset.pattern.permute.xlu0 0
    %94 = vperm.xlu0 %93, %v83
    %v95 = vpop.permute.xlu0 %94
    %vm97 = vcmask 31744
    %v99 = vsel %vm97, %v80, 0
    %v102 = vsel %vm97, %v81, 0
    %vm104 = vcmask 1043456
    %v106 = vsel %vm104, %v72, 0
    %108 = vmatprep.subr.mxu0 0.0
    %109 = vmatpush1.msra.mxu0 %v106
    %110 = vmatprep.subr.mxu0 0.0
    %111 = vmatpush1.msra.mxu0 0.0
    %112 = vmatprep.subr.mxu0 0.0
    %113 = vmatpush1.msra.mxu0 0.0
    %114 = vmatprep.subr.mxu0 0.0
    %115 = vmatpush1.msra.mxu0 0.0
    %116 = vmatprep.subr.mxu0 0.0
    %117 = vmatpush1.msra.mxu0 0.0
    %118 = vmatprep.subr.mxu0 0.0
    %119 = vmatpush1.msra.mxu0 0.0
    %120 = vmatprep.subr.mxu0 0.0
    %121 = vmatpush1.msra.mxu0 0.0
    %122 = vmatprep.subr.mxu0 0.0
    %123 = vmatpush1.msra.mxu0 0.0
    %124 = vmatprep.subr.mxu0 0.0
    %125 = vmatpush1.msra.mxu0 0.0
    %126 = vmatprep.subr.mxu0 0.0
    %127 = vmatpush1.msra.mxu0 0.0
    %128 = vmatprep.subr.mxu0 0.0
    %129 = vmatpush1.msra.mxu0 0.0
    %130 = vmatprep.subr.mxu0 0.0
    %131 = vmatpush1.msra.mxu0 0.0
    %132 = vmatprep.subr.mxu0 0.0
    %133 = vmatpush1.msra.mxu0 0.0
    %134 = vmatprep.subr.mxu0 0.0
    %135 = vmatpush1.msra.mxu0 0.0
    %136 = vmatprep.subr.mxu0 0.0
    %137 = vmatpush1.msra.mxu0 0.0
    %138 = vmatprep.subr.mxu0 0.0
    %139 = vmatpush1.msra.mxu0 0.0
    %140 = vmatprep.subr.mxu0 0.0
    %141 = vmatpush1.msra.mxu0 0.0
    %142 = vmatprep.subr.mxu0 0.0
    %143 = vmatpush1.msra.mxu0 0.0
    %144 = vmatprep.subr.mxu0 0.0
    %145 = vmatpush1.msra.mxu0 0.0
    %146 = vmatprep.subr.mxu0 0.0
    %147 = vmatpush1.msra.mxu0 0.0
    %148 = vmatprep.subr.mxu0 0.0
    %149 = vmatpush1.msra.mxu0 0.0
    %150 = vmatprep.subr.mxu0 0.0
    %151 = vmatpush1.msra.mxu0 0.0
    %152 = vmatprep.subr.mxu0 0.0
    %153 = vmatpush1.msra.mxu0 0.0
    %154 = vmatprep.subr.mxu0 0.0
    %155 = vmatpush1.msra.mxu0 0.0
    %156 = vmatprep.subr.mxu0 0.0
    %157 = vmatpush1.msra.mxu0 0.0
    %158 = vmatprep.subr.mxu0 0.0
    %159 = vmatpush1.msra.mxu0 0.0
    %160 = vmatprep.subr.mxu0 0.0
    %161 = vmatpush1.msra.mxu0 0.0
    %162 = vmatprep.subr.mxu0 0.0
    %163 = vmatpush1.msra.mxu0 0.0
    %164 = vmatprep.subr.mxu0 0.0
    %165 = vmatpush1.msra.mxu0 0.0
    %166 = vmatprep.subr.mxu0 0.0
    %167 = vmatpush1.msra.mxu0 0.0
    %168 = vmatprep.subr.mxu0 0.0
    %169 = vmatpush1.msra.mxu0 0.0
    %170 = vmatprep.subr.mxu0 0.0
    %171 = vmatpush1.msra.mxu0 0.0
    %172 = vmatprep.mubr.f32.mxu0 0.0
    %173 = vmatmul.mubr.f32.gmra.mrb[0].mxu0 %v99
    %v174 = vpop.f32.mrb[0].mxu0
    %v175 = vadd.f32 %v90, %v174
    %v176 = vpop.f32.mrb[0].mxu0
    %177 = vmatprep.mubr.f32.mxu0 0.0
    %178 = vmatmul.mubr.f32.gmra.mrb[0].mxu0 %v102
    %v179 = vpop.f32.mrb[0].mxu0
    %v180 = vadd.f32 %v95, %v179
    %v181 = vpop.f32.mrb[0].mxu0
    %182 = vdwg.mxu0
    %v183 = vpack.c.bf16 %v84, %v84
    %v185 = vunpack.c.l.b16 %v73
    %v186 = vunpack.c.h.b16 %v73
    %v187 = vpack.c.b16 %v185, %v185
    %v188 = vpack.c.b16 %v186, %v186
    %v190 = vsel %vm97, %v183, 0
    %vm192 = vcmask 1041408
    %v194 = vsel %vm192, %v187, 0
    %v197 = vsel %vm192, %v188, 0
    %199 = vmatprep.subr.bf16.mxu0 %v197
    %200 = vmatpush1.bf16.msra.mxu0 %v194
    %201 = vmatprep.subr.bf16.mxu0 0
    %202 = vmatpush1.bf16.msra.mxu0 0
    %203 = vmatprep.subr.bf16.mxu0 0
    %204 = vmatpush1.bf16.msra.mxu0 0
    %205 = vmatprep.subr.bf16.mxu0 0
    %206 = vmatpush1.bf16.msra.mxu0 0
    %207 = vmatprep.subr.bf16.mxu0 0
    %208 = vmatpush1.bf16.msra.mxu0 0
    %209 = vmatprep.subr.bf16.mxu0 0
    %210 = vmatpush1.bf16.msra.mxu0 0
    %211 = vmatprep.subr.bf16.mxu0 0
    %212 = vmatpush1.bf16.msra.mxu0 0
    %213 = vmatprep.subr.bf16.mxu0 0
    %214 = vmatpush1.bf16.msra.mxu0 0
    %215 = vmatprep.subr.bf16.mxu0 0
    %216 = vmatpush1.bf16.msra.mxu0 0
    %217 = vmatprep.subr.bf16.mxu0 0
    %218 = vmatpush1.bf16.msra.mxu0 0
    %219 = vmatprep.subr.bf16.mxu0 0
    %220 = vmatpush1.bf16.msra.mxu0 0
    %221 = vmatprep.subr.bf16.mxu0 0
    %222 = vmatpush1.bf16.msra.mxu0 0
    %223 = vmatprep.subr.bf16.mxu0 0
    %224 = vmatpush1.bf16.msra.mxu0 0
    %225 = vmatprep.subr.bf16.mxu0 0
    %226 = vmatpush1.bf16.msra.mxu0 0
    %227 = vmatprep.subr.bf16.mxu0 0
    %228 = vmatpush1.bf16.msra.mxu0 0
    %229 = vmatprep.subr.bf16.mxu0 0
    %230 = vmatpush1.bf16.msra.mxu0 0
    %231 = vmatprep.mubr.bf16.mxu0 0
    %232 = vmatmul.mubr.bf16.gmra.mrb[0].mxu0 %v190
    %v233 = vpop.f32.mrb[0].mxu0
    %v234 = vadd.f32 0.0, %v233
    %v235 = vpop.f32.mrb[0].mxu0
    %v236 = vadd.f32 0.0, %v235
    %v237 = vpop.f32.mrb[0].mxu0
    %v238 = vpop.f32.mrb[0].mxu0
    %239 = vdwg.mxu0
    %v240 = vlaneseq
    %v241 = vshrl.u32 %v240, 7
    %v242 = vsub.s32 6, %v241
    %v243 = vrot.slane %v175, %v242
    %245 = vbcast.lane.b32.xlu0 %v243, 256
    %v246 = vpop.permute.xlu0 %245
    %s248 = sor.u32 256, 8
    %249 = vbcast.lane.b32.xlu0 %v243, %s248
    %v250 = vpop.permute.xlu0 %249
    %v251 = vlaneseq
    %v252 = vshrl.u32 %v251, 7
    %v253 = vsub.s32 7, %v252
    %v254 = vrot.slane %v175, %v253
    %256 = vbcast.lane.b32.xlu0 %v254, 256
    %v257 = vpop.permute.xlu0 %256
    %s259 = sor.u32 256, 8
    %260 = vbcast.lane.b32.xlu0 %v254, %s259
    %v261 = vpop.permute.xlu0 %260
    %v262 = vlaneseq
    %v263 = vshrl.u32 %v262, 7
    %v264 = vsub.s32 0, %v263
    %v265 = vrot.slane %v180, %v264
    %267 = vbcast.lane.b32.xlu0 %v265, 256
    %v268 = vpop.permute.xlu0 %267
    %s270 = sor.u32 256, 8
    %271 = vbcast.lane.b32.xlu0 %v265, %s270
    %v272 = vpop.permute.xlu0 %271
    %v273 = vlaneseq
    %v274 = vshrl.u32 %v273, 7
    %v275 = vsub.s32 1, %v274
    %v276 = vrot.slane %v180, %v275
    %278 = vbcast.lane.b32.xlu0 %v276, 256
    %v279 = vpop.permute.xlu0 %278
    %s281 = sor.u32 256, 8
    %282 = vbcast.lane.b32.xlu0 %v276, %s281
    %v283 = vpop.permute.xlu0 %282
    %v284 = vlaneseq
    %v285 = vshrl.u32 %v284, 7
    %v286 = vsub.s32 2, %v285
    %v287 = vrot.slane %v180, %v286
    %289 = vbcast.lane.b32.xlu0 %v287, 256
    %v290 = vpop.permute.xlu0 %289
    %s292 = sor.u32 256, 8
    %293 = vbcast.lane.b32.xlu0 %v287, %s292
    %v294 = vpop.permute.xlu0 %293
    %v295 = vlaneseq
    %v296 = vshrl.u32 %v295, 7
    %v297 = vsub.s32 3, %v296
    %v298 = vrot.slane %v180, %v297
    %300 = vbcast.lane.b32.xlu0 %v298, 256
    %v301 = vpop.permute.xlu0 %300
    %s303 = sor.u32 256, 8
    %304 = vbcast.lane.b32.xlu0 %v298, %s303
    %v305 = vpop.permute.xlu0 %304
    %v307 = vcombine.high %v175, %v175
    %v309 = vunpack.c.l.s4 1966171168
    %v310 = vunpack.c.0.s8 %v309
    %v311 = vlaneseq
    %v312 = vshrl.u32 %v311, 7
    %v313 = vsub.s32 %v310, %v312
    %v314 = vrot.slane %v175, %v313
    %v316 = vunpack.c.l.s4 1966171168
    %v317 = vunpack.c.0.s8 %v316
    %v318 = vlaneseq
    %v319 = vshrl.u32 %v318, 7
    %v320 = vsub.s32 %v317, %v319
    %v321 = vrot.slane %v307, %v320
    %v322 = vcombine.high %v314, %v314
    %v323 = vcombine.high %v321, %v321
    %v325 = vunpack.c.l.s4 1966171168
    %v326 = vunpack.c.0.s8 %v325
    %v327 = vlaneseq
    %v328 = vshrl.u32 %v327, 7
    %v329 = vsub.s32 %v326, %v328
    %v330 = vrot.slane %v314, %v329
    %v332 = vunpack.c.l.s4 1966171168
    %v333 = vunpack.c.0.s8 %v332
    %v334 = vlaneseq
    %v335 = vshrl.u32 %v334, 7
    %v336 = vsub.s32 %v333, %v335
    %v337 = vrot.slane %v321, %v336
    %v339 = vunpack.c.l.s4 1966171168
    %v340 = vunpack.c.0.s8 %v339
    %v341 = vlaneseq
    %v342 = vshrl.u32 %v341, 7
    %v343 = vsub.s32 %v340, %v342
    %v344 = vrot.slane %v322, %v343
    %v346 = vunpack.c.l.s4 1966171168
    %v347 = vunpack.c.0.s8 %v346
    %v348 = vlaneseq
    %v349 = vshrl.u32 %v348, 7
    %v350 = vsub.s32 %v347, %v349
    %v351 = vrot.slane %v323, %v350
    %v352 = vcombine.high %v330, %v330
    %v353 = vcombine.high %v344, %v344
    %v354 = vlaneseq
    %v355 = vshrl.u32 %v354, 7
    %v356 = vsub.s32 0, %v355
    %v357 = vrot.slane %v330, %v356
    %v358 = vlaneseq
    %v359 = vshrl.u32 %v358, 7
    %v360 = vsub.s32 0, %v359
    %v361 = vrot.slane %v344, %v360
    %v362 = vlaneseq
    %v363 = vshrl.u32 %v362, 7
    %v364 = vsub.s32 0, %v363
    %v365 = vrot.slane %v352, %v364
    %v366 = vlaneseq
    %v367 = vshrl.u32 %v366, 7
    %v368 = vsub.s32 0, %v367
    %v369 = vrot.slane %v353, %v368
    %v370 = vlaneseq
    %v371 = vshrl.u32 %v370, 7
    %v372 = vsub.s32 0, %v371
    %v373 = vrot.slane %v337, %v372
    %v374 = vlaneseq
    %v375 = vshrl.u32 %v374, 7
    %v376 = vsub.s32 0, %v375
    %v377 = vrot.slane %v351, %v376
    %v384 = vadd.f32 %v246, %v357
    %v385 = vadd.f32 %v250, %v357
    %v386 = vadd.f32 %v257, %v361
    %v387 = vadd.f32 %v261, %v361
    %v388 = vadd.f32 %v268, %v365
    %v389 = vadd.f32 %v272, %v365
    %v390 = vadd.f32 %v279, %v369
    %v391 = vadd.f32 %v283, %v369
    %v392 = vadd.f32 %v290, %v373
    %v393 = vadd.f32 %v294, %v373
    %v394 = vadd.f32 %v301, %v377
    %v395 = vadd.f32 %v305, %v377
    %397 = vrot.lane.b32.xlu0 %v234, 116
    %v398 = vpop.permute.xlu0 %397
    %400 = vrot.lane.b32.xlu0 %v234, 104
    %v401 = vpop.permute.xlu0 %400
    %403 = vrot.lane.b32.xlu0 %v234, 92
    %v404 = vpop.permute.xlu0 %403
    %406 = vrot.lane.b32.xlu0 %v234, 80
    %v407 = vpop.permute.xlu0 %406
    %409 = vrot.lane.b32.xlu0 %v234, 68
    %v410 = vpop.permute.xlu0 %409
    %412 = vrot.lane.b32.xlu0 %v234, 56
    %v413 = vpop.permute.xlu0 %412
    %415 = vrot.lane.b32.xlu0 %v234, 44
    %v416 = vpop.permute.xlu0 %415
    %418 = vrot.lane.b32.xlu0 %v234, 32
    %v419 = vpop.permute.xlu0 %418
    %421 = vrot.lane.b32.xlu0 %v234, 20
    %v422 = vpop.permute.xlu0 %421
    %425 = vrot.lane.b32.xlu0 %v234, 8
    %v426 = vpop.permute.xlu0 %425
    %427 = vrot.lane.b32.xlu0 %v236, 8
    %v428 = vpop.permute.xlu0 %427
    %vm429 = vcmask 64512
    %v430 = vsel %vm429, %v426, %v428
    %432 = vrot.lane.b32.xlu0 %v236, 124
    %v433 = vpop.permute.xlu0 %432
    %v435 = vcombine.low %v234, %v401
    %v436 = vcombine.high %v234, %v401
    %v438 = vunpack.c.l.s4 1983009808
    %v439 = vunpack.c.0.s8 %v438
    %v440 = vlaneseq
    %v441 = vshrl.u32 %v440, 7
    %v442 = vsub.s32 %v439, %v441
    %v443 = vrot.slane %v435, %v442
    %v445 = vunpack.c.l.s4 1983009808
    %v446 = vunpack.c.0.s8 %v445
    %v447 = vlaneseq
    %v448 = vshrl.u32 %v447, 7
    %v449 = vsub.s32 %v446, %v448
    %v450 = vrot.slane %v436, %v449
    %v451 = vcombine.low %v398, %v404
    %v452 = vcombine.high %v398, %v404
    %v454 = vunpack.c.l.s4 1983009808
    %v455 = vunpack.c.0.s8 %v454
    %v456 = vlaneseq
    %v457 = vshrl.u32 %v456, 7
    %v458 = vsub.s32 %v455, %v457
    %v459 = vrot.slane %v451, %v458
    %v461 = vunpack.c.l.s4 1983009808
    %v462 = vunpack.c.0.s8 %v461
    %v463 = vlaneseq
    %v464 = vshrl.u32 %v463, 7
    %v465 = vsub.s32 %v462, %v464
    %v466 = vrot.slane %v452, %v465
    %v467 = vcombine.low %v407, %v413
    %v468 = vcombine.high %v407, %v413
    %v470 = vunpack.c.l.s4 1983009808
    %v471 = vunpack.c.0.s8 %v470
    %v472 = vlaneseq
    %v473 = vshrl.u32 %v472, 7
    %v474 = vsub.s32 %v471, %v473
    %v475 = vrot.slane %v467, %v474
    %v477 = vunpack.c.l.s4 1983009808
    %v478 = vunpack.c.0.s8 %v477
    %v479 = vlaneseq
    %v480 = vshrl.u32 %v479, 7
    %v481 = vsub.s32 %v478, %v480
    %v482 = vrot.slane %v468, %v481
    %v483 = vcombine.low %v410, %v416
    %v484 = vcombine.high %v410, %v416
    %v486 = vunpack.c.l.s4 1983009808
    %v487 = vunpack.c.0.s8 %v486
    %v488 = vlaneseq
    %v489 = vshrl.u32 %v488, 7
    %v490 = vsub.s32 %v487, %v489
    %v491 = vrot.slane %v483, %v490
    %v493 = vunpack.c.l.s4 1983009808
    %v494 = vunpack.c.0.s8 %v493
    %v495 = vlaneseq
    %v496 = vshrl.u32 %v495, 7
    %v497 = vsub.s32 %v494, %v496
    %v498 = vrot.slane %v484, %v497
    %v499 = vcombine.low %v443, %v459
    %v500 = vcombine.high %v443, %v459
    %v502 = vunpack.c.l.s4 1934713408
    %v503 = vunpack.c.0.s8 %v502
    %v504 = vlaneseq
    %v505 = vshrl.u32 %v504, 7
    %v506 = vsub.s32 %v503, %v505
    %v507 = vrot.slane %v499, %v506
    %v509 = vunpack.c.l.s4 1934713408
    %v510 = vunpack.c.0.s8 %v509
    %v511 = vlaneseq
    %v512 = vshrl.u32 %v511, 7
    %v513 = vsub.s32 %v510, %v512
    %v514 = vrot.slane %v500, %v513
    %v515 = vcombine.low %v450, %v466
    %v517 = vunpack.c.l.s4 1934713408
    %v518 = vunpack.c.0.s8 %v517
    %v519 = vlaneseq
    %v520 = vshrl.u32 %v519, 7
    %v521 = vsub.s32 %v518, %v520
    %v522 = vrot.slane %v515, %v521
    %v523 = vcombine.low %v475, %v491
    %v524 = vcombine.high %v475, %v491
    %v526 = vunpack.c.l.s4 1934713408
    %v527 = vunpack.c.0.s8 %v526
    %v528 = vlaneseq
    %v529 = vshrl.u32 %v528, 7
    %v530 = vsub.s32 %v527, %v529
    %v531 = vrot.slane %v523, %v530
    %v533 = vunpack.c.l.s4 1934713408
    %v534 = vunpack.c.0.s8 %v533
    %v535 = vlaneseq
    %v536 = vshrl.u32 %v535, 7
    %v537 = vsub.s32 %v534, %v536
    %v538 = vrot.slane %v524, %v537
    %v539 = vcombine.low %v482, %v498
    %v541 = vunpack.c.l.s4 1934713408
    %v542 = vunpack.c.0.s8 %v541
    %v543 = vlaneseq
    %v544 = vshrl.u32 %v543, 7
    %v545 = vsub.s32 %v542, %v544
    %v546 = vrot.slane %v539, %v545
    %v547 = vcombine.low %v507, %v531
    %v548 = vcombine.high %v507, %v531
    %v549 = vcombine.low %v514, %v538
    %v550 = vcombine.high %v514, %v538
    %v551 = vcombine.low %v522, %v546
    %v552 = vcombine.high %v522, %v546
    %v553 = vcombine.low %v419, %v430
    %v554 = vcombine.high %v419, %v430
    %v556 = vunpack.c.l.s4 1983009808
    %v557 = vunpack.c.0.s8 %v556
    %v558 = vlaneseq
    %v559 = vshrl.u32 %v558, 7
    %v560 = vsub.s32 %v557, %v559
    %v561 = vrot.slane %v553, %v560
    %v563 = vunpack.c.l.s4 1983009808
    %v564 = vunpack.c.0.s8 %v563
    %v565 = vlaneseq
    %v566 = vshrl.u32 %v565, 7
    %v567 = vsub.s32 %v564, %v566
    %v568 = vrot.slane %v554, %v567
    %v569 = vcombine.low %v422, %v433
    %v570 = vcombine.high %v422, %v433
    %v572 = vunpack.c.l.s4 1983009808
    %v573 = vunpack.c.0.s8 %v572
    %v574 = vlaneseq
    %v575 = vshrl.u32 %v574, 7
    %v576 = vsub.s32 %v573, %v575
    %v577 = vrot.slane %v569, %v576
    %v579 = vunpack.c.l.s4 1983009808
    %v580 = vunpack.c.0.s8 %v579
    %v581 = vlaneseq
    %v582 = vshrl.u32 %v581, 7
    %v583 = vsub.s32 %v580, %v582
    %v584 = vrot.slane %v570, %v583
    %v585 = vcombine.low %v561, %v577
    %v586 = vcombine.high %v561, %v577
    %v588 = vunpack.c.l.s4 1934713408
    %v589 = vunpack.c.0.s8 %v588
    %v590 = vlaneseq
    %v591 = vshrl.u32 %v590, 7
    %v592 = vsub.s32 %v589, %v591
    %v593 = vrot.slane %v585, %v592
    %v595 = vunpack.c.l.s4 1934713408
    %v596 = vunpack.c.0.s8 %v595
    %v597 = vlaneseq
    %v598 = vshrl.u32 %v597, 7
    %v599 = vsub.s32 %v596, %v598
    %v600 = vrot.slane %v586, %v599
    %v601 = vcombine.low %v568, %v584
    %v603 = vunpack.c.l.s4 1934713408
    %v604 = vunpack.c.0.s8 %v603
    %v605 = vlaneseq
    %v606 = vshrl.u32 %v605, 7
    %v607 = vsub.s32 %v604, %v606
    %v608 = vrot.slane %v601, %v607
    %v609 = vcombine.high %v593, 0.0
    %v610 = vcombine.high %v600, 0.0
    %v611 = vcombine.high %v608, 0.0
    %v612 = vadd.f32 %v384, %v547
    %v613 = vadd.f32 %v385, %v593
    %v614 = vadd.f32 %v386, %v548
    %v615 = vadd.f32 %v387, %v609
    %v616 = vadd.f32 %v388, %v549
    %v617 = vadd.f32 %v389, %v600
    %v618 = vadd.f32 %v390, %v550
    %v619 = vadd.f32 %v391, %v610
    %v620 = vadd.f32 %v392, %v551
    %v621 = vadd.f32 %v393, %v608
    %v622 = vadd.f32 %v394, %v552
    %v623 = vadd.f32 %v395, %v611
    %vm624 = vcmp.gt.f32.partialorder %v612, 0.0
    %vm625 = vcmp.gt.f32.partialorder %v613, 0.0
    %vm626 = vcmp.gt.f32.partialorder %v614, 0.0
    %vm627 = vcmp.gt.f32.partialorder %v615, 0.0
    %vm628 = vcmp.gt.f32.partialorder %v616, 0.0
    %vm629 = vcmp.gt.f32.partialorder %v617, 0.0
    %vm630 = vcmp.gt.f32.partialorder %v618, 0.0
    %vm631 = vcmp.gt.f32.partialorder %v619, 0.0
    %vm632 = vcmp.gt.f32.partialorder %v620, 0.0
    %vm633 = vcmp.gt.f32.partialorder %v621, 0.0
    %vm634 = vcmp.gt.f32.partialorder %v622, 0.0
    %vm635 = vcmp.gt.f32.partialorder %v623, 0.0
    %v636 = vmul.f32 %v612, 0.2
    %v637 = vmul.f32 %v613, 0.2
    %v638 = vmul.f32 %v614, 0.2
    %v639 = vmul.f32 %v615, 0.2
    %v640 = vmul.f32 %v616, 0.2
    %v641 = vmul.f32 %v617, 0.2
    %v642 = vmul.f32 %v618, 0.2
    %v643 = vmul.f32 %v619, 0.2
    %v644 = vmul.f32 %v620, 0.2
    %v645 = vmul.f32 %v621, 0.2
    %v646 = vmul.f32 %v622, 0.2
    %v647 = vmul.f32 %v623, 0.2
    %v648 = vsel %vm624, %v612, %v636
    %v649 = vsel %vm625, %v613, %v637
    %v650 = vsel %vm626, %v614, %v638
    %v651 = vsel %vm627, %v615, %v639
    %v652 = vsel %vm628, %v616, %v640
    %v653 = vsel %vm629, %v617, %v641
    %v654 = vsel %vm630, %v618, %v642
    %v655 = vsel %vm631, %v619, %v643
    %v656 = vsel %vm632, %v620, %v644
    %v657 = vsel %vm634, %v622, %v646
    %v658 = vcombine.low %v648, %v652
    %v659 = vcombine.high %v648, %v652
    %v661 = vunpack.c.l.s4 1983009808
    %v662 = vunpack.c.0.s8 %v661
    %v663 = vlaneseq
    %v664 = vshrl.u32 %v663, 7
    %v665 = vsub.s32 %v662, %v664
    %v666 = vrot.slane %v658, %v665
    %v668 = vunpack.c.l.s4 1983009808
    %v669 = vunpack.c.0.s8 %v668
    %v670 = vlaneseq
    %v671 = vshrl.u32 %v670, 7
    %v672 = vsub.s32 %v669, %v671
    %v673 = vrot.slane %v659, %v672
    %v674 = vcombine.low %v650, %v654
    %v675 = vcombine.high %v650, %v654
    %v677 = vunpack.c.l.s4 1983009808
    %v678 = vunpack.c.0.s8 %v677
    %v679 = vlaneseq
    %v680 = vshrl.u32 %v679, 7
    %v681 = vsub.s32 %v678, %v680
    %v682 = vrot.slane %v674, %v681
    %v684 = vunpack.c.l.s4 1983009808
    %v685 = vunpack.c.0.s8 %v684
    %v686 = vlaneseq
    %v687 = vshrl.u32 %v686, 7
    %v688 = vsub.s32 %v685, %v687
    %v689 = vrot.slane %v675, %v688
    %v690 = vcombine.high %v656, 0.0
    %v692 = vunpack.c.l.s4 1983009808
    %v693 = vunpack.c.0.s8 %v692
    %v694 = vlaneseq
    %v695 = vshrl.u32 %v694, 7
    %v696 = vsub.s32 %v693, %v695
    %v697 = vrot.slane %v656, %v696
    %v699 = vunpack.c.l.s4 1983009808
    %v700 = vunpack.c.0.s8 %v699
    %v701 = vlaneseq
    %v702 = vshrl.u32 %v701, 7
    %v703 = vsub.s32 %v700, %v702
    %v704 = vrot.slane %v690, %v703
    %v705 = vcombine.high %v657, 0.0
    %v707 = vunpack.c.l.s4 1983009808
    %v708 = vunpack.c.0.s8 %v707
    %v709 = vlaneseq
    %v710 = vshrl.u32 %v709, 7
    %v711 = vsub.s32 %v708, %v710
    %v712 = vrot.slane %v657, %v711
    %v714 = vunpack.c.l.s4 1983009808
    %v715 = vunpack.c.0.s8 %v714
    %v716 = vlaneseq
    %v717 = vshrl.u32 %v716, 7
    %v718 = vsub.s32 %v715, %v717
    %v719 = vrot.slane %v705, %v718
    %v720 = vcombine.low %v666, %v682
    %v721 = vcombine.high %v666, %v682
    %v723 = vunpack.c.l.s4 1934713408
    %v724 = vunpack.c.0.s8 %v723
    %v725 = vlaneseq
    %v726 = vshrl.u32 %v725, 7
    %v727 = vsub.s32 %v724, %v726
    %v728 = vrot.slane %v720, %v727
    %v730 = vunpack.c.l.s4 1934713408
    %v731 = vunpack.c.0.s8 %v730
    %v732 = vlaneseq
    %v733 = vshrl.u32 %v732, 7
    %v734 = vsub.s32 %v731, %v733
    %v735 = vrot.slane %v721, %v734
    %v736 = vcombine.low %v673, %v689
    %v737 = vcombine.high %v673, %v689
    %v739 = vunpack.c.l.s4 1934713408
    %v740 = vunpack.c.0.s8 %v739
    %v741 = vlaneseq
    %v742 = vshrl.u32 %v741, 7
    %v743 = vsub.s32 %v740, %v742
    %v744 = vrot.slane %v736, %v743
    %v746 = vunpack.c.l.s4 1934713408
    %v747 = vunpack.c.0.s8 %v746
    %v748 = vlaneseq
    %v749 = vshrl.u32 %v748, 7
    %v750 = vsub.s32 %v747, %v749
    %v751 = vrot.slane %v737, %v750
    %v752 = vcombine.low %v697, %v712
    %v753 = vcombine.high %v697, %v712
    %v755 = vunpack.c.l.s4 1934713408
    %v756 = vunpack.c.0.s8 %v755
    %v757 = vlaneseq
    %v758 = vshrl.u32 %v757, 7
    %v759 = vsub.s32 %v756, %v758
    %v760 = vrot.slane %v752, %v759
    %v762 = vunpack.c.l.s4 1934713408
    %v763 = vunpack.c.0.s8 %v762
    %v764 = vlaneseq
    %v765 = vshrl.u32 %v764, 7
    %v766 = vsub.s32 %v763, %v765
    %v767 = vrot.slane %v753, %v766
    %v768 = vcombine.low %v704, %v719
    %v769 = vcombine.high %v704, %v719
    %v771 = vunpack.c.l.s4 1934713408
    %v772 = vunpack.c.0.s8 %v771
    %v773 = vlaneseq
    %v774 = vshrl.u32 %v773, 7
    %v775 = vsub.s32 %v772, %v774
    %v776 = vrot.slane %v768, %v775
    %v778 = vunpack.c.l.s4 1934713408
    %v779 = vunpack.c.0.s8 %v778
    %v780 = vlaneseq
    %v781 = vshrl.u32 %v780, 7
    %v782 = vsub.s32 %v779, %v781
    %v783 = vrot.slane %v769, %v782
    %v784 = vcombine.low %v728, %v760
    %v785 = vcombine.high %v728, %v760
    %v786 = vcombine.low %v735, %v767
    %v787 = vcombine.high %v735, %v767
    %v788 = vcombine.low %v744, %v776
    %v789 = vcombine.high %v744, %v776
    %v790 = vcombine.low %v751, %v783
    %v791 = vcombine.high %v751, %v783
    %v792 = vcombine.low %v649, %v653
    %v794 = vunpack.c.l.s4 1983009808
    %v795 = vunpack.c.0.s8 %v794
    %v796 = vlaneseq
    %v797 = vshrl.u32 %v796, 7
    %v798 = vsub.s32 %v795, %v797
    %v799 = vrot.slane %v792, %v798
    %v800 = vcombine.low %v651, %v655
    %v802 = vunpack.c.l.s4 1983009808
    %v803 = vunpack.c.0.s8 %v802
    %v804 = vlaneseq
    %v805 = vshrl.u32 %v804, 7
    %v806 = vsub.s32 %v803, %v805
    %v807 = vrot.slane %v800, %v806
    %v808 = vsel %vm633, %v621, %v645
    %v810 = vunpack.c.l.s4 1983009808
    %v811 = vunpack.c.0.s8 %v810
    %v812 = vlaneseq
    %v813 = vshrl.u32 %v812, 7
    %v814 = vsub.s32 %v811, %v813
    %v815 = vrot.slane %v808, %v814
    %v816 = vsel %vm635, %v623, %v647
    %v818 = vunpack.c.l.s4 1983009808
    %v819 = vunpack.c.0.s8 %v818
    %v820 = vlaneseq
    %v821 = vshrl.u32 %v820, 7
    %v822 = vsub.s32 %v819, %v821
    %v823 = vrot.slane %v816, %v822
    %v824 = vcombine.low %v799, %v807
    %v825 = vcombine.high %v799, %v807
    %v827 = vunpack.c.l.s4 1934713408
    %v828 = vunpack.c.0.s8 %v827
    %v829 = vlaneseq
    %v830 = vshrl.u32 %v829, 7
    %v831 = vsub.s32 %v828, %v830
    %v832 = vrot.slane %v824, %v831
    %v834 = vunpack.c.l.s4 1934713408
    %v835 = vunpack.c.0.s8 %v834
    %v836 = vlaneseq
    %v837 = vshrl.u32 %v836, 7
    %v838 = vsub.s32 %v835, %v837
    %v839 = vrot.slane %v825, %v838
    %v840 = vcombine.low %v815, %v823
    %v841 = vcombine.high %v815, %v823
    %v843 = vunpack.c.l.s4 1934713408
    %v844 = vunpack.c.0.s8 %v843
    %v845 = vlaneseq
    %v846 = vshrl.u32 %v845, 7
    %v847 = vsub.s32 %v844, %v846
    %v848 = vrot.slane %v840, %v847
    %v850 = vunpack.c.l.s4 1934713408
    %v851 = vunpack.c.0.s8 %v850
    %v852 = vlaneseq
    %v853 = vshrl.u32 %v852, 7
    %v854 = vsub.s32 %v851, %v853
    %v855 = vrot.slane %v841, %v854
    %v856 = vcombine.low %v832, %v848
    %v857 = vcombine.high %v832, %v848
    %v858 = vcombine.low %v839, %v855
    %v859 = vcombine.high %v839, %v855
    %861 = vrot.lane.b32.xlu0 %v785, 12
    %v862 = vpop.permute.xlu0 %861
    %865 = vrot.lane.b32.xlu0 %v786, 24
    %v866 = vpop.permute.xlu0 %865
    %869 = vrot.lane.b32.xlu0 %v787, 36
    %v870 = vpop.permute.xlu0 %869
    %873 = vrot.lane.b32.xlu0 %v788, 48
    %v874 = vpop.permute.xlu0 %873
    %877 = vrot.lane.b32.xlu0 %v789, 60
    %v878 = vpop.permute.xlu0 %877
    %881 = vrot.lane.b32.xlu0 %v790, 72
    %v882 = vpop.permute.xlu0 %881
    %885 = vrot.lane.b32.xlu0 %v791, 84
    %v886 = vpop.permute.xlu0 %885
    %889 = vrot.lane.b32.xlu0 %v856, 96
    %v890 = vpop.permute.xlu0 %889
    %893 = vrot.lane.b32.xlu0 %v857, 108
    %v894 = vpop.permute.xlu0 %893
    %897 = vrot.lane.b32.xlu0 %v858, 120
    %v898 = vpop.permute.xlu0 %897
    %901 = vrot.lane.b32.xlu0 %v859, 4
    %v902 = vpop.permute.xlu0 %901
    %vm904 = vcmask 97280
    %v905 = vsel %vm904, %v784, %v862
    %vm906 = vcmask 195584
    %v907 = vsel %vm906, %v905, %v866
    %vm908 = vcmask 293888
    %v909 = vsel %vm908, %v907, %v870
    %vm910 = vcmask 392192
    %v911 = vsel %vm910, %v909, %v874
    %vm912 = vcmask 490496
    %v913 = vsel %vm912, %v911, %v878
    %vm914 = vcmask 588800
    %v915 = vsel %vm914, %v913, %v882
    %vm916 = vcmask 687104
    %v917 = vsel %vm916, %v915, %v886
    %vm918 = vcmask 785408
    %v919 = vsel %vm918, %v917, %v890
    %vm920 = vcmask 883712
    %v921 = vsel %vm920, %v919, %v894
    %vm922 = vcmask 982016
    %v923 = vsel %vm922, %v921, %v898
    %v924 = vsel %vm97, %v898, %v902
    %vm925 = vcmask 48128
    %v927 = vsel %vm925, %v85, 0
    %vm929 = vcmask 1045504
    %v931 = vsel %vm929, %v923, 0
    %v934 = vsel %vm929, %v924, 0
    %936 = vmatprep.subr.mxu0 %v934
    %937 = vmatpush1.msra.mxu0 %v931
    %938 = vmatprep.subr.mxu0 0.0
    %939 = vmatpush1.msra.mxu0 0.0
    %940 = vmatprep.subr.mxu0 0.0
    %941 = vmatpush1.msra.mxu0 0.0
    %942 = vmatprep.subr.mxu0 0.0
    %943 = vmatpush1.msra.mxu0 0.0
    %944 = vmatprep.subr.mxu0 0.0
    %945 = vmatpush1.msra.mxu0 0.0
    %946 = vmatprep.subr.mxu0 0.0
    %947 = vmatpush1.msra.mxu0 0.0
    %948 = vmatprep.subr.mxu0 0.0
    %949 = vmatpush1.msra.mxu0 0.0
    %950 = vmatprep.subr.mxu0 0.0
    %951 = vmatpush1.msra.mxu0 0.0
    %952 = vmatprep.subr.mxu0 0.0
    %953 = vmatpush1.msra.mxu0 0.0
    %954 = vmatprep.subr.mxu0 0.0
    %955 = vmatpush1.msra.mxu0 0.0
    %956 = vmatprep.subr.mxu0 0.0
    %957 = vmatpush1.msra.mxu0 0.0
    %958 = vmatprep.subr.mxu0 0.0
    %959 = vmatpush1.msra.mxu0 0.0
    %960 = vmatprep.subr.mxu0 0.0
    %961 = vmatpush1.msra.mxu0 0.0
    %962 = vmatprep.subr.mxu0 0.0
    %963 = vmatpush1.msra.mxu0 0.0
    %964 = vmatprep.subr.mxu0 0.0
    %965 = vmatpush1.msra.mxu0 0.0
    %966 = vmatprep.subr.mxu0 0.0
    %967 = vmatpush1.msra.mxu0 0.0
    %968 = vmatprep.subr.mxu0 0.0
    %969 = vmatpush1.msra.mxu0 0.0
    %970 = vmatprep.subr.mxu0 0.0
    %971 = vmatpush1.msra.mxu0 0.0
    %972 = vmatprep.subr.mxu0 0.0
    %973 = vmatpush1.msra.mxu0 0.0
    %974 = vmatprep.subr.mxu0 0.0
    %975 = vmatpush1.msra.mxu0 0.0
    %976 = vmatprep.subr.mxu0 0.0
    %977 = vmatpush1.msra.mxu0 0.0
    %978 = vmatprep.subr.mxu0 0.0
    %979 = vmatpush1.msra.mxu0 0.0
    %980 = vmatprep.subr.mxu0 0.0
    %981 = vmatpush1.msra.mxu0 0.0
    %982 = vmatprep.subr.mxu0 0.0
    %983 = vmatpush1.msra.mxu0 0.0
    %984 = vmatprep.subr.mxu0 0.0
    %985 = vmatpush1.msra.mxu0 0.0
    %986 = vmatprep.subr.mxu0 0.0
    %987 = vmatpush1.msra.mxu0 0.0
    %988 = vmatprep.subr.mxu0 0.0
    %989 = vmatpush1.msra.mxu0 0.0
    %990 = vmatprep.subr.mxu0 0.0
    %991 = vmatpush1.msra.mxu0 0.0
    %992 = vmatprep.subr.mxu0 0.0
    %993 = vmatpush1.msra.mxu0 0.0
    %994 = vmatprep.subr.mxu0 0.0
    %995 = vmatpush1.msra.mxu0 0.0
    %996 = vmatprep.subr.mxu0 0.0
    %997 = vmatpush1.msra.mxu0 0.0
    %998 = vmatprep.subr.mxu0 0.0
    %999 = vmatpush1.msra.mxu0 0.0
    %1000 = vmatprep.mubr.f32.mxu0 0.0
    %1001 = vmatmul.mubr.f32.gmra.mrb[0].mxu0 %v927
    %v1002 = vpop.f32.mrb[0].mxu0
    %v1003 = vadd.f32 0.0, %v1002
    %v1004 = vpop.f32.mrb[0].mxu0
    %v1005 = vadd.f32 0.0, %v1004
    %1006 = vdwg.mxu0
    %vm1007 = vcmp.gt.bf16.partialorder %v73, 0
    %v1008 = vsel %vm1007, 65537, 0
    %v1009 = vunpack.c.l.b16 %v1008
    %v1010 = vunpack.c.h.b16 %v1008
    %vm1011 = vcmp.ne.s32.totalorder %v1009, 0
    %vm1012 = vcmp.ne.s32.totalorder %v1010, 0
    %v1013 = vsel %vm1011, 1, 0
    %v1014 = vsel %vm1012, 1, 0
    %v1015 = vrot.slane %v1013, 4
    %v1016 = vrot.slane %v1014, 4
    %vm1017 = vcmp.ne.s32.totalorder %v1015, 0
    %vm1018 = vcmp.ne.s32.totalorder %v1016, 0
    %v1019 = vsel %vm1017, 1, 0
    %v1020 = vsel %vm1018, 1, 0
    %v1021 = vlaneseq
    %v1022 = vshrl.u32 %v1021, 7
    %v1023 = vsub.s32 0, %v1022
    %v1024 = vrot.slane %v1019, %v1023
    %v1025 = vlaneseq
    %v1026 = vshrl.u32 %v1025, 7
    %v1027 = vsub.s32 0, %v1026
    %v1028 = vrot.slane %v1020, %v1027
    %vm1029 = vcmp.eq.s32.totalorder %v1024, 1
    %vm1030 = vcmp.eq.s32.totalorder %v1028, 1
    %v1031 = vsel %vm1029, %v1003, -1e+09
    %v1032 = vsel %vm1030, %v1005, -1e+09
    %1034 = vrot.lane.b32.xlu0 %v1031, 116
    %v1035 = vpop.permute.xlu0 %1034
    %1037 = vrot.lane.b32.xlu0 %v1031, 104
    %v1038 = vpop.permute.xlu0 %1037
    %1040 = vrot.lane.b32.xlu0 %v1031, 92
    %v1041 = vpop.permute.xlu0 %1040
    %1043 = vrot.lane.b32.xlu0 %v1031, 80
    %v1044 = vpop.permute.xlu0 %1043
    %1046 = vrot.lane.b32.xlu0 %v1031, 68
    %v1047 = vpop.permute.xlu0 %1046
    %1049 = vrot.lane.b32.xlu0 %v1031, 56
    %v1050 = vpop.permute.xlu0 %1049
    %1052 = vrot.lane.b32.xlu0 %v1031, 44
    %v1053 = vpop.permute.xlu0 %1052
    %1055 = vrot.lane.b32.xlu0 %v1031, 32
    %v1056 = vpop.permute.xlu0 %1055
    %1058 = vrot.lane.b32.xlu0 %v1031, 20
    %v1059 = vpop.permute.xlu0 %1058
    %1062 = vrot.lane.b32.xlu0 %v1031, 8
    %v1063 = vpop.permute.xlu0 %1062
    %1064 = vrot.lane.b32.xlu0 %v1032, 8
    %v1065 = vpop.permute.xlu0 %1064
    %v1066 = vsel %vm429, %v1063, %v1065
    %1068 = vrot.lane.b32.xlu0 %v1032, 124
    %v1069 = vpop.permute.xlu0 %1068
    %v1071 = vcombine.low %v1031, %v1038
    %v1073 = vunpack.c.l.s4 1983009808
    %v1074 = vunpack.c.0.s8 %v1073
    %v1075 = vlaneseq
    %v1076 = vshrl.u32 %v1075, 7
    %v1077 = vsub.s32 %v1074, %v1076
    %v1078 = vrot.slane %v1071, %v1077
    %v1079 = vcombine.low %v1035, %v1041
    %v1081 = vunpack.c.l.s4 1983009808
    %v1082 = vunpack.c.0.s8 %v1081
    %v1083 = vlaneseq
    %v1084 = vshrl.u32 %v1083, 7
    %v1085 = vsub.s32 %v1082, %v1084
    %v1086 = vrot.slane %v1079, %v1085
    %v1087 = vcombine.low %v1044, %v1050
    %v1089 = vunpack.c.l.s4 1983009808
    %v1090 = vunpack.c.0.s8 %v1089
    %v1091 = vlaneseq
    %v1092 = vshrl.u32 %v1091, 7
    %v1093 = vsub.s32 %v1090, %v1092
    %v1094 = vrot.slane %v1087, %v1093
    %v1095 = vcombine.low %v1047, %v1053
    %v1097 = vunpack.c.l.s4 1983009808
    %v1098 = vunpack.c.0.s8 %v1097
    %v1099 = vlaneseq
    %v1100 = vshrl.u32 %v1099, 7
    %v1101 = vsub.s32 %v1098, %v1100
    %v1102 = vrot.slane %v1095, %v1101
    %v1103 = vcombine.low %v1078, %v1086
    %v1105 = vunpack.c.l.s4 1934713408
    %v1106 = vunpack.c.0.s8 %v1105
    %v1107 = vlaneseq
    %v1108 = vshrl.u32 %v1107, 7
    %v1109 = vsub.s32 %v1106, %v1108
    %v1110 = vrot.slane %v1103, %v1109
    %v1111 = vcombine.low %v1094, %v1102
    %v1113 = vunpack.c.l.s4 1934713408
    %v1114 = vunpack.c.0.s8 %v1113
    %v1115 = vlaneseq
    %v1116 = vshrl.u32 %v1115, 7
    %v1117 = vsub.s32 %v1114, %v1116
    %v1118 = vrot.slane %v1111, %v1117
    %v1119 = vcombine.low %v1110, %v1118
    %v1120 = vcombine.high %v1110, %v1118
    %v1121 = vcombine.low %v1056, %v1066
    %v1123 = vunpack.c.l.s4 1983009808
    %v1124 = vunpack.c.0.s8 %v1123
    %v1125 = vlaneseq
    %v1126 = vshrl.u32 %v1125, 7
    %v1127 = vsub.s32 %v1124, %v1126
    %v1128 = vrot.slane %v1121, %v1127
    %v1129 = vcombine.low %v1059, %v1069
    %v1131 = vunpack.c.l.s4 1983009808
    %v1132 = vunpack.c.0.s8 %v1131
    %v1133 = vlaneseq
    %v1134 = vshrl.u32 %v1133, 7
    %v1135 = vsub.s32 %v1132, %v1134
    %v1136 = vrot.slane %v1129, %v1135
    %v1137 = vcombine.low %v1128, %v1136
    %v1139 = vunpack.c.l.s4 1934713408
    %v1140 = vunpack.c.0.s8 %v1139
    %v1141 = vlaneseq
    %v1142 = vshrl.u32 %v1141, 7
    %v1143 = vsub.s32 %v1140, %v1142
    %v1144 = vrot.slane %v1137, %v1143
    %v1145 = vcombine.high %v1144, 0.0
    %v1146 = vsel %vm904, %v1119, -inf
    %1147 = vmax.xlane.f32.xlu0 %v1146
    %v1148 = vpop.xlane.xlu0 %1147
    %vm1149 = vcmask 93184
    %v1150 = vsel %vm1149, %v1144, -inf
    %1151 = vmax.xlane.f32.xlu0 %v1150
    %v1152 = vpop.xlane.xlu0 %1151
    %v1153 = vsel %vm904, %v1120, -inf
    %1154 = vmax.xlane.f32.xlu0 %v1153
    %v1155 = vpop.xlane.xlu0 %1154
    %v1156 = vsel %vm1149, %v1145, -inf
    %1157 = vmax.xlane.f32.xlu0 %v1156
    %v1158 = vpop.xlane.xlu0 %1157
    %v1159 = vsub.f32 %v1119, %v1148
    %v1160 = vsub.f32 %v1144, %v1152
    %v1161 = vsub.f32 %v1120, %v1155
    %v1162 = vsub.f32 %v1145, %v1158
    %v1163 = vmul.f32 %v1159, 1.442695
    %v1164 = vpow.pop %v1163
    %v1165 = vmul.f32 %v1160, 1.442695
    %v1166 = vpow.pop %v1165
    %v1167 = vmul.f32 %v1161, 1.442695
    %v1168 = vpow.pop %v1167
    %v1169 = vmul.f32 %v1162, 1.442695
    %v1170 = vpow.pop %v1169
    %v1171 = vsel %vm904, %v1164, 0.0
    %1172 = vadd.xlane.f32.xlu0 %v1171
    %v1173 = vpop.xlane.xlu0 %1172
    %v1174 = vsel %vm1149, %v1166, 0.0
    %1175 = vadd.xlane.f32.xlu0 %v1174
    %v1176 = vpop.xlane.xlu0 %1175
    %v1177 = vsel %vm904, %v1168, 0.0
    %1178 = vadd.xlane.f32.xlu0 %v1177
    %v1179 = vpop.xlane.xlu0 %1178
    %v1180 = vsel %vm1149, %v1170, 0.0
    %1181 = vadd.xlane.f32.xlu0 %v1180
    %v1182 = vpop.xlane.xlu0 %1181
    %v1183 = vrcp.pop %v1173
    %v1184 = vrcp.pop %v1176
    %v1185 = vrcp.pop %v1179
    %v1186 = vrcp.pop %v1182
    %v1187 = vmul.f32 %v1164, %v1183
    %v1188 = vmul.f32 %v1166, %v1184
    %v1189 = vmul.f32 %v1168, %v1185
    %v1190 = vmul.f32 %v1170, %v1186
    %v1191 = vpack.c.bf16 %v1188, %v1187
    %v1192 = vpack.c.bf16 %v1190, %v1189
    %v1193 = vpack.c.bf16 %v175, %v175
    %v1195 = vsel %vm904, %v1193, 0
    %v1198 = vsel %vm904, %v1191, 0
    %1200 = vmatprep.subr.bf16.mxu0 0
    %1201 = vmatpush1.bf16.xpose.msra.mxu0 %v1198
    %1202 = vmatprep.subr.bf16.mxu0 0
    %1203 = vmatpush1.bf16.xpose.msra.mxu0 0
    %1204 = vmatprep.subr.bf16.mxu0 0
    %1205 = vmatpush1.bf16.xpose.msra.mxu0 0
    %1206 = vmatprep.subr.bf16.mxu0 0
    %1207 = vmatpush1.bf16.xpose.msra.mxu0 0
    %1208 = vmatprep.subr.bf16.mxu0 0
    %1209 = vmatpush1.bf16.xpose.msra.mxu0 0
    %1210 = vmatprep.subr.bf16.mxu0 0
    %1211 = vmatpush1.bf16.xpose.msra.mxu0 0
    %1212 = vmatprep.subr.bf16.mxu0 0
    %1213 = vmatpush1.bf16.xpose.msra.mxu0 0
    %1214 = vmatprep.subr.bf16.mxu0 0
    %1215 = vmatpush1.bf16.xpose.msra.mxu0 0
    %1216 = vmatprep.subr.bf16.mxu0 0
    %1217 = vmatpush1.bf16.xpose.msra.mxu0 0
    %1218 = vmatprep.subr.bf16.mxu0 0
    %1219 = vmatpush1.bf16.xpose.msra.mxu0 0
    %1220 = vmatprep.subr.bf16.mxu0 0
    %1221 = vmatpush1.bf16.xpose.msra.mxu0 0
    %1222 = vmatprep.subr.bf16.mxu0 0
    %1223 = vmatpush1.bf16.xpose.msra.mxu0 0
    %1224 = vmatprep.subr.bf16.mxu0 0
    %1225 = vmatpush1.bf16.xpose.msra.mxu0 0
    %1226 = vmatprep.subr.bf16.mxu0 0
    %1227 = vmatpush1.bf16.xpose.msra.mxu0 0
    %1228 = vmatprep.subr.bf16.mxu0 0
    %1229 = vmatpush1.bf16.xpose.msra.mxu0 0
    %1230 = vmatprep.subr.bf16.mxu0 0
    %1231 = vmatpush1.bf16.xpose.msra.mxu0 0
    %1232 = vmatprep.mubr.bf16.mxu0 0
    %1233 = vmatmul.mubr.bf16.gmra.mrb[0].mxu0 %v1195
    %v1234 = vpop.f32.mrb[0].mxu0
    %v1235 = vadd.f32 0.0, %v1234
    %v1236 = vpop.f32.mrb[0].mxu0
    %v1237 = vpop.f32.mrb[0].mxu0
    %v1238 = vpop.f32.mrb[0].mxu0
    %1239 = vdwg.mxu0
    %v1240 = vshrl.u32 %v1193, 16
    %v1242 = vrot.slane %v1240, 1
    %v1243 = vshll.u32 %v1193, 16
    %v1245 = vrot.slane %v1243, 2
    %v1246 = vor.u32 %v1242, %v1245
    %v1248 = vsel %vm904, %v1246, 0
    %v1251 = vsel %vm904, %v1192, 0
    %1253 = vmatprep.subr.bf16.mxu0 0
    %1254 = vmatpush1.bf16.xpose.msra.mxu0 %v1251
    %1255 = vmatprep.subr.bf16.mxu0 0
    %1256 = vmatpush1.bf16.xpose.msra.mxu0 0
    %1257 = vmatprep.subr.bf16.mxu0 0
    %1258 = vmatpush1.bf16.xpose.msra.mxu0 0
    %1259 = vmatprep.subr.bf16.mxu0 0
    %1260 = vmatpush1.bf16.xpose.msra.mxu0 0
    %1261 = vmatprep.subr.bf16.mxu0 0
    %1262 = vmatpush1.bf16.xpose.msra.mxu0 0
    %1263 = vmatprep.subr.bf16.mxu0 0
    %1264 = vmatpush1.bf16.xpose.msra.mxu0 0
    %1265 = vmatprep.subr.bf16.mxu0 0
    %1266 = vmatpush1.bf16.xpose.msra.mxu0 0
    %1267 = vmatprep.subr.bf16.mxu0 0
    %1268 = vmatpush1.bf16.xpose.msra.mxu0 0
    %1269 = vmatprep.subr.bf16.mxu0 0
    %1270 = vmatpush1.bf16.xpose.msra.mxu0 0
    %1271 = vmatprep.subr.bf16.mxu0 0
    %1272 = vmatpush1.bf16.xpose.msra.mxu0 0
    %1273 = vmatprep.subr.bf16.mxu0 0
    %1274 = vmatpush1.bf16.xpose.msra.mxu0 0
    %1275 = vmatprep.subr.bf16.mxu0 0
    %1276 = vmatpush1.bf16.xpose.msra.mxu0 0
    %1277 = vmatprep.subr.bf16.mxu0 0
    %1278 = vmatpush1.bf16.xpose.msra.mxu0 0
    %1279 = vmatprep.subr.bf16.mxu0 0
    %1280 = vmatpush1.bf16.xpose.msra.mxu0 0
    %1281 = vmatprep.subr.bf16.mxu0 0
    %1282 = vmatpush1.bf16.xpose.msra.mxu0 0
    %1283 = vmatprep.subr.bf16.mxu0 0
    %1284 = vmatpush1.bf16.xpose.msra.mxu0 0
    %1285 = vmatprep.mubr.bf16.mxu0 0
    %1286 = vmatmul.mubr.bf16.gmra.mrb[0].mxu0 %v1248
    %v1287 = vpop.f32.mrb[0].mxu0
    %v1288 = vadd.f32 0.0, %v1287
    %v1289 = vpop.f32.mrb[0].mxu0
    %v1290 = vpop.f32.mrb[0].mxu0
    %v1291 = vpop.f32.mrb[0].mxu0
    %1292 = vdwg.mxu0
    %v1294 = vrot.slane %v1288, 5
    %vm1296 = vcmask 1042432
    %v1297 = vsel %vm1296, %v1235, %v1294
    %1299 = vset.pattern.permute.xlu0 0
    %1300 = vperm.xlu0 %1299, %v86
    %v1301 = vpop.permute.xlu0 %1300
    %v1303 = vadd.f32 %v1297, %v1301
    %v1304 = vld [vmem:[#allocation8 + $0xa8] sm:$0x3f]
    %v1305 = vld [vmem:[#allocation8 + $0xb0] sm:$0x3f]
    %v1306 = vld [vmem:[#allocation8 + $0xb8] sm:$0x3f]
    %v1308 = vsel %vm904, %v1303, 0
    %v1311 = vsel %vm104, %v75, 0
    %1313 = vmatprep.subr.mxu0 0.0
    %1314 = vmatpush1.msra.mxu0 %v74
    %1315 = vmatprep.subr.mxu0 0.0
    %1316 = vmatpush1.msra.mxu0 %v1311
    %1317 = vmatprep.subr.mxu0 0.0
    %1318 = vmatpush1.msra.mxu0 0.0
    %1319 = vmatprep.subr.mxu0 0.0
    %1320 = vmatpush1.msra.mxu0 0.0
    %1321 = vmatprep.subr.mxu0 0.0
    %1322 = vmatpush1.msra.mxu0 0.0
    %1323 = vmatprep.subr.mxu0 0.0
    %1324 = vmatpush1.msra.mxu0 0.0
    %1325 = vmatprep.subr.mxu0 0.0
    %1326 = vmatpush1.msra.mxu0 0.0
    %1327 = vmatprep.subr.mxu0 0.0
    %1328 = vmatpush1.msra.mxu0 0.0
    %1329 = vmatprep.subr.mxu0 0.0
    %1330 = vmatpush1.msra.mxu0 0.0
    %1331 = vmatprep.subr.mxu0 0.0
    %1332 = vmatpush1.msra.mxu0 0.0
    %1333 = vmatprep.subr.mxu0 0.0
    %1334 = vmatpush1.msra.mxu0 0.0
    %1335 = vmatprep.subr.mxu0 0.0
    %1336 = vmatpush1.msra.mxu0 0.0
    %1337 = vmatprep.subr.mxu0 0.0
    %1338 = vmatpush1.msra.mxu0 0.0
    %1339 = vmatprep.subr.mxu0 0.0
    %1340 = vmatpush1.msra.mxu0 0.0
    %1341 = vmatprep.subr.mxu0 0.0
    %1342 = vmatpush1.msra.mxu0 0.0
    %1343 = vmatprep.subr.mxu0 0.0
    %1344 = vmatpush1.msra.mxu0 0.0
    %1345 = vmatprep.subr.mxu0 0.0
    %1346 = vmatpush1.msra.mxu0 0.0
    %1347 = vmatprep.subr.mxu0 0.0
    %1348 = vmatpush1.msra.mxu0 0.0
    %1349 = vmatprep.subr.mxu0 0.0
    %1350 = vmatpush1.msra.mxu0 0.0
    %1351 = vmatprep.subr.mxu0 0.0
    %1352 = vmatpush1.msra.mxu0 0.0
    %1353 = vmatprep.subr.mxu0 0.0
    %1354 = vmatpush1.msra.mxu0 0.0
    %1355 = vmatprep.subr.mxu0 0.0
    %1356 = vmatpush1.msra.mxu0 0.0
    %1357 = vmatprep.subr.mxu0 0.0
    %1358 = vmatpush1.msra.mxu0 0.0
    %1359 = vmatprep.subr.mxu0 0.0
    %1360 = vmatpush1.msra.mxu0 0.0
    %1361 = vmatprep.subr.mxu0 0.0
    %1362 = vmatpush1.msra.mxu0 0.0
    %1363 = vmatprep.subr.mxu0 0.0
    %1364 = vmatpush1.msra.mxu0 0.0
    %1365 = vmatprep.subr.mxu0 0.0
    %1366 = vmatpush1.msra.mxu0 0.0
    %1367 = vmatprep.subr.mxu0 0.0
    %1368 = vmatpush1.msra.mxu0 0.0
    %1369 = vmatprep.subr.mxu0 0.0
    %1370 = vmatpush1.msra.mxu0 0.0
    %1371 = vmatprep.subr.mxu0 0.0
    %1372 = vmatpush1.msra.mxu0 0.0
    %1373 = vmatprep.subr.mxu0 0.0
    %1374 = vmatpush1.msra.mxu0 0.0
    %1375 = vmatprep.subr.mxu0 0.0
    %1376 = vmatpush1.msra.mxu0 0.0
    %1377 = vmatprep.mubr.f32.mxu0 0.0
    %1378 = vmatmul.mubr.f32.gmra.mrb[0].mxu0 %v1308
    %v1379 = vpop.f32.mrb[0].mxu0
    %v1380 = vadd.f32 0.0, %v1379
    %v1381 = vpop.f32.mrb[0].mxu0
    %1382 = vdwg.mxu0
    %vm1383 = vcmask 15360
    %v1385 = vsel %vm1383, %v1380, 0
    %v1388 = vsel %vm192, %v76, 0
    %1390 = vmatprep.subr.mxu0 0.0
    %1391 = vmatpush1.msra.mxu0 %v1388
    %1392 = vmatprep.subr.mxu0 0.0
    %1393 = vmatpush1.msra.mxu0 0.0
    %1394 = vmatprep.subr.mxu0 0.0
    %1395 = vmatpush1.msra.mxu0 0.0
    %1396 = vmatprep.subr.mxu0 0.0
    %1397 = vmatpush1.msra.mxu0 0.0
    %1398 = vmatprep.subr.mxu0 0.0
    %1399 = vmatpush1.msra.mxu0 0.0
    %1400 = vmatprep.subr.mxu0 0.0
    %1401 = vmatpush1.msra.mxu0 0.0
    %1402 = vmatprep.subr.mxu0 0.0
    %1403 = vmatpush1.msra.mxu0 0.0
    %1404 = vmatprep.subr.mxu0 0.0
    %1405 = vmatpush1.msra.mxu0 0.0
    %1406 = vmatprep.subr.mxu0 0.0
    %1407 = vmatpush1.msra.mxu0 0.0
    %1408 = vmatprep.subr.mxu0 0.0
    %1409 = vmatpush1.msra.mxu0 0.0
    %1410 = vmatprep.subr.mxu0 0.0
    %1411 = vmatpush1.msra.mxu0 0.0
    %1412 = vmatprep.subr.mxu0 0.0
    %1413 = vmatpush1.msra.mxu0 0.0
    %1414 = vmatprep.subr.mxu0 0.0
    %1415 = vmatpush1.msra.mxu0 0.0
    %1416 = vmatprep.subr.mxu0 0.0
    %1417 = vmatpush1.msra.mxu0 0.0
    %1418 = vmatprep.subr.mxu0 0.0
    %1419 = vmatpush1.msra.mxu0 0.0
    %1420 = vmatprep.subr.mxu0 0.0
    %1421 = vmatpush1.msra.mxu0 0.0
    %1422 = vmatprep.subr.mxu0 0.0
    %1423 = vmatpush1.msra.mxu0 0.0
    %1424 = vmatprep.subr.mxu0 0.0
    %1425 = vmatpush1.msra.mxu0 0.0
    %1426 = vmatprep.subr.mxu0 0.0
    %1427 = vmatpush1.msra.mxu0 0.0
    %1428 = vmatprep.subr.mxu0 0.0
    %1429 = vmatpush1.msra.mxu0 0.0
    %1430 = vmatprep.subr.mxu0 0.0
    %1431 = vmatpush1.msra.mxu0 0.0
    %1432 = vmatprep.subr.mxu0 0.0
    %1433 = vmatpush1.msra.mxu0 0.0
    %1434 = vmatprep.subr.mxu0 0.0
    %1435 = vmatpush1.msra.mxu0 0.0
    %1436 = vmatprep.subr.mxu0 0.0
    %1437 = vmatpush1.msra.mxu0 0.0
    %1438 = vmatprep.subr.mxu0 0.0
    %1439 = vmatpush1.msra.mxu0 0.0
    %1440 = vmatprep.subr.mxu0 0.0
    %1441 = vmatpush1.msra.mxu0 0.0
    %1442 = vmatprep.subr.mxu0 0.0
    %1443 = vmatpush1.msra.mxu0 0.0
    %1444 = vmatprep.subr.mxu0 0.0
    %1445 = vmatpush1.msra.mxu0 0.0
    %1446 = vmatprep.subr.mxu0 0.0
    %1447 = vmatpush1.msra.mxu0 0.0
    %1448 = vmatprep.subr.mxu0 0.0
    %1449 = vmatpush1.msra.mxu0 0.0
    %1450 = vmatprep.subr.mxu0 0.0
    %1451 = vmatpush1.msra.mxu0 0.0
    %1452 = vmatprep.subr.mxu0 0.0
    %1453 = vmatpush1.msra.mxu0 0.0
    %1454 = vmatprep.mubr.f32.mxu0 0.0
    %1455 = vmatmul.mubr.f32.gmra.mrb[0].mxu0 %v1385
    %v1456 = vpop.f32.mrb[0].mxu0
    %v1457 = vadd.f32 0.0, %v1456
    %v1458 = vpop.f32.mrb[0].mxu0
    %1459 = vdwg.mxu0
    %1461 = vset.pattern.permute.xlu0 0
    %1462 = vperm.xlu0 %1461, %v1306
    %v1463 = vpop.permute.xlu0 %1462
    %v1465 = vmul.f32 %v1457, %v1463
    %v1466 = vsub.f32 %v1303, %v1465
    %v1467 = vmul.f32 %v1466, %v1466
    %v1469 = vsel %vm904, %v1467, 0
    %1471 = vmatprep.subr.mxu0 0.0
    %1472 = vmatpush1.msra.mxu0 %v74
    %1473 = vmatprep.subr.mxu0 0.0
    %1474 = vmatpush1.msra.mxu0 %v1311
    %1475 = vmatprep.subr.mxu0 0.0
    %1476 = vmatpush1.msra.mxu0 0.0
    %1477 = vmatprep.subr.mxu0 0.0
    %1478 = vmatpush1.msra.mxu0 0.0
    %1479 = vmatprep.subr.mxu0 0.0
    %1480 = vmatpush1.msra.mxu0 0.0
    %1481 = vmatprep.subr.mxu0 0.0
    %1482 = vmatpush1.msra.mxu0 0.0
    %1483 = vmatprep.subr.mxu0 0.0
    %1484 = vmatpush1.msra.mxu0 0.0
    %1485 = vmatprep.subr.mxu0 0.0
    %1486 = vmatpush1.msra.mxu0 0.0
    %1487 = vmatprep.subr.mxu0 0.0
    %1488 = vmatpush1.msra.mxu0 0.0
    %1489 = vmatprep.subr.mxu0 0.0
    %1490 = vmatpush1.msra.mxu0 0.0
    %1491 = vmatprep.subr.mxu0 0.0
    %1492 = vmatpush1.msra.mxu0 0.0
    %1493 = vmatprep.subr.mxu0 0.0
    %1494 = vmatpush1.msra.mxu0 0.0
    %1495 = vmatprep.subr.mxu0 0.0
    %1496 = vmatpush1.msra.mxu0 0.0
    %1497 = vmatprep.subr.mxu0 0.0
    %1498 = vmatpush1.msra.mxu0 0.0
    %1499 = vmatprep.subr.mxu0 0.0
    %1500 = vmatpush1.msra.mxu0 0.0
    %1501 = vmatprep.subr.mxu0 0.0
    %1502 = vmatpush1.msra.mxu0 0.0
    %1503 = vmatprep.subr.mxu0 0.0
    %1504 = vmatpush1.msra.mxu0 0.0
    %1505 = vmatprep.subr.mxu0 0.0
    %1506 = vmatpush1.msra.mxu0 0.0
    %1507 = vmatprep.subr.mxu0 0.0
    %1508 = vmatpush1.msra.mxu0 0.0
    %1509 = vmatprep.subr.mxu0 0.0
    %1510 = vmatpush1.msra.mxu0 0.0
    %1511 = vmatprep.subr.mxu0 0.0
    %1512 = vmatpush1.msra.mxu0 0.0
    %1513 = vmatprep.subr.mxu0 0.0
    %1514 = vmatpush1.msra.mxu0 0.0
    %1515 = vmatprep.subr.mxu0 0.0
    %1516 = vmatpush1.msra.mxu0 0.0
    %1517 = vmatprep.subr.mxu0 0.0
    %1518 = vmatpush1.msra.mxu0 0.0
    %1519 = vmatprep.subr.mxu0 0.0
    %1520 = vmatpush1.msra.mxu0 0.0
    %1521 = vmatprep.subr.mxu0 0.0
    %1522 = vmatpush1.msra.mxu0 0.0
    %1523 = vmatprep.subr.mxu0 0.0
    %1524 = vmatpush1.msra.mxu0 0.0
    %1525 = vmatprep.subr.mxu0 0.0
    %1526 = vmatpush1.msra.mxu0 0.0
    %1527 = vmatprep.subr.mxu0 0.0
    %1528 = vmatpush1.msra.mxu0 0.0
    %1529 = vmatprep.subr.mxu0 0.0
    %1530 = vmatpush1.msra.mxu0 0.0
    %1531 = vmatprep.subr.mxu0 0.0
    %1532 = vmatpush1.msra.mxu0 0.0
    %1533 = vmatprep.subr.mxu0 0.0
    %1534 = vmatpush1.msra.mxu0 0.0
    %1535 = vmatprep.mubr.f32.mxu0 0.0
    %1536 = vmatmul.mubr.f32.gmra.mrb[0].mxu0 %v1469
    %v1537 = vpop.f32.mrb[0].mxu0
    %v1538 = vadd.f32 1e-05, %v1537
    %v1539 = vpop.f32.mrb[0].mxu0
    %1540 = vdwg.mxu0
    %v1541 = vrsqrt.pop %v1538
    %v1543 = vsel %vm1383, %v1541, 0
    %1545 = vmatprep.subr.mxu0 0.0
    %1546 = vmatpush1.msra.mxu0 %v1388
    %1547 = vmatprep.subr.mxu0 0.0
    %1548 = vmatpush1.msra.mxu0 0.0
    %1549 = vmatprep.subr.mxu0 0.0
    %1550 = vmatpush1.msra.mxu0 0.0
    %1551 = vmatprep.subr.mxu0 0.0
    %1552 = vmatpush1.msra.mxu0 0.0
    %1553 = vmatprep.subr.mxu0 0.0
    %1554 = vmatpush1.msra.mxu0 0.0
    %1555 = vmatprep.subr.mxu0 0.0
    %1556 = vmatpush1.msra.mxu0 0.0
    %1557 = vmatprep.subr.mxu0 0.0
    %1558 = vmatpush1.msra.mxu0 0.0
    %1559 = vmatprep.subr.mxu0 0.0
    %1560 = vmatpush1.msra.mxu0 0.0
    %1561 = vmatprep.subr.mxu0 0.0
    %1562 = vmatpush1.msra.mxu0 0.0
    %1563 = vmatprep.subr.mxu0 0.0
    %1564 = vmatpush1.msra.mxu0 0.0
    %1565 = vmatprep.subr.mxu0 0.0
    %1566 = vmatpush1.msra.mxu0 0.0
    %1567 = vmatprep.subr.mxu0 0.0
    %1568 = vmatpush1.msra.mxu0 0.0
    %1569 = vmatprep.subr.mxu0 0.0
    %1570 = vmatpush1.msra.mxu0 0.0
    %1571 = vmatprep.subr.mxu0 0.0
    %1572 = vmatpush1.msra.mxu0 0.0
    %1573 = vmatprep.subr.mxu0 0.0
    %1574 = vmatpush1.msra.mxu0 0.0
    %1575 = vmatprep.subr.mxu0 0.0
    %1576 = vmatpush1.msra.mxu0 0.0
    %1577 = vmatprep.subr.mxu0 0.0
    %1578 = vmatpush1.msra.mxu0 0.0
    %1579 = vmatprep.subr.mxu0 0.0
    %1580 = vmatpush1.msra.mxu0 0.0
    %1581 = vmatprep.subr.mxu0 0.0
    %1582 = vmatpush1.msra.mxu0 0.0
    %1583 = vmatprep.subr.mxu0 0.0
    %1584 = vmatpush1.msra.mxu0 0.0
    %1585 = vmatprep.subr.mxu0 0.0
    %1586 = vmatpush1.msra.mxu0 0.0
    %1587 = vmatprep.subr.mxu0 0.0
    %1588 = vmatpush1.msra.mxu0 0.0
    %1589 = vmatprep.subr.mxu0 0.0
    %1590 = vmatpush1.msra.mxu0 0.0
    %1591 = vmatprep.subr.mxu0 0.0
    %1592 = vmatpush1.msra.mxu0 0.0
    %1593 = vmatprep.subr.mxu0 0.0
    %1594 = vmatpush1.msra.mxu0 0.0
    %1595 = vmatprep.subr.mxu0 0.0
    %1596 = vmatpush1.msra.mxu0 0.0
    %1597 = vmatprep.subr.mxu0 0.0
    %1598 = vmatpush1.msra.mxu0 0.0
    %1599 = vmatprep.subr.mxu0 0.0
    %1600 = vmatpush1.msra.mxu0 0.0
    %1601 = vmatprep.subr.mxu0 0.0
    %1602 = vmatpush1.msra.mxu0 0.0
    %1603 = vmatprep.subr.mxu0 0.0
    %1604 = vmatpush1.msra.mxu0 0.0
    %1605 = vmatprep.subr.mxu0 0.0
    %1606 = vmatpush1.msra.mxu0 0.0
    %1607 = vmatprep.subr.mxu0 0.0
    %1608 = vmatpush1.msra.mxu0 0.0
    %1609 = vmatprep.mubr.f32.mxu0 0.0
    %1610 = vmatmul.mubr.f32.gmra.mrb[0].mxu0 %v1543
    %v1611 = vpop.f32.mrb[0].mxu0
    %v1612 = vadd.f32 0.0, %v1611
    %v1613 = vpop.f32.mrb[0].mxu0
    %1614 = vdwg.mxu0
    %1616 = vset.pattern.permute.xlu0 0
    %1617 = vperm.xlu0 %1616, %v1304
    %v1618 = vpop.permute.xlu0 %1617
    %v1620 = vmul.f32 %v1618, %v1466
    %v1621 = vmul.f32 %v1620, %v1612
    %1623 = vset.pattern.permute.xlu0 0
    %1624 = vperm.xlu0 %1623, %v1305
    %v1625 = vpop.permute.xlu0 %1624
    %v1627 = vadd.f32 %v1621, %v1625
    %v1628 = vmax.f32 %v1627, 0.0
    %v1629 = vld [vmem:[#allocation8 + $0x38] sm:$0xff]
    %v1630 = vld [vmem:[#allocation8 + $0x40] sm:$0xf]
    %v1631 = vld [vmem:[#allocation8 + $0x48] sm:$0xff]
    %v1632 = vld [vmem:[#allocation8 + $0x50] sm:$0xf]
    %v1633 = vld [vmem:[#allocation8 + $0x58] sm:$0x3f]
    %v1634 = vld [vmem:[#allocation8 + $0x60] sm:$0x3]
    %v1635 = vld [vmem:[#allocation8 + $0x68] sm:$0x3f]
    %1637 = vset.pattern.permute.xlu0 0
    %1638 = vperm.xlu0 %1637, %v1631
    %v1639 = vpop.permute.xlu0 %1638
    %1642 = vset.pattern.permute.xlu0 0
    %1643 = vperm.xlu0 %1642, %v1632
    %v1644 = vpop.permute.xlu0 %1643
    %v1647 = vsel %vm925, %v1629, 0
    %v1650 = vsel %vm925, %v1630, 0
    %v1653 = vsel %vm929, %v1628, 0
    %1655 = vmatprep.subr.mxu0 0.0
    %1656 = vmatpush1.msra.mxu0 %v1653
    %1657 = vmatprep.subr.mxu0 0.0
    %1658 = vmatpush1.msra.mxu0 0.0
    %1659 = vmatprep.subr.mxu0 0.0
    %1660 = vmatpush1.msra.mxu0 0.0
    %1661 = vmatprep.subr.mxu0 0.0
    %1662 = vmatpush1.msra.mxu0 0.0
    %1663 = vmatprep.subr.mxu0 0.0
    %1664 = vmatpush1.msra.mxu0 0.0
    %1665 = vmatprep.subr.mxu0 0.0
    %1666 = vmatpush1.msra.mxu0 0.0
    %1667 = vmatprep.subr.mxu0 0.0
    %1668 = vmatpush1.msra.mxu0 0.0
    %1669 = vmatprep.subr.mxu0 0.0
    %1670 = vmatpush1.msra.mxu0 0.0
    %1671 = vmatprep.subr.mxu0 0.0
    %1672 = vmatpush1.msra.mxu0 0.0
    %1673 = vmatprep.subr.mxu0 0.0
    %1674 = vmatpush1.msra.mxu0 0.0
    %1675 = vmatprep.subr.mxu0 0.0
    %1676 = vmatpush1.msra.mxu0 0.0
    %1677 = vmatprep.subr.mxu0 0.0
    %1678 = vmatpush1.msra.mxu0 0.0
    %1679 = vmatprep.subr.mxu0 0.0
    %1680 = vmatpush1.msra.mxu0 0.0
    %1681 = vmatprep.subr.mxu0 0.0
    %1682 = vmatpush1.msra.mxu0 0.0
    %1683 = vmatprep.subr.mxu0 0.0
    %1684 = vmatpush1.msra.mxu0 0.0
    %1685 = vmatprep.subr.mxu0 0.0
    %1686 = vmatpush1.msra.mxu0 0.0
    %1687 = vmatprep.subr.mxu0 0.0
    %1688 = vmatpush1.msra.mxu0 0.0
    %1689 = vmatprep.subr.mxu0 0.0
    %1690 = vmatpush1.msra.mxu0 0.0
    %1691 = vmatprep.subr.mxu0 0.0
    %1692 = vmatpush1.msra.mxu0 0.0
    %1693 = vmatprep.subr.mxu0 0.0
    %1694 = vmatpush1.msra.mxu0 0.0
    %1695 = vmatprep.subr.mxu0 0.0
    %1696 = vmatpush1.msra.mxu0 0.0
    %1697 = vmatprep.subr.mxu0 0.0
    %1698 = vmatpush1.msra.mxu0 0.0
    %1699 = vmatprep.subr.mxu0 0.0
    %1700 = vmatpush1.msra.mxu0 0.0
    %1701 = vmatprep.subr.mxu0 0.0
    %1702 = vmatpush1.msra.mxu0 0.0
    %1703 = vmatprep.subr.mxu0 0.0
    %1704 = vmatpush1.msra.mxu0 0.0
    %1705 = vmatprep.subr.mxu0 0.0
    %1706 = vmatpush1.msra.mxu0 0.0
    %1707 = vmatprep.subr.mxu0 0.0
    %1708 = vmatpush1.msra.mxu0 0.0
    %1709 = vmatprep.subr.mxu0 0.0
    %1710 = vmatpush1.msra.mxu0 0.0
    %1711 = vmatprep.subr.mxu0 0.0
    %1712 = vmatpush1.msra.mxu0 0.0
    %1713 = vmatprep.subr.mxu0 0.0
    %1714 = vmatpush1.msra.mxu0 0.0
    %1715 = vmatprep.subr.mxu0 0.0
    %1716 = vmatpush1.msra.mxu0 0.0
    %1717 = vmatprep.subr.mxu0 0.0
    %1718 = vmatpush1.msra.mxu0 0.0
    %1719 = vmatprep.mubr.f32.mxu0 0.0
    %1720 = vmatmul.mubr.f32.gmra.mrb[0].mxu0 %v1647
    %v1721 = vpop.f32.mrb[0].mxu0
    %v1722 = vadd.f32 %v1639, %v1721
    %v1723 = vpop.f32.mrb[0].mxu0
    %1724 = vmatprep.mubr.f32.mxu0 0.0
    %1725 = vmatmul.mubr.f32.gmra.mrb[0].mxu0 %v1650
    %v1726 = vpop.f32.mrb[0].mxu0
    %v1727 = vadd.f32 %v1644, %v1726
    %v1728 = vpop.f32.mrb[0].mxu0
    %1729 = vdwg.mxu0
    %v1730 = vpack.c.bf16 %v1633, %v1633
    %v1732 = vsel %vm97, %v1730, 0
    %1734 = vmatprep.subr.bf16.mxu0 %v197
    %1735 = vmatpush1.bf16.msra.mxu0 %v194
    %1736 = vmatprep.subr.bf16.mxu0 0
    %1737 = vmatpush1.bf16.msra.mxu0 0
    %1738 = vmatprep.subr.bf16.mxu0 0
    %1739 = vmatpush1.bf16.msra.mxu0 0
    %1740 = vmatprep.subr.bf16.mxu0 0
    %1741 = vmatpush1.bf16.msra.mxu0 0
    %1742 = vmatprep.subr.bf16.mxu0 0
    %1743 = vmatpush1.bf16.msra.mxu0 0
    %1744 = vmatprep.subr.bf16.mxu0 0
    %1745 = vmatpush1.bf16.msra.mxu0 0
    %1746 = vmatprep.subr.bf16.mxu0 0
    %1747 = vmatpush1.bf16.msra.mxu0 0
    %1748 = vmatprep.subr.bf16.mxu0 0
    %1749 = vmatpush1.bf16.msra.mxu0 0
    %1750 = vmatprep.subr.bf16.mxu0 0
    %1751 = vmatpush1.bf16.msra.mxu0 0
    %1752 = vmatprep.subr.bf16.mxu0 0
    %1753 = vmatpush1.bf16.msra.mxu0 0
    %1754 = vmatprep.subr.bf16.mxu0 0
    %1755 = vmatpush1.bf16.msra.mxu0 0
    %1756 = vmatprep.subr.bf16.mxu0 0
    %1757 = vmatpush1.bf16.msra.mxu0 0
    %1758 = vmatprep.subr.bf16.mxu0 0
    %1759 = vmatpush1.bf16.msra.mxu0 0
    %1760 = vmatprep.subr.bf16.mxu0 0
    %1761 = vmatpush1.bf16.msra.mxu0 0
    %1762 = vmatprep.subr.bf16.mxu0 0
    %1763 = vmatpush1.bf16.msra.mxu0 0
    %1764 = vmatprep.subr.bf16.mxu0 0
    %1765 = vmatpush1.bf16.msra.mxu0 0
    %1766 = vmatprep.mubr.bf16.mxu0 0
    %1767 = vmatmul.mubr.bf16.gmra.mrb[0].mxu0 %v1732
    %v1768 = vpop.f32.mrb[0].mxu0
    %v1769 = vadd.f32 0.0, %v1768
    %v1770 = vpop.f32.mrb[0].mxu0
    %v1771 = vadd.f32 0.0, %v1770
    %v1772 = vpop.f32.mrb[0].mxu0
    %v1773 = vpop.f32.mrb[0].mxu0
    %1774 = vdwg.mxu0
    %v1775 = vlaneseq
    %v1776 = vshrl.u32 %v1775, 7
    %v1777 = vsub.s32 6, %v1776
    %v1778 = vrot.slane %v1722, %v1777
    %1780 = vbcast.lane.b32.xlu0 %v1778, 256
    %v1781 = vpop.permute.xlu0 %1780
    %s1783 = sor.u32 256, 8
    %1784 = vbcast.lane.b32.xlu0 %v1778, %s1783
    %v1785 = vpop.permute.xlu0 %1784
    %v1786 = vlaneseq
    %v1787 = vshrl.u32 %v1786, 7
    %v1788 = vsub.s32 7, %v1787
    %v1789 = vrot.slane %v1722, %v1788
    %1791 = vbcast.lane.b32.xlu0 %v1789, 256
    %v1792 = vpop.permute.xlu0 %1791
    %s1794 = sor.u32 256, 8
    %1795 = vbcast.lane.b32.xlu0 %v1789, %s1794
    %v1796 = vpop.permute.xlu0 %1795
    %v1797 = vlaneseq
    %v1798 = vshrl.u32 %v1797, 7
    %v1799 = vsub.s32 0, %v1798
    %v1800 = vrot.slane %v1727, %v1799
    %1802 = vbcast.lane.b32.xlu0 %v1800, 256
    %v1803 = vpop.permute.xlu0 %1802
    %s1805 = sor.u32 256, 8
    %1806 = vbcast.lane.b32.xlu0 %v1800, %s1805
    %v1807 = vpop.permute.xlu0 %1806
    %v1808 = vlaneseq
    %v1809 = vshrl.u32 %v1808, 7
    %v1810 = vsub.s32 1, %v1809
    %v1811 = vrot.slane %v1727, %v1810
    %1813 = vbcast.lane.b32.xlu0 %v1811, 256
    %v1814 = vpop.permute.xlu0 %1813
    %s1816 = sor.u32 256, 8
    %1817 = vbcast.lane.b32.xlu0 %v1811, %s1816
    %v1818 = vpop.permute.xlu0 %1817
    %v1819 = vlaneseq
    %v1820 = vshrl.u32 %v1819, 7
    %v1821 = vsub.s32 2, %v1820
    %v1822 = vrot.slane %v1727, %v1821
    %1824 = vbcast.lane.b32.xlu0 %v1822, 256
    %v1825 = vpop.permute.xlu0 %1824
    %s1827 = sor.u32 256, 8
    %1828 = vbcast.lane.b32.xlu0 %v1822, %s1827
    %v1829 = vpop.permute.xlu0 %1828
    %v1830 = vlaneseq
    %v1831 = vshrl.u32 %v1830, 7
    %v1832 = vsub.s32 3, %v1831
    %v1833 = vrot.slane %v1727, %v1832
    %1835 = vbcast.lane.b32.xlu0 %v1833, 256
    %v1836 = vpop.permute.xlu0 %1835
    %s1838 = sor.u32 256, 8
    %1839 = vbcast.lane.b32.xlu0 %v1833, %s1838
    %v1840 = vpop.permute.xlu0 %1839
    %v1842 = vcombine.high %v1722, %v1722
    %v1844 = vunpack.c.l.s4 1966171168
    %v1845 = vunpack.c.0.s8 %v1844
    %v1846 = vlaneseq
    %v1847 = vshrl.u32 %v1846, 7
    %v1848 = vsub.s32 %v1845, %v1847
    %v1849 = vrot.slane %v1722, %v1848
    %v1851 = vunpack.c.l.s4 1966171168
    %v1852 = vunpack.c.0.s8 %v1851
    %v1853 = vlaneseq
    %v1854 = vshrl.u32 %v1853, 7
    %v1855 = vsub.s32 %v1852, %v1854
    %v1856 = vrot.slane %v1842, %v1855
    %v1857 = vcombine.high %v1849, %v1849
    %v1858 = vcombine.high %v1856, %v1856
    %v1860 = vunpack.c.l.s4 1966171168
    %v1861 = vunpack.c.0.s8 %v1860
    %v1862 = vlaneseq
    %v1863 = vshrl.u32 %v1862, 7
    %v1864 = vsub.s32 %v1861, %v1863
    %v1865 = vrot.slane %v1849, %v1864
    %v1867 = vunpack.c.l.s4 1966171168
    %v1868 = vunpack.c.0.s8 %v1867
    %v1869 = vlaneseq
    %v1870 = vshrl.u32 %v1869, 7
    %v1871 = vsub.s32 %v1868, %v1870
    %v1872 = vrot.slane %v1856, %v1871
    %v1874 = vunpack.c.l.s4 1966171168
    %v1875 = vunpack.c.0.s8 %v1874
    %v1876 = vlaneseq
    %v1877 = vshrl.u32 %v1876, 7
    %v1878 = vsub.s32 %v1875, %v1877
    %v1879 = vrot.slane %v1857, %v1878
    %v1881 = vunpack.c.l.s4 1966171168
    %v1882 = vunpack.c.0.s8 %v1881
    %v1883 = vlaneseq
    %v1884 = vshrl.u32 %v1883, 7
    %v1885 = vsub.s32 %v1882, %v1884
    %v1886 = vrot.slane %v1858, %v1885
    %v1887 = vcombine.high %v1865, %v1865
    %v1888 = vcombine.high %v1879, %v1879
    %v1889 = vlaneseq
    %v1890 = vshrl.u32 %v1889, 7
    %v1891 = vsub.s32 0, %v1890
    %v1892 = vrot.slane %v1865, %v1891
    %v1893 = vlaneseq
    %v1894 = vshrl.u32 %v1893, 7
    %v1895 = vsub.s32 0, %v1894
    %v1896 = vrot.slane %v1879, %v1895
    %v1897 = vlaneseq
    %v1898 = vshrl.u32 %v1897, 7
    %v1899 = vsub.s32 0, %v1898
    %v1900 = vrot.slane %v1887, %v1899
    %v1901 = vlaneseq
    %v1902 = vshrl.u32 %v1901, 7
    %v1903 = vsub.s32 0, %v1902
    %v1904 = vrot.slane %v1888, %v1903
    %v1905 = vlaneseq
    %v1906 = vshrl.u32 %v1905, 7
    %v1907 = vsub.s32 0, %v1906
    %v1908 = vrot.slane %v1872, %v1907
    %v1909 = vlaneseq
    %v1910 = vshrl.u32 %v1909, 7
    %v1911 = vsub.s32 0, %v1910
    %v1912 = vrot.slane %v1886, %v1911
    %v1919 = vadd.f32 %v1781, %v1892
    %v1920 = vadd.f32 %v1785, %v1892
    %v1921 = vadd.f32 %v1792, %v1896
    %v1922 = vadd.f32 %v1796, %v1896
    %v1923 = vadd.f32 %v1803, %v1900
    %v1924 = vadd.f32 %v1807, %v1900
    %v1925 = vadd.f32 %v1814, %v1904
    %v1926 = vadd.f32 %v1818, %v1904
    %v1927 = vadd.f32 %v1825, %v1908
    %v1928 = vadd.f32 %v1829, %v1908
    %v1929 = vadd.f32 %v1836, %v1912
    %v1930 = vadd.f32 %v1840, %v1912
    %1932 = vrot.lane.b32.xlu0 %v1769, 116
    %v1933 = vpop.permute.xlu0 %1932
    %1935 = vrot.lane.b32.xlu0 %v1769, 104
    %v1936 = vpop.permute.xlu0 %1935
    %1938 = vrot.lane.b32.xlu0 %v1769, 92
    %v1939 = vpop.permute.xlu0 %1938
    %1941 = vrot.lane.b32.xlu0 %v1769, 80
    %v1942 = vpop.permute.xlu0 %1941
    %1944 = vrot.lane.b32.xlu0 %v1769, 68
    %v1945 = vpop.permute.xlu0 %1944
    %1947 = vrot.lane.b32.xlu0 %v1769, 56
    %v1948 = vpop.permute.xlu0 %1947
    %1950 = vrot.lane.b32.xlu0 %v1769, 44
    %v1951 = vpop.permute.xlu0 %1950
    %1953 = vrot.lane.b32.xlu0 %v1769, 32
    %v1954 = vpop.permute.xlu0 %1953
    %1956 = vrot.lane.b32.xlu0 %v1769, 20
    %v1957 = vpop.permute.xlu0 %1956
    %1960 = vrot.lane.b32.xlu0 %v1769, 8
    %v1961 = vpop.permute.xlu0 %1960
    %1962 = vrot.lane.b32.xlu0 %v1771, 8
    %v1963 = vpop.permute.xlu0 %1962
    %v1964 = vsel %vm429, %v1961, %v1963
    %1966 = vrot.lane.b32.xlu0 %v1771, 124
    %v1967 = vpop.permute.xlu0 %1966
    %v1969 = vcombine.low %v1769, %v1936
    %v1970 = vcombine.high %v1769, %v1936
    %v1972 = vunpack.c.l.s4 1983009808
    %v1973 = vunpack.c.0.s8 %v1972
    %v1974 = vlaneseq
    %v1975 = vshrl.u32 %v1974, 7
    %v1976 = vsub.s32 %v1973, %v1975
    %v1977 = vrot.slane %v1969, %v1976
    %v1979 = vunpack.c.l.s4 1983009808
    %v1980 = vunpack.c.0.s8 %v1979
    %v1981 = vlaneseq
    %v1982 = vshrl.u32 %v1981, 7
    %v1983 = vsub.s32 %v1980, %v1982
    %v1984 = vrot.slane %v1970, %v1983
    %v1985 = vcombine.low %v1933, %v1939
    %v1986 = vcombine.high %v1933, %v1939
    %v1988 = vunpack.c.l.s4 1983009808
    %v1989 = vunpack.c.0.s8 %v1988
    %v1990 = vlaneseq
    %v1991 = vshrl.u32 %v1990, 7
    %v1992 = vsub.s32 %v1989, %v1991
    %v1993 = vrot.slane %v1985, %v1992
    %v1995 = vunpack.c.l.s4 1983009808
    %v1996 = vunpack.c.0.s8 %v1995
    %v1997 = vlaneseq
    %v1998 = vshrl.u32 %v1997, 7
    %v1999 = vsub.s32 %v1996, %v1998
    %v2000 = vrot.slane %v1986, %v1999
    %v2001 = vcombine.low %v1942, %v1948
    %v2002 = vcombine.high %v1942, %v1948
    %v2004 = vunpack.c.l.s4 1983009808
    %v2005 = vunpack.c.0.s8 %v2004
    %v2006 = vlaneseq
    %v2007 = vshrl.u32 %v2006, 7
    %v2008 = vsub.s32 %v2005, %v2007
    %v2009 = vrot.slane %v2001, %v2008
    %v2011 = vunpack.c.l.s4 1983009808
    %v2012 = vunpack.c.0.s8 %v2011
    %v2013 = vlaneseq
    %v2014 = vshrl.u32 %v2013, 7
    %v2015 = vsub.s32 %v2012, %v2014
    %v2016 = vrot.slane %v2002, %v2015
    %v2017 = vcombine.low %v1945, %v1951
    %v2018 = vcombine.high %v1945, %v1951
    %v2020 = vunpack.c.l.s4 1983009808
    %v2021 = vunpack.c.0.s8 %v2020
    %v2022 = vlaneseq
    %v2023 = vshrl.u32 %v2022, 7
    %v2024 = vsub.s32 %v2021, %v2023
    %v2025 = vrot.slane %v2017, %v2024
    %v2027 = vunpack.c.l.s4 1983009808
    %v2028 = vunpack.c.0.s8 %v2027
    %v2029 = vlaneseq
    %v2030 = vshrl.u32 %v2029, 7
    %v2031 = vsub.s32 %v2028, %v2030
    %v2032 = vrot.slane %v2018, %v2031
    %v2033 = vcombine.low %v1977, %v1993
    %v2034 = vcombine.high %v1977, %v1993
    %v2036 = vunpack.c.l.s4 1934713408
    %v2037 = vunpack.c.0.s8 %v2036
    %v2038 = vlaneseq
    %v2039 = vshrl.u32 %v2038, 7
    %v2040 = vsub.s32 %v2037, %v2039
    %v2041 = vrot.slane %v2033, %v2040
    %v2043 = vunpack.c.l.s4 1934713408
    %v2044 = vunpack.c.0.s8 %v2043
    %v2045 = vlaneseq
    %v2046 = vshrl.u32 %v2045, 7
    %v2047 = vsub.s32 %v2044, %v2046
    %v2048 = vrot.slane %v2034, %v2047
    %v2049 = vcombine.low %v1984, %v2000
    %v2051 = vunpack.c.l.s4 1934713408
    %v2052 = vunpack.c.0.s8 %v2051
    %v2053 = vlaneseq
    %v2054 = vshrl.u32 %v2053, 7
    %v2055 = vsub.s32 %v2052, %v2054
    %v2056 = vrot.slane %v2049, %v2055
    %v2057 = vcombine.low %v2009, %v2025
    %v2058 = vcombine.high %v2009, %v2025
    %v2060 = vunpack.c.l.s4 1934713408
    %v2061 = vunpack.c.0.s8 %v2060
    %v2062 = vlaneseq
    %v2063 = vshrl.u32 %v2062, 7
    %v2064 = vsub.s32 %v2061, %v2063
    %v2065 = vrot.slane %v2057, %v2064
    %v2067 = vunpack.c.l.s4 1934713408
    %v2068 = vunpack.c.0.s8 %v2067
    %v2069 = vlaneseq
    %v2070 = vshrl.u32 %v2069, 7
    %v2071 = vsub.s32 %v2068, %v2070
    %v2072 = vrot.slane %v2058, %v2071
    %v2073 = vcombine.low %v2016, %v2032
    %v2075 = vunpack.c.l.s4 1934713408
    %v2076 = vunpack.c.0.s8 %v2075
    %v2077 = vlaneseq
    %v2078 = vshrl.u32 %v2077, 7
    %v2079 = vsub.s32 %v2076, %v2078
    %v2080 = vrot.slane %v2073, %v2079
    %v2081 = vcombine.low %v2041, %v2065
    %v2082 = vcombine.high %v2041, %v2065
    %v2083 = vcombine.low %v2048, %v2072
    %v2084 = vcombine.high %v2048, %v2072
    %v2085 = vcombine.low %v2056, %v2080
    %v2086 = vcombine.high %v2056, %v2080
    %v2087 = vcombine.low %v1954, %v1964
    %v2088 = vcombine.high %v1954, %v1964
    %v2090 = vunpack.c.l.s4 1983009808
    %v2091 = vunpack.c.0.s8 %v2090
    %v2092 = vlaneseq
    %v2093 = vshrl.u32 %v2092, 7
    %v2094 = vsub.s32 %v2091, %v2093
    %v2095 = vrot.slane %v2087, %v2094
    %v2097 = vunpack.c.l.s4 1983009808
    %v2098 = vunpack.c.0.s8 %v2097
    %v2099 = vlaneseq
    %v2100 = vshrl.u32 %v2099, 7
    %v2101 = vsub.s32 %v2098, %v2100
    %v2102 = vrot.slane %v2088, %v2101
    %v2103 = vcombine.low %v1957, %v1967
    %v2104 = vcombine.high %v1957, %v1967
    %v2106 = vunpack.c.l.s4 1983009808
    %v2107 = vunpack.c.0.s8 %v2106
    %v2108 = vlaneseq
    %v2109 = vshrl.u32 %v2108, 7
    %v2110 = vsub.s32 %v2107, %v2109
    %v2111 = vrot.slane %v2103, %v2110
    %v2113 = vunpack.c.l.s4 1983009808
    %v2114 = vunpack.c.0.s8 %v2113
    %v2115 = vlaneseq
    %v2116 = vshrl.u32 %v2115, 7
    %v2117 = vsub.s32 %v2114, %v2116
    %v2118 = vrot.slane %v2104, %v2117
    %v2119 = vcombine.low %v2095, %v2111
    %v2120 = vcombine.high %v2095, %v2111
    %v2122 = vunpack.c.l.s4 1934713408
    %v2123 = vunpack.c.0.s8 %v2122
    %v2124 = vlaneseq
    %v2125 = vshrl.u32 %v2124, 7
    %v2126 = vsub.s32 %v2123, %v2125
    %v2127 = vrot.slane %v2119, %v2126
    %v2129 = vunpack.c.l.s4 1934713408
    %v2130 = vunpack.c.0.s8 %v2129
    %v2131 = vlaneseq
    %v2132 = vshrl.u32 %v2131, 7
    %v2133 = vsub.s32 %v2130, %v2132
    %v2134 = vrot.slane %v2120, %v2133
    %v2135 = vcombine.low %v2102, %v2118
    %v2137 = vunpack.c.l.s4 1934713408
    %v2138 = vunpack.c.0.s8 %v2137
    %v2139 = vlaneseq
    %v2140 = vshrl.u32 %v2139, 7
    %v2141 = vsub.s32 %v2138, %v2140
    %v2142 = vrot.slane %v2135, %v2141
    %v2143 = vcombine.high %v2127, 0.0
    %v2144 = vcombine.high %v2134, 0.0
    %v2145 = vcombine.high %v2142, 0.0
    %v2146 = vadd.f32 %v1919, %v2081
    %v2147 = vadd.f32 %v1920, %v2127
    %v2148 = vadd.f32 %v1921, %v2082
    %v2149 = vadd.f32 %v1922, %v2143
    %v2150 = vadd.f32 %v1923, %v2083
    %v2151 = vadd.f32 %v1924, %v2134
    %v2152 = vadd.f32 %v1925, %v2084
    %v2153 = vadd.f32 %v1926, %v2144
    %v2154 = vadd.f32 %v1927, %v2085
    %v2155 = vadd.f32 %v1928, %v2142
    %v2156 = vadd.f32 %v1929, %v2086
    %v2157 = vadd.f32 %v1930, %v2145
    %vm2158 = vcmp.gt.f32.partialorder %v2146, 0.0
    %vm2159 = vcmp.gt.f32.partialorder %v2147, 0.0
    %vm2160 = vcmp.gt.f32.partialorder %v2148, 0.0
    %vm2161 = vcmp.gt.f32.partialorder %v2149, 0.0
    %vm2162 = vcmp.gt.f32.partialorder %v2150, 0.0
    %vm2163 = vcmp.gt.f32.partialorder %v2151, 0.0
    %vm2164 = vcmp.gt.f32.partialorder %v2152, 0.0
    %vm2165 = vcmp.gt.f32.partialorder %v2153, 0.0
    %vm2166 = vcmp.gt.f32.partialorder %v2154, 0.0
    %vm2167 = vcmp.gt.f32.partialorder %v2155, 0.0
    %vm2168 = vcmp.gt.f32.partialorder %v2156, 0.0
    %vm2169 = vcmp.gt.f32.partialorder %v2157, 0.0
    %v2170 = vmul.f32 %v2146, 0.2
    %v2171 = vmul.f32 %v2147, 0.2
    %v2172 = vmul.f32 %v2148, 0.2
    %v2173 = vmul.f32 %v2149, 0.2
    %v2174 = vmul.f32 %v2150, 0.2
    %v2175 = vmul.f32 %v2151, 0.2
    %v2176 = vmul.f32 %v2152, 0.2
    %v2177 = vmul.f32 %v2153, 0.2
    %v2178 = vmul.f32 %v2154, 0.2
    %v2179 = vmul.f32 %v2155, 0.2
    %v2180 = vmul.f32 %v2156, 0.2
    %v2181 = vmul.f32 %v2157, 0.2
    %v2182 = vsel %vm2158, %v2146, %v2170
    %v2183 = vsel %vm2159, %v2147, %v2171
    %v2184 = vsel %vm2160, %v2148, %v2172
    %v2185 = vsel %vm2161, %v2149, %v2173
    %v2186 = vsel %vm2162, %v2150, %v2174
    %v2187 = vsel %vm2163, %v2151, %v2175
    %v2188 = vsel %vm2164, %v2152, %v2176
    %v2189 = vsel %vm2165, %v2153, %v2177
    %v2190 = vsel %vm2166, %v2154, %v2178
    %v2191 = vsel %vm2168, %v2156, %v2180
    %v2192 = vcombine.low %v2182, %v2186
    %v2193 = vcombine.high %v2182, %v2186
    %v2195 = vunpack.c.l.s4 1983009808
    %v2196 = vunpack.c.0.s8 %v2195
    %v2197 = vlaneseq
    %v2198 = vshrl.u32 %v2197, 7
    %v2199 = vsub.s32 %v2196, %v2198
    %v2200 = vrot.slane %v2192, %v2199
    %v2202 = vunpack.c.l.s4 1983009808
    %v2203 = vunpack.c.0.s8 %v2202
    %v2204 = vlaneseq
    %v2205 = vshrl.u32 %v2204, 7
    %v2206 = vsub.s32 %v2203, %v2205
    %v2207 = vrot.slane %v2193, %v2206
    %v2208 = vcombine.low %v2184, %v2188
    %v2209 = vcombine.high %v2184, %v2188
    %v2211 = vunpack.c.l.s4 1983009808
    %v2212 = vunpack.c.0.s8 %v2211
    %v2213 = vlaneseq
    %v2214 = vshrl.u32 %v2213, 7
    %v2215 = vsub.s32 %v2212, %v2214
    %v2216 = vrot.slane %v2208, %v2215
    %v2218 = vunpack.c.l.s4 1983009808
    %v2219 = vunpack.c.0.s8 %v2218
    %v2220 = vlaneseq
    %v2221 = vshrl.u32 %v2220, 7
    %v2222 = vsub.s32 %v2219, %v2221
    %v2223 = vrot.slane %v2209, %v2222
    %v2224 = vcombine.high %v2190, 0.0
    %v2226 = vunpack.c.l.s4 1983009808
    %v2227 = vunpack.c.0.s8 %v2226
    %v2228 = vlaneseq
    %v2229 = vshrl.u32 %v2228, 7
    %v2230 = vsub.s32 %v2227, %v2229
    %v2231 = vrot.slane %v2190, %v2230
    %v2233 = vunpack.c.l.s4 1983009808
    %v2234 = vunpack.c.0.s8 %v2233
    %v2235 = vlaneseq
    %v2236 = vshrl.u32 %v2235, 7
    %v2237 = vsub.s32 %v2234, %v2236
    %v2238 = vrot.slane %v2224, %v2237
    %v2239 = vcombine.high %v2191, 0.0
    %v2241 = vunpack.c.l.s4 1983009808
    %v2242 = vunpack.c.0.s8 %v2241
    %v2243 = vlaneseq
    %v2244 = vshrl.u32 %v2243, 7
    %v2245 = vsub.s32 %v2242, %v2244
    %v2246 = vrot.slane %v2191, %v2245
    %v2248 = vunpack.c.l.s4 1983009808
    %v2249 = vunpack.c.0.s8 %v2248
    %v2250 = vlaneseq
    %v2251 = vshrl.u32 %v2250, 7
    %v2252 = vsub.s32 %v2249, %v2251
    %v2253 = vrot.slane %v2239, %v2252
    %v2254 = vcombine.low %v2200, %v2216
    %v2255 = vcombine.high %v2200, %v2216
    %v2257 = vunpack.c.l.s4 1934713408
    %v2258 = vunpack.c.0.s8 %v2257
    %v2259 = vlaneseq
    %v2260 = vshrl.u32 %v2259, 7
    %v2261 = vsub.s32 %v2258, %v2260
    %v2262 = vrot.slane %v2254, %v2261
    %v2264 = vunpack.c.l.s4 1934713408
    %v2265 = vunpack.c.0.s8 %v2264
    %v2266 = vlaneseq
    %v2267 = vshrl.u32 %v2266, 7
    %v2268 = vsub.s32 %v2265, %v2267
    %v2269 = vrot.slane %v2255, %v2268
    %v2270 = vcombine.low %v2207, %v2223
    %v2271 = vcombine.high %v2207, %v2223
    %v2273 = vunpack.c.l.s4 1934713408
    %v2274 = vunpack.c.0.s8 %v2273
    %v2275 = vlaneseq
    %v2276 = vshrl.u32 %v2275, 7
    %v2277 = vsub.s32 %v2274, %v2276
    %v2278 = vrot.slane %v2270, %v2277
    %v2280 = vunpack.c.l.s4 1934713408
    %v2281 = vunpack.c.0.s8 %v2280
    %v2282 = vlaneseq
    %v2283 = vshrl.u32 %v2282, 7
    %v2284 = vsub.s32 %v2281, %v2283
    %v2285 = vrot.slane %v2271, %v2284
    %v2286 = vcombine.low %v2231, %v2246
    %v2287 = vcombine.high %v2231, %v2246
    %v2289 = vunpack.c.l.s4 1934713408
    %v2290 = vunpack.c.0.s8 %v2289
    %v2291 = vlaneseq
    %v2292 = vshrl.u32 %v2291, 7
    %v2293 = vsub.s32 %v2290, %v2292
    %v2294 = vrot.slane %v2286, %v2293
    %v2296 = vunpack.c.l.s4 1934713408
    %v2297 = vunpack.c.0.s8 %v2296
    %v2298 = vlaneseq
    %v2299 = vshrl.u32 %v2298, 7
    %v2300 = vsub.s32 %v2297, %v2299
    %v2301 = vrot.slane %v2287, %v2300
    %v2302 = vcombine.low %v2238, %v2253
    %v2303 = vcombine.high %v2238, %v2253
    %v2305 = vunpack.c.l.s4 1934713408
    %v2306 = vunpack.c.0.s8 %v2305
    %v2307 = vlaneseq
    %v2308 = vshrl.u32 %v2307, 7
    %v2309 = vsub.s32 %v2306, %v2308
    %v2310 = vrot.slane %v2302, %v2309
    %v2312 = vunpack.c.l.s4 1934713408
    %v2313 = vunpack.c.0.s8 %v2312
    %v2314 = vlaneseq
    %v2315 = vshrl.u32 %v2314, 7
    %v2316 = vsub.s32 %v2313, %v2315
    %v2317 = vrot.slane %v2303, %v2316
    %v2318 = vcombine.low %v2262, %v2294
    %v2319 = vcombine.high %v2262, %v2294
    %v2320 = vcombine.low %v2269, %v2301
    %v2321 = vcombine.high %v2269, %v2301
    %v2322 = vcombine.low %v2278, %v2310
    %v2323 = vcombine.high %v2278, %v2310
    %v2324 = vcombine.low %v2285, %v2317
    %v2325 = vcombine.high %v2285, %v2317
    %v2326 = vcombine.low %v2183, %v2187
    %v2328 = vunpack.c.l.s4 1983009808
    %v2329 = vunpack.c.0.s8 %v2328
    %v2330 = vlaneseq
    %v2331 = vshrl.u32 %v2330, 7
    %v2332 = vsub.s32 %v2329, %v2331
    %v2333 = vrot.slane %v2326, %v2332
    %v2334 = vcombine.low %v2185, %v2189
    %v2336 = vunpack.c.l.s4 1983009808
    %v2337 = vunpack.c.0.s8 %v2336
    %v2338 = vlaneseq
    %v2339 = vshrl.u32 %v2338, 7
    %v2340 = vsub.s32 %v2337, %v2339
    %v2341 = vrot.slane %v2334, %v2340
    %v2342 = vsel %vm2167, %v2155, %v2179
    %v2344 = vunpack.c.l.s4 1983009808
    %v2345 = vunpack.c.0.s8 %v2344
    %v2346 = vlaneseq
    %v2347 = vshrl.u32 %v2346, 7
    %v2348 = vsub.s32 %v2345, %v2347
    %v2349 = vrot.slane %v2342, %v2348
    %v2350 = vsel %vm2169, %v2157, %v2181
    %v2352 = vunpack.c.l.s4 1983009808
    %v2353 = vunpack.c.0.s8 %v2352
    %v2354 = vlaneseq
    %v2355 = vshrl.u32 %v2354, 7
    %v2356 = vsub.s32 %v2353, %v2355
    %v2357 = vrot.slane %v2350, %v2356
    %v2358 = vcombine.low %v2333, %v2341
    %v2359 = vcombine.high %v2333, %v2341
    %v2361 = vunpack.c.l.s4 1934713408
    %v2362 = vunpack.c.0.s8 %v2361
    %v2363 = vlaneseq
    %v2364 = vshrl.u32 %v2363, 7
    %v2365 = vsub.s32 %v2362, %v2364
    %v2366 = vrot.slane %v2358, %v2365
    %v2368 = vunpack.c.l.s4 1934713408
    %v2369 = vunpack.c.0.s8 %v2368
    %v2370 = vlaneseq
    %v2371 = vshrl.u32 %v2370, 7
    %v2372 = vsub.s32 %v2369, %v2371
    %v2373 = vrot.slane %v2359, %v2372
    %v2374 = vcombine.low %v2349, %v2357
    %v2375 = vcombine.high %v2349, %v2357
    %v2377 = vunpack.c.l.s4 1934713408
    %v2378 = vunpack.c.0.s8 %v2377
    %v2379 = vlaneseq
    %v2380 = vshrl.u32 %v2379, 7
    %v2381 = vsub.s32 %v2378, %v2380
    %v2382 = vrot.slane %v2374, %v2381
    %v2384 = vunpack.c.l.s4 1934713408
    %v2385 = vunpack.c.0.s8 %v2384
    %v2386 = vlaneseq
    %v2387 = vshrl.u32 %v2386, 7
    %v2388 = vsub.s32 %v2385, %v2387
    %v2389 = vrot.slane %v2375, %v2388
    %v2390 = vcombine.low %v2366, %v2382
    %v2391 = vcombine.high %v2366, %v2382
    %v2392 = vcombine.low %v2373, %v2389
    %v2393 = vcombine.high %v2373, %v2389
    %2395 = vrot.lane.b32.xlu0 %v2319, 12
    %v2396 = vpop.permute.xlu0 %2395
    %2399 = vrot.lane.b32.xlu0 %v2320, 24
    %v2400 = vpop.permute.xlu0 %2399
    %2403 = vrot.lane.b32.xlu0 %v2321, 36
    %v2404 = vpop.permute.xlu0 %2403
    %2407 = vrot.lane.b32.xlu0 %v2322, 48
    %v2408 = vpop.permute.xlu0 %2407
    %2411 = vrot.lane.b32.xlu0 %v2323, 60
    %v2412 = vpop.permute.xlu0 %2411
    %2415 = vrot.lane.b32.xlu0 %v2324, 72
    %v2416 = vpop.permute.xlu0 %2415
    %2419 = vrot.lane.b32.xlu0 %v2325, 84
    %v2420 = vpop.permute.xlu0 %2419
    %2423 = vrot.lane.b32.xlu0 %v2390, 96
    %v2424 = vpop.permute.xlu0 %2423
    %2427 = vrot.lane.b32.xlu0 %v2391, 108
    %v2428 = vpop.permute.xlu0 %2427
    %2431 = vrot.lane.b32.xlu0 %v2392, 120
    %v2432 = vpop.permute.xlu0 %2431
    %2435 = vrot.lane.b32.xlu0 %v2393, 4
    %v2436 = vpop.permute.xlu0 %2435
    %v2438 = vsel %vm904, %v2318, %v2396
    %v2439 = vsel %vm906, %v2438, %v2400
    %v2440 = vsel %vm908, %v2439, %v2404
    %v2441 = vsel %vm910, %v2440, %v2408
    %v2442 = vsel %vm912, %v2441, %v2412
    %v2443 = vsel %vm914, %v2442, %v2416
    %v2444 = vsel %vm916, %v2443, %v2420
    %v2445 = vsel %vm918, %v2444, %v2424
    %v2446 = vsel %vm920, %v2445, %v2428
    %v2447 = vsel %vm922, %v2446, %v2432
    %v2448 = vsel %vm97, %v2432, %v2436
    %v2450 = vsel %vm925, %v1634, 0
    %v2453 = vsel %vm929, %v2447, 0
    %v2456 = vsel %vm929, %v2448, 0
    %2458 = vmatprep.subr.mxu0 %v2456
    %2459 = vmatpush1.msra.mxu0 %v2453
    %2460 = vmatprep.subr.mxu0 0.0
    %2461 = vmatpush1.msra.mxu0 0.0
    %2462 = vmatprep.subr.mxu0 0.0
    %2463 = vmatpush1.msra.mxu0 0.0
    %2464 = vmatprep.subr.mxu0 0.0
    %2465 = vmatpush1.msra.mxu0 0.0
    %2466 = vmatprep.subr.mxu0 0.0
    %2467 = vmatpush1.msra.mxu0 0.0
    %2468 = vmatprep.subr.mxu0 0.0
    %2469 = vmatpush1.msra.mxu0 0.0
    %2470 = vmatprep.subr.mxu0 0.0
    %2471 = vmatpush1.msra.mxu0 0.0
    %2472 = vmatprep.subr.mxu0 0.0
    %2473 = vmatpush1.msra.mxu0 0.0
    %2474 = vmatprep.subr.mxu0 0.0
    %2475 = vmatpush1.msra.mxu0 0.0
    %2476 = vmatprep.subr.mxu0 0.0
    %2477 = vmatpush1.msra.mxu0 0.0
    %2478 = vmatprep.subr.mxu0 0.0
    %2479 = vmatpush1.msra.mxu0 0.0
    %2480 = vmatprep.subr.mxu0 0.0
    %2481 = vmatpush1.msra.mxu0 0.0
    %2482 = vmatprep.subr.mxu0 0.0
    %2483 = vmatpush1.msra.mxu0 0.0
    %2484 = vmatprep.subr.mxu0 0.0
    %2485 = vmatpush1.msra.mxu0 0.0
    %2486 = vmatprep.subr.mxu0 0.0
    %2487 = vmatpush1.msra.mxu0 0.0
    %2488 = vmatprep.subr.mxu0 0.0
    %2489 = vmatpush1.msra.mxu0 0.0
    %2490 = vmatprep.subr.mxu0 0.0
    %2491 = vmatpush1.msra.mxu0 0.0
    %2492 = vmatprep.subr.mxu0 0.0
    %2493 = vmatpush1.msra.mxu0 0.0
    %2494 = vmatprep.subr.mxu0 0.0
    %2495 = vmatpush1.msra.mxu0 0.0
    %2496 = vmatprep.subr.mxu0 0.0
    %2497 = vmatpush1.msra.mxu0 0.0
    %2498 = vmatprep.subr.mxu0 0.0
    %2499 = vmatpush1.msra.mxu0 0.0
    %2500 = vmatprep.subr.mxu0 0.0
    %2501 = vmatpush1.msra.mxu0 0.0
    %2502 = vmatprep.subr.mxu0 0.0
    %2503 = vmatpush1.msra.mxu0 0.0
    %2504 = vmatprep.subr.mxu0 0.0
    %2505 = vmatpush1.msra.mxu0 0.0
    %2506 = vmatprep.subr.mxu0 0.0
    %2507 = vmatpush1.msra.mxu0 0.0
    %2508 = vmatprep.subr.mxu0 0.0
    %2509 = vmatpush1.msra.mxu0 0.0
    %2510 = vmatprep.subr.mxu0 0.0
    %2511 = vmatpush1.msra.mxu0 0.0
    %2512 = vmatprep.subr.mxu0 0.0
    %2513 = vmatpush1.msra.mxu0 0.0
    %2514 = vmatprep.subr.mxu0 0.0
    %2515 = vmatpush1.msra.mxu0 0.0
    %2516 = vmatprep.subr.mxu0 0.0
    %2517 = vmatpush1.msra.mxu0 0.0
    %2518 = vmatprep.subr.mxu0 0.0
    %2519 = vmatpush1.msra.mxu0 0.0
    %2520 = vmatprep.subr.mxu0 0.0
    %2521 = vmatpush1.msra.mxu0 0.0
    %2522 = vmatprep.mubr.f32.mxu0 0.0
    %2523 = vmatmul.mubr.f32.gmra.mrb[0].mxu0 %v2450
    %v2524 = vpop.f32.mrb[0].mxu0
    %v2525 = vadd.f32 0.0, %v2524
    %v2526 = vpop.f32.mrb[0].mxu0
    %v2527 = vadd.f32 0.0, %v2526
    %2528 = vdwg.mxu0
    %v2529 = vsel %vm1029, %v2525, -1e+09
    %v2530 = vsel %vm1030, %v2527, -1e+09
    %2532 = vrot.lane.b32.xlu0 %v2529, 116
    %v2533 = vpop.permute.xlu0 %2532
    %2535 = vrot.lane.b32.xlu0 %v2529, 104
    %v2536 = vpop.permute.xlu0 %2535
    %2538 = vrot.lane.b32.xlu0 %v2529, 92
    %v2539 = vpop.permute.xlu0 %2538
    %2541 = vrot.lane.b32.xlu0 %v2529, 80
    %v2542 = vpop.permute.xlu0 %2541
    %2544 = vrot.lane.b32.xlu0 %v2529, 68
    %v2545 = vpop.permute.xlu0 %2544
    %2547 = vrot.lane.b32.xlu0 %v2529, 56
    %v2548 = vpop.permute.xlu0 %2547
    %2550 = vrot.lane.b32.xlu0 %v2529, 44
    %v2551 = vpop.permute.xlu0 %2550
    %2553 = vrot.lane.b32.xlu0 %v2529, 32
    %v2554 = vpop.permute.xlu0 %2553
    %2556 = vrot.lane.b32.xlu0 %v2529, 20
    %v2557 = vpop.permute.xlu0 %2556
    %2560 = vrot.lane.b32.xlu0 %v2529, 8
    %v2561 = vpop.permute.xlu0 %2560
    %2562 = vrot.lane.b32.xlu0 %v2530, 8
    %v2563 = vpop.permute.xlu0 %2562
    %v2564 = vsel %vm429, %v2561, %v2563
    %2566 = vrot.lane.b32.xlu0 %v2530, 124
    %v2567 = vpop.permute.xlu0 %2566
    %v2569 = vcombine.low %v2529, %v2536
    %v2571 = vunpack.c.l.s4 1983009808
    %v2572 = vunpack.c.0.s8 %v2571
    %v2573 = vlaneseq
    %v2574 = vshrl.u32 %v2573, 7
    %v2575 = vsub.s32 %v2572, %v2574
    %v2576 = vrot.slane %v2569, %v2575
    %v2577 = vcombine.low %v2533, %v2539
    %v2579 = vunpack.c.l.s4 1983009808
    %v2580 = vunpack.c.0.s8 %v2579
    %v2581 = vlaneseq
    %v2582 = vshrl.u32 %v2581, 7
    %v2583 = vsub.s32 %v2580, %v2582
    %v2584 = vrot.slane %v2577, %v2583
    %v2585 = vcombine.low %v2542, %v2548
    %v2587 = vunpack.c.l.s4 1983009808
    %v2588 = vunpack.c.0.s8 %v2587
    %v2589 = vlaneseq
    %v2590 = vshrl.u32 %v2589, 7
    %v2591 = vsub.s32 %v2588, %v2590
    %v2592 = vrot.slane %v2585, %v2591
    %v2593 = vcombine.low %v2545, %v2551
    %v2595 = vunpack.c.l.s4 1983009808
    %v2596 = vunpack.c.0.s8 %v2595
    %v2597 = vlaneseq
    %v2598 = vshrl.u32 %v2597, 7
    %v2599 = vsub.s32 %v2596, %v2598
    %v2600 = vrot.slane %v2593, %v2599
    %v2601 = vcombine.low %v2576, %v2584
    %v2603 = vunpack.c.l.s4 1934713408
    %v2604 = vunpack.c.0.s8 %v2603
    %v2605 = vlaneseq
    %v2606 = vshrl.u32 %v2605, 7
    %v2607 = vsub.s32 %v2604, %v2606
    %v2608 = vrot.slane %v2601, %v2607
    %v2609 = vcombine.low %v2592, %v2600
    %v2611 = vunpack.c.l.s4 1934713408
    %v2612 = vunpack.c.0.s8 %v2611
    %v2613 = vlaneseq
    %v2614 = vshrl.u32 %v2613, 7
    %v2615 = vsub.s32 %v2612, %v2614
    %v2616 = vrot.slane %v2609, %v2615
    %v2617 = vcombine.low %v2608, %v2616
    %v2618 = vcombine.high %v2608, %v2616
    %v2619 = vcombine.low %v2554, %v2564
    %v2621 = vunpack.c.l.s4 1983009808
    %v2622 = vunpack.c.0.s8 %v2621
    %v2623 = vlaneseq
    %v2624 = vshrl.u32 %v2623, 7
    %v2625 = vsub.s32 %v2622, %v2624
    %v2626 = vrot.slane %v2619, %v2625
    %v2627 = vcombine.low %v2557, %v2567
    %v2629 = vunpack.c.l.s4 1983009808
    %v2630 = vunpack.c.0.s8 %v2629
    %v2631 = vlaneseq
    %v2632 = vshrl.u32 %v2631, 7
    %v2633 = vsub.s32 %v2630, %v2632
    %v2634 = vrot.slane %v2627, %v2633
    %v2635 = vcombine.low %v2626, %v2634
    %v2637 = vunpack.c.l.s4 1934713408
    %v2638 = vunpack.c.0.s8 %v2637
    %v2639 = vlaneseq
    %v2640 = vshrl.u32 %v2639, 7
    %v2641 = vsub.s32 %v2638, %v2640
    %v2642 = vrot.slane %v2635, %v2641
    %v2643 = vcombine.high %v2642, 0.0
    %v2644 = vsel %vm904, %v2617, -inf
    %2645 = vmax.xlane.f32.xlu0 %v2644
    %v2646 = vpop.xlane.xlu0 %2645
    %v2647 = vsel %vm1149, %v2642, -inf
    %2648 = vmax.xlane.f32.xlu0 %v2647
    %v2649 = vpop.xlane.xlu0 %2648
    %v2650 = vsel %vm904, %v2618, -inf
    %2651 = vmax.xlane.f32.xlu0 %v2650
    %v2652 = vpop.xlane.xlu0 %2651
    %v2653 = vsel %vm1149, %v2643, -inf
    %2654 = vmax.xlane.f32.xlu0 %v2653
    %v2655 = vpop.xlane.xlu0 %2654
    %v2656 = vsub.f32 %v2617, %v2646
    %v2657 = vsub.f32 %v2642, %v2649
    %v2658 = vsub.f32 %v2618, %v2652
    %v2659 = vsub.f32 %v2643, %v2655
    %v2660 = vmul.f32 %v2656, 1.442695
    %v2661 = vpow.pop %v2660
    %v2662 = vmul.f32 %v2657, 1.442695
    %v2663 = vpow.pop %v2662
    %v2664 = vmul.f32 %v2658, 1.442695
    %v2665 = vpow.pop %v2664
    %v2666 = vmul.f32 %v2659, 1.442695
    %v2667 = vpow.pop %v2666
    %v2668 = vsel %vm904, %v2661, 0.0
    %2669 = vadd.xlane.f32.xlu0 %v2668
    %v2670 = vpop.xlane.xlu0 %2669
    %v2671 = vsel %vm1149, %v2663, 0.0
    %2672 = vadd.xlane.f32.xlu0 %v2671
    %v2673 = vpop.xlane.xlu0 %2672
    %v2674 = vsel %vm904, %v2665, 0.0
    %2675 = vadd.xlane.f32.xlu0 %v2674
    %v2676 = vpop.xlane.xlu0 %2675
    %v2677 = vsel %vm1149, %v2667, 0.0
    %2678 = vadd.xlane.f32.xlu0 %v2677
    %v2679 = vpop.xlane.xlu0 %2678
    %v2680 = vrcp.pop %v2670
    %v2681 = vrcp.pop %v2673
    %v2682 = vrcp.pop %v2676
    %v2683 = vrcp.pop %v2679
    %v2684 = vmul.f32 %v2661, %v2680
    %v2685 = vmul.f32 %v2663, %v2681
    %v2686 = vmul.f32 %v2665, %v2682
    %v2687 = vmul.f32 %v2667, %v2683
    %v2688 = vpack.c.bf16 %v2685, %v2684
    %v2689 = vpack.c.bf16 %v2687, %v2686
    %v2690 = vpack.c.bf16 %v1722, %v1722
    %v2692 = vsel %vm904, %v2690, 0
    %v2695 = vsel %vm904, %v2688, 0
    %2697 = vmatprep.subr.bf16.mxu0 0
    %2698 = vmatpush1.bf16.xpose.msra.mxu0 %v2695
    %2699 = vmatprep.subr.bf16.mxu0 0
    %2700 = vmatpush1.bf16.xpose.msra.mxu0 0
    %2701 = vmatprep.subr.bf16.mxu0 0
    %2702 = vmatpush1.bf16.xpose.msra.mxu0 0
    %2703 = vmatprep.subr.bf16.mxu0 0
    %2704 = vmatpush1.bf16.xpose.msra.mxu0 0
    %2705 = vmatprep.subr.bf16.mxu0 0
    %2706 = vmatpush1.bf16.xpose.msra.mxu0 0
    %2707 = vmatprep.subr.bf16.mxu0 0
    %2708 = vmatpush1.bf16.xpose.msra.mxu0 0
    %2709 = vmatprep.subr.bf16.mxu0 0
    %2710 = vmatpush1.bf16.xpose.msra.mxu0 0
    %2711 = vmatprep.subr.bf16.mxu0 0
    %2712 = vmatpush1.bf16.xpose.msra.mxu0 0
    %2713 = vmatprep.subr.bf16.mxu0 0
    %2714 = vmatpush1.bf16.xpose.msra.mxu0 0
    %2715 = vmatprep.subr.bf16.mxu0 0
    %2716 = vmatpush1.bf16.xpose.msra.mxu0 0
    %2717 = vmatprep.subr.bf16.mxu0 0
    %2718 = vmatpush1.bf16.xpose.msra.mxu0 0
    %2719 = vmatprep.subr.bf16.mxu0 0
    %2720 = vmatpush1.bf16.xpose.msra.mxu0 0
    %2721 = vmatprep.subr.bf16.mxu0 0
    %2722 = vmatpush1.bf16.xpose.msra.mxu0 0
    %2723 = vmatprep.subr.bf16.mxu0 0
    %2724 = vmatpush1.bf16.xpose.msra.mxu0 0
    %2725 = vmatprep.subr.bf16.mxu0 0
    %2726 = vmatpush1.bf16.xpose.msra.mxu0 0
    %2727 = vmatprep.subr.bf16.mxu0 0
    %2728 = vmatpush1.bf16.xpose.msra.mxu0 0
    %2729 = vmatprep.mubr.bf16.mxu0 0
    %2730 = vmatmul.mubr.bf16.gmra.mrb[0].mxu0 %v2692
    %v2731 = vpop.f32.mrb[0].mxu0
    %v2732 = vadd.f32 0.0, %v2731
    %v2733 = vpop.f32.mrb[0].mxu0
    %v2734 = vpop.f32.mrb[0].mxu0
    %v2735 = vpop.f32.mrb[0].mxu0
    %2736 = vdwg.mxu0
    %v2737 = vshrl.u32 %v2690, 16
    %v2739 = vrot.slane %v2737, 1
    %v2740 = vshll.u32 %v2690, 16
    %v2742 = vrot.slane %v2740, 2
    %v2743 = vor.u32 %v2739, %v2742
    %v2745 = vsel %vm904, %v2743, 0
    %v2748 = vsel %vm904, %v2689, 0
    %2750 = vmatprep.subr.bf16.mxu0 0
    %2751 = vmatpush1.bf16.xpose.msra.mxu0 %v2748
    %2752 = vmatprep.subr.bf16.mxu0 0
    %2753 = vmatpush1.bf16.xpose.msra.mxu0 0
    %2754 = vmatprep.subr.bf16.mxu0 0
    %2755 = vmatpush1.bf16.xpose.msra.mxu0 0
    %2756 = vmatprep.subr.bf16.mxu0 0
    %2757 = vmatpush1.bf16.xpose.msra.mxu0 0
    %2758 = vmatprep.subr.bf16.mxu0 0
    %2759 = vmatpush1.bf16.xpose.msra.mxu0 0
    %2760 = vmatprep.subr.bf16.mxu0 0
    %2761 = vmatpush1.bf16.xpose.msra.mxu0 0
    %2762 = vmatprep.subr.bf16.mxu0 0
    %2763 = vmatpush1.bf16.xpose.msra.mxu0 0
    %2764 = vmatprep.subr.bf16.mxu0 0
    %2765 = vmatpush1.bf16.xpose.msra.mxu0 0
    %2766 = vmatprep.subr.bf16.mxu0 0
    %2767 = vmatpush1.bf16.xpose.msra.mxu0 0
    %2768 = vmatprep.subr.bf16.mxu0 0
    %2769 = vmatpush1.bf16.xpose.msra.mxu0 0
    %2770 = vmatprep.subr.bf16.mxu0 0
    %2771 = vmatpush1.bf16.xpose.msra.mxu0 0
    %2772 = vmatprep.subr.bf16.mxu0 0
    %2773 = vmatpush1.bf16.xpose.msra.mxu0 0
    %2774 = vmatprep.subr.bf16.mxu0 0
    %2775 = vmatpush1.bf16.xpose.msra.mxu0 0
    %2776 = vmatprep.subr.bf16.mxu0 0
    %2777 = vmatpush1.bf16.xpose.msra.mxu0 0
    %2778 = vmatprep.subr.bf16.mxu0 0
    %2779 = vmatpush1.bf16.xpose.msra.mxu0 0
    %2780 = vmatprep.subr.bf16.mxu0 0
    %2781 = vmatpush1.bf16.xpose.msra.mxu0 0
    %2782 = vmatprep.mubr.bf16.mxu0 0
    %2783 = vmatmul.mubr.bf16.gmra.mrb[0].mxu0 %v2745
    %v2784 = vpop.f32.mrb[0].mxu0
    %v2785 = vadd.f32 0.0, %v2784
    %v2786 = vpop.f32.mrb[0].mxu0
    %v2787 = vpop.f32.mrb[0].mxu0
    %v2788 = vpop.f32.mrb[0].mxu0
    %2789 = vdwg.mxu0
    %v2791 = vrot.slane %v2785, 5
    %v2793 = vsel %vm1296, %v2732, %v2791
    %2795 = vset.pattern.permute.xlu0 0
    %2796 = vperm.xlu0 %2795, %v1635
    %v2797 = vpop.permute.xlu0 %2796
    %v2799 = vadd.f32 %v2793, %v2797
    %v2800 = vld [vmem:[#allocation8 + $0xc0] sm:$0x3f]
    %v2801 = vld [vmem:[#allocation8 + $0xc8] sm:$0x3f]
    %v2802 = vld [vmem:[#allocation8 + $0xd0] sm:$0x3f]
    %v2804 = vsel %vm904, %v2799, 0
    %2806 = vmatprep.subr.mxu0 0.0
    %2807 = vmatpush1.msra.mxu0 %v74
    %2808 = vmatprep.subr.mxu0 0.0
    %2809 = vmatpush1.msra.mxu0 %v1311
    %2810 = vmatprep.subr.mxu0 0.0
    %2811 = vmatpush1.msra.mxu0 0.0
    %2812 = vmatprep.subr.mxu0 0.0
    %2813 = vmatpush1.msra.mxu0 0.0
    %2814 = vmatprep.subr.mxu0 0.0
    %2815 = vmatpush1.msra.mxu0 0.0
    %2816 = vmatprep.subr.mxu0 0.0
    %2817 = vmatpush1.msra.mxu0 0.0
    %2818 = vmatprep.subr.mxu0 0.0
    %2819 = vmatpush1.msra.mxu0 0.0
    %2820 = vmatprep.subr.mxu0 0.0
    %2821 = vmatpush1.msra.mxu0 0.0
    %2822 = vmatprep.subr.mxu0 0.0
    %2823 = vmatpush1.msra.mxu0 0.0
    %2824 = vmatprep.subr.mxu0 0.0
    %2825 = vmatpush1.msra.mxu0 0.0
    %2826 = vmatprep.subr.mxu0 0.0
    %2827 = vmatpush1.msra.mxu0 0.0
    %2828 = vmatprep.subr.mxu0 0.0
    %2829 = vmatpush1.msra.mxu0 0.0
    %2830 = vmatprep.subr.mxu0 0.0
    %2831 = vmatpush1.msra.mxu0 0.0
    %2832 = vmatprep.subr.mxu0 0.0
    %2833 = vmatpush1.msra.mxu0 0.0
    %2834 = vmatprep.subr.mxu0 0.0
    %2835 = vmatpush1.msra.mxu0 0.0
    %2836 = vmatprep.subr.mxu0 0.0
    %2837 = vmatpush1.msra.mxu0 0.0
    %2838 = vmatprep.subr.mxu0 0.0
    %2839 = vmatpush1.msra.mxu0 0.0
    %2840 = vmatprep.subr.mxu0 0.0
    %2841 = vmatpush1.msra.mxu0 0.0
    %2842 = vmatprep.subr.mxu0 0.0
    %2843 = vmatpush1.msra.mxu0 0.0
    %2844 = vmatprep.subr.mxu0 0.0
    %2845 = vmatpush1.msra.mxu0 0.0
    %2846 = vmatprep.subr.mxu0 0.0
    %2847 = vmatpush1.msra.mxu0 0.0
    %2848 = vmatprep.subr.mxu0 0.0
    %2849 = vmatpush1.msra.mxu0 0.0
    %2850 = vmatprep.subr.mxu0 0.0
    %2851 = vmatpush1.msra.mxu0 0.0
    %2852 = vmatprep.subr.mxu0 0.0
    %2853 = vmatpush1.msra.mxu0 0.0
    %2854 = vmatprep.subr.mxu0 0.0
    %2855 = vmatpush1.msra.mxu0 0.0
    %2856 = vmatprep.subr.mxu0 0.0
    %2857 = vmatpush1.msra.mxu0 0.0
    %2858 = vmatprep.subr.mxu0 0.0
    %2859 = vmatpush1.msra.mxu0 0.0
    %2860 = vmatprep.subr.mxu0 0.0
    %2861 = vmatpush1.msra.mxu0 0.0
    %2862 = vmatprep.subr.mxu0 0.0
    %2863 = vmatpush1.msra.mxu0 0.0
    %2864 = vmatprep.subr.mxu0 0.0
    %2865 = vmatpush1.msra.mxu0 0.0
    %2866 = vmatprep.subr.mxu0 0.0
    %2867 = vmatpush1.msra.mxu0 0.0
    %2868 = vmatprep.subr.mxu0 0.0
    %2869 = vmatpush1.msra.mxu0 0.0
    %2870 = vmatprep.mubr.f32.mxu0 0.0
    %2871 = vmatmul.mubr.f32.gmra.mrb[0].mxu0 %v2804
    %v2872 = vpop.f32.mrb[0].mxu0
    %v2873 = vadd.f32 0.0, %v2872
    %v2874 = vpop.f32.mrb[0].mxu0
    %2875 = vdwg.mxu0
    %v2877 = vsel %vm1383, %v2873, 0
    %2879 = vmatprep.subr.mxu0 0.0
    %2880 = vmatpush1.msra.mxu0 %v1388
    %2881 = vmatprep.subr.mxu0 0.0
    %2882 = vmatpush1.msra.mxu0 0.0
    %2883 = vmatprep.subr.mxu0 0.0
    %2884 = vmatpush1.msra.mxu0 0.0
    %2885 = vmatprep.subr.mxu0 0.0
    %2886 = vmatpush1.msra.mxu0 0.0
    %2887 = vmatprep.subr.mxu0 0.0
    %2888 = vmatpush1.msra.mxu0 0.0
    %2889 = vmatprep.subr.mxu0 0.0
    %2890 = vmatpush1.msra.mxu0 0.0
    %2891 = vmatprep.subr.mxu0 0.0
    %2892 = vmatpush1.msra.mxu0 0.0
    %2893 = vmatprep.subr.mxu0 0.0
    %2894 = vmatpush1.msra.mxu0 0.0
    %2895 = vmatprep.subr.mxu0 0.0
    %2896 = vmatpush1.msra.mxu0 0.0
    %2897 = vmatprep.subr.mxu0 0.0
    %2898 = vmatpush1.msra.mxu0 0.0
    %2899 = vmatprep.subr.mxu0 0.0
    %2900 = vmatpush1.msra.mxu0 0.0
    %2901 = vmatprep.subr.mxu0 0.0
    %2902 = vmatpush1.msra.mxu0 0.0
    %2903 = vmatprep.subr.mxu0 0.0
    %2904 = vmatpush1.msra.mxu0 0.0
    %2905 = vmatprep.subr.mxu0 0.0
    %2906 = vmatpush1.msra.mxu0 0.0
    %2907 = vmatprep.subr.mxu0 0.0
    %2908 = vmatpush1.msra.mxu0 0.0
    %2909 = vmatprep.subr.mxu0 0.0
    %2910 = vmatpush1.msra.mxu0 0.0
    %2911 = vmatprep.subr.mxu0 0.0
    %2912 = vmatpush1.msra.mxu0 0.0
    %2913 = vmatprep.subr.mxu0 0.0
    %2914 = vmatpush1.msra.mxu0 0.0
    %2915 = vmatprep.subr.mxu0 0.0
    %2916 = vmatpush1.msra.mxu0 0.0
    %2917 = vmatprep.subr.mxu0 0.0
    %2918 = vmatpush1.msra.mxu0 0.0
    %2919 = vmatprep.subr.mxu0 0.0
    %2920 = vmatpush1.msra.mxu0 0.0
    %2921 = vmatprep.subr.mxu0 0.0
    %2922 = vmatpush1.msra.mxu0 0.0
    %2923 = vmatprep.subr.mxu0 0.0
    %2924 = vmatpush1.msra.mxu0 0.0
    %2925 = vmatprep.subr.mxu0 0.0
    %2926 = vmatpush1.msra.mxu0 0.0
    %2927 = vmatprep.subr.mxu0 0.0
    %2928 = vmatpush1.msra.mxu0 0.0
    %2929 = vmatprep.subr.mxu0 0.0
    %2930 = vmatpush1.msra.mxu0 0.0
    %2931 = vmatprep.subr.mxu0 0.0
    %2932 = vmatpush1.msra.mxu0 0.0
    %2933 = vmatprep.subr.mxu0 0.0
    %2934 = vmatpush1.msra.mxu0 0.0
    %2935 = vmatprep.subr.mxu0 0.0
    %2936 = vmatpush1.msra.mxu0 0.0
    %2937 = vmatprep.subr.mxu0 0.0
    %2938 = vmatpush1.msra.mxu0 0.0
    %2939 = vmatprep.subr.mxu0 0.0
    %2940 = vmatpush1.msra.mxu0 0.0
    %2941 = vmatprep.subr.mxu0 0.0
    %2942 = vmatpush1.msra.mxu0 0.0
    %2943 = vmatprep.mubr.f32.mxu0 0.0
    %2944 = vmatmul.mubr.f32.gmra.mrb[0].mxu0 %v2877
    %v2945 = vpop.f32.mrb[0].mxu0
    %v2946 = vadd.f32 0.0, %v2945
    %v2947 = vpop.f32.mrb[0].mxu0
    %2948 = vdwg.mxu0
    %2950 = vset.pattern.permute.xlu0 0
    %2951 = vperm.xlu0 %2950, %v2802
    %v2952 = vpop.permute.xlu0 %2951
    %v2954 = vmul.f32 %v2946, %v2952
    %v2955 = vsub.f32 %v2799, %v2954
    %v2956 = vmul.f32 %v2955, %v2955
    %v2958 = vsel %vm904, %v2956, 0
    %2960 = vmatprep.subr.mxu0 0.0
    %2961 = vmatpush1.msra.mxu0 %v74
    %2962 = vmatprep.subr.mxu0 0.0
    %2963 = vmatpush1.msra.mxu0 %v1311
    %2964 = vmatprep.subr.mxu0 0.0
    %2965 = vmatpush1.msra.mxu0 0.0
    %2966 = vmatprep.subr.mxu0 0.0
    %2967 = vmatpush1.msra.mxu0 0.0
    %2968 = vmatprep.subr.mxu0 0.0
    %2969 = vmatpush1.msra.mxu0 0.0
    %2970 = vmatprep.subr.mxu0 0.0
    %2971 = vmatpush1.msra.mxu0 0.0
    %2972 = vmatprep.subr.mxu0 0.0
    %2973 = vmatpush1.msra.mxu0 0.0
    %2974 = vmatprep.subr.mxu0 0.0
    %2975 = vmatpush1.msra.mxu0 0.0
    %2976 = vmatprep.subr.mxu0 0.0
    %2977 = vmatpush1.msra.mxu0 0.0
    %2978 = vmatprep.subr.mxu0 0.0
    %2979 = vmatpush1.msra.mxu0 0.0
    %2980 = vmatprep.subr.mxu0 0.0
    %2981 = vmatpush1.msra.mxu0 0.0
    %2982 = vmatprep.subr.mxu0 0.0
    %2983 = vmatpush1.msra.mxu0 0.0
    %2984 = vmatprep.subr.mxu0 0.0
    %2985 = vmatpush1.msra.mxu0 0.0
    %2986 = vmatprep.subr.mxu0 0.0
    %2987 = vmatpush1.msra.mxu0 0.0
    %2988 = vmatprep.subr.mxu0 0.0
    %2989 = vmatpush1.msra.mxu0 0.0
    %2990 = vmatprep.subr.mxu0 0.0
    %2991 = vmatpush1.msra.mxu0 0.0
    %2992 = vmatprep.subr.mxu0 0.0
    %2993 = vmatpush1.msra.mxu0 0.0
    %2994 = vmatprep.subr.mxu0 0.0
    %2995 = vmatpush1.msra.mxu0 0.0
    %2996 = vmatprep.subr.mxu0 0.0
    %2997 = vmatpush1.msra.mxu0 0.0
    %2998 = vmatprep.subr.mxu0 0.0
    %2999 = vmatpush1.msra.mxu0 0.0
    %3000 = vmatprep.subr.mxu0 0.0
    %3001 = vmatpush1.msra.mxu0 0.0
    %3002 = vmatprep.subr.mxu0 0.0
    %3003 = vmatpush1.msra.mxu0 0.0
    %3004 = vmatprep.subr.mxu0 0.0
    %3005 = vmatpush1.msra.mxu0 0.0
    %3006 = vmatprep.subr.mxu0 0.0
    %3007 = vmatpush1.msra.mxu0 0.0
    %3008 = vmatprep.subr.mxu0 0.0
    %3009 = vmatpush1.msra.mxu0 0.0
    %3010 = vmatprep.subr.mxu0 0.0
    %3011 = vmatpush1.msra.mxu0 0.0
    %3012 = vmatprep.subr.mxu0 0.0
    %3013 = vmatpush1.msra.mxu0 0.0
    %3014 = vmatprep.subr.mxu0 0.0
    %3015 = vmatpush1.msra.mxu0 0.0
    %3016 = vmatprep.subr.mxu0 0.0
    %3017 = vmatpush1.msra.mxu0 0.0
    %3018 = vmatprep.subr.mxu0 0.0
    %3019 = vmatpush1.msra.mxu0 0.0
    %3020 = vmatprep.subr.mxu0 0.0
    %3021 = vmatpush1.msra.mxu0 0.0
    %3022 = vmatprep.subr.mxu0 0.0
    %3023 = vmatpush1.msra.mxu0 0.0
    %3024 = vmatprep.mubr.f32.mxu0 0.0
    %3025 = vmatmul.mubr.f32.gmra.mrb[0].mxu0 %v2958
    %v3026 = vpop.f32.mrb[0].mxu0
    %v3027 = vadd.f32 1e-05, %v3026
    %v3028 = vpop.f32.mrb[0].mxu0
    %3029 = vdwg.mxu0
    %v3030 = vrsqrt.pop %v3027
    %v3032 = vsel %vm1383, %v3030, 0
    %3034 = vmatprep.subr.mxu0 0.0
    %3035 = vmatpush1.msra.mxu0 %v1388
    %3036 = vmatprep.subr.mxu0 0.0
    %3037 = vmatpush1.msra.mxu0 0.0
    %3038 = vmatprep.subr.mxu0 0.0
    %3039 = vmatpush1.msra.mxu0 0.0
    %3040 = vmatprep.subr.mxu0 0.0
    %3041 = vmatpush1.msra.mxu0 0.0
    %3042 = vmatprep.subr.mxu0 0.0
    %3043 = vmatpush1.msra.mxu0 0.0
    %3044 = vmatprep.subr.mxu0 0.0
    %3045 = vmatpush1.msra.mxu0 0.0
    %3046 = vmatprep.subr.mxu0 0.0
    %3047 = vmatpush1.msra.mxu0 0.0
    %3048 = vmatprep.subr.mxu0 0.0
    %3049 = vmatpush1.msra.mxu0 0.0
    %3050 = vmatprep.subr.mxu0 0.0
    %3051 = vmatpush1.msra.mxu0 0.0
    %3052 = vmatprep.subr.mxu0 0.0
    %3053 = vmatpush1.msra.mxu0 0.0
    %3054 = vmatprep.subr.mxu0 0.0
    %3055 = vmatpush1.msra.mxu0 0.0
    %3056 = vmatprep.subr.mxu0 0.0
    %3057 = vmatpush1.msra.mxu0 0.0
    %3058 = vmatprep.subr.mxu0 0.0
    %3059 = vmatpush1.msra.mxu0 0.0
    %3060 = vmatprep.subr.mxu0 0.0
    %3061 = vmatpush1.msra.mxu0 0.0
    %3062 = vmatprep.subr.mxu0 0.0
    %3063 = vmatpush1.msra.mxu0 0.0
    %3064 = vmatprep.subr.mxu0 0.0
    %3065 = vmatpush1.msra.mxu0 0.0
    %3066 = vmatprep.subr.mxu0 0.0
    %3067 = vmatpush1.msra.mxu0 0.0
    %3068 = vmatprep.subr.mxu0 0.0
    %3069 = vmatpush1.msra.mxu0 0.0
    %3070 = vmatprep.subr.mxu0 0.0
    %3071 = vmatpush1.msra.mxu0 0.0
    %3072 = vmatprep.subr.mxu0 0.0
    %3073 = vmatpush1.msra.mxu0 0.0
    %3074 = vmatprep.subr.mxu0 0.0
    %3075 = vmatpush1.msra.mxu0 0.0
    %3076 = vmatprep.subr.mxu0 0.0
    %3077 = vmatpush1.msra.mxu0 0.0
    %3078 = vmatprep.subr.mxu0 0.0
    %3079 = vmatpush1.msra.mxu0 0.0
    %3080 = vmatprep.subr.mxu0 0.0
    %3081 = vmatpush1.msra.mxu0 0.0
    %3082 = vmatprep.subr.mxu0 0.0
    %3083 = vmatpush1.msra.mxu0 0.0
    %3084 = vmatprep.subr.mxu0 0.0
    %3085 = vmatpush1.msra.mxu0 0.0
    %3086 = vmatprep.subr.mxu0 0.0
    %3087 = vmatpush1.msra.mxu0 0.0
    %3088 = vmatprep.subr.mxu0 0.0
    %3089 = vmatpush1.msra.mxu0 0.0
    %3090 = vmatprep.subr.mxu0 0.0
    %3091 = vmatpush1.msra.mxu0 0.0
    %3092 = vmatprep.subr.mxu0 0.0
    %3093 = vmatpush1.msra.mxu0 0.0
    %3094 = vmatprep.subr.mxu0 0.0
    %3095 = vmatpush1.msra.mxu0 0.0
    %3096 = vmatprep.subr.mxu0 0.0
    %3097 = vmatpush1.msra.mxu0 0.0
    %3098 = vmatprep.mubr.f32.mxu0 0.0
    %3099 = vmatmul.mubr.f32.gmra.mrb[0].mxu0 %v3032
    %v3100 = vpop.f32.mrb[0].mxu0
    %v3101 = vadd.f32 0.0, %v3100
    %v3102 = vpop.f32.mrb[0].mxu0
    %3103 = vdwg.mxu0
    %3105 = vset.pattern.permute.xlu0 0
    %3106 = vperm.xlu0 %3105, %v2800
    %v3107 = vpop.permute.xlu0 %3106
    %v3109 = vmul.f32 %v3107, %v2955
    %v3110 = vmul.f32 %v3109, %v3101
    %3112 = vset.pattern.permute.xlu0 0
    %3113 = vperm.xlu0 %3112, %v2801
    %v3114 = vpop.permute.xlu0 %3113
    %v3116 = vadd.f32 %v3110, %v3114
    %v3117 = vmax.f32 %v3116, 0.0
    %v3118 = vld [vmem:[#allocation8 + $0x70] sm:$0xff]
    %v3119 = vld [vmem:[#allocation8 + $0x78] sm:$0xf]
    %v3120 = vld [vmem:[#allocation8 + $0x80] sm:$0xff]
    %v3121 = vld [vmem:[#allocation8 + $0x88] sm:$0xf]
    %v3122 = vld [vmem:[#allocation8 + $0x90] sm:$0x3f]
    %v3123 = vld [vmem:[#allocation8 + $0x98] sm:$0x3]
    %v3124 = vld [vmem:[#allocation8 + $0xa0] sm:$0x3f]
    %3126 = vset.pattern.permute.xlu0 0
    %3127 = vperm.xlu0 %3126, %v3120
    %v3128 = vpop.permute.xlu0 %3127
    %3131 = vset.pattern.permute.xlu0 0
    %3132 = vperm.xlu0 %3131, %v3121
    %v3133 = vpop.permute.xlu0 %3132
    %v3136 = vsel %vm925, %v3118, 0
    %v3139 = vsel %vm925, %v3119, 0
    %v3142 = vsel %vm929, %v3117, 0
    %3144 = vmatprep.subr.mxu0 0.0
    %3145 = vmatpush1.msra.mxu0 %v3142
    %3146 = vmatprep.subr.mxu0 0.0
    %3147 = vmatpush1.msra.mxu0 0.0
    %3148 = vmatprep.subr.mxu0 0.0
    %3149 = vmatpush1.msra.mxu0 0.0
    %3150 = vmatprep.subr.mxu0 0.0
    %3151 = vmatpush1.msra.mxu0 0.0
    %3152 = vmatprep.subr.mxu0 0.0
    %3153 = vmatpush1.msra.mxu0 0.0
    %3154 = vmatprep.subr.mxu0 0.0
    %3155 = vmatpush1.msra.mxu0 0.0
    %3156 = vmatprep.subr.mxu0 0.0
    %3157 = vmatpush1.msra.mxu0 0.0
    %3158 = vmatprep.subr.mxu0 0.0
    %3159 = vmatpush1.msra.mxu0 0.0
    %3160 = vmatprep.subr.mxu0 0.0
    %3161 = vmatpush1.msra.mxu0 0.0
    %3162 = vmatprep.subr.mxu0 0.0
    %3163 = vmatpush1.msra.mxu0 0.0
    %3164 = vmatprep.subr.mxu0 0.0
    %3165 = vmatpush1.msra.mxu0 0.0
    %3166 = vmatprep.subr.mxu0 0.0
    %3167 = vmatpush1.msra.mxu0 0.0
    %3168 = vmatprep.subr.mxu0 0.0
    %3169 = vmatpush1.msra.mxu0 0.0
    %3170 = vmatprep.subr.mxu0 0.0
    %3171 = vmatpush1.msra.mxu0 0.0
    %3172 = vmatprep.subr.mxu0 0.0
    %3173 = vmatpush1.msra.mxu0 0.0
    %3174 = vmatprep.subr.mxu0 0.0
    %3175 = vmatpush1.msra.mxu0 0.0
    %3176 = vmatprep.subr.mxu0 0.0
    %3177 = vmatpush1.msra.mxu0 0.0
    %3178 = vmatprep.subr.mxu0 0.0
    %3179 = vmatpush1.msra.mxu0 0.0
    %3180 = vmatprep.subr.mxu0 0.0
    %3181 = vmatpush1.msra.mxu0 0.0
    %3182 = vmatprep.subr.mxu0 0.0
    %3183 = vmatpush1.msra.mxu0 0.0
    %3184 = vmatprep.subr.mxu0 0.0
    %3185 = vmatpush1.msra.mxu0 0.0
    %3186 = vmatprep.subr.mxu0 0.0
    %3187 = vmatpush1.msra.mxu0 0.0
    %3188 = vmatprep.subr.mxu0 0.0
    %3189 = vmatpush1.msra.mxu0 0.0
    %3190 = vmatprep.subr.mxu0 0.0
    %3191 = vmatpush1.msra.mxu0 0.0
    %3192 = vmatprep.subr.mxu0 0.0
    %3193 = vmatpush1.msra.mxu0 0.0
    %3194 = vmatprep.subr.mxu0 0.0
    %3195 = vmatpush1.msra.mxu0 0.0
    %3196 = vmatprep.subr.mxu0 0.0
    %3197 = vmatpush1.msra.mxu0 0.0
    %3198 = vmatprep.subr.mxu0 0.0
    %3199 = vmatpush1.msra.mxu0 0.0
    %3200 = vmatprep.subr.mxu0 0.0
    %3201 = vmatpush1.msra.mxu0 0.0
    %3202 = vmatprep.subr.mxu0 0.0
    %3203 = vmatpush1.msra.mxu0 0.0
    %3204 = vmatprep.subr.mxu0 0.0
    %3205 = vmatpush1.msra.mxu0 0.0
    %3206 = vmatprep.subr.mxu0 0.0
    %3207 = vmatpush1.msra.mxu0 0.0
    %3208 = vmatprep.mubr.f32.mxu0 0.0
    %3209 = vmatmul.mubr.f32.gmra.mrb[0].mxu0 %v3136
    %v3210 = vpop.f32.mrb[0].mxu0
    %v3211 = vadd.f32 %v3128, %v3210
    %v3212 = vpop.f32.mrb[0].mxu0
    %3213 = vmatprep.mubr.f32.mxu0 0.0
    %3214 = vmatmul.mubr.f32.gmra.mrb[0].mxu0 %v3139
    %v3215 = vpop.f32.mrb[0].mxu0
    %v3216 = vadd.f32 %v3133, %v3215
    %v3217 = vpop.f32.mrb[0].mxu0
    %3218 = vdwg.mxu0
    %v3219 = vpack.c.bf16 %v3122, %v3122
    %v3221 = vsel %vm97, %v3219, 0
    %3223 = vmatprep.subr.bf16.mxu0 %v197
    %3224 = vmatpush1.bf16.msra.mxu0 %v194
    %3225 = vmatprep.subr.bf16.mxu0 0
    %3226 = vmatpush1.bf16.msra.mxu0 0
    %3227 = vmatprep.subr.bf16.mxu0 0
    %3228 = vmatpush1.bf16.msra.mxu0 0
    %3229 = vmatprep.subr.bf16.mxu0 0
    %3230 = vmatpush1.bf16.msra.mxu0 0
    %3231 = vmatprep.subr.bf16.mxu0 0
    %3232 = vmatpush1.bf16.msra.mxu0 0
    %3233 = vmatprep.subr.bf16.mxu0 0
    %3234 = vmatpush1.bf16.msra.mxu0 0
    %3235 = vmatprep.subr.bf16.mxu0 0
    %3236 = vmatpush1.bf16.msra.mxu0 0
    %3237 = vmatprep.subr.bf16.mxu0 0
    %3238 = vmatpush1.bf16.msra.mxu0 0
    %3239 = vmatprep.subr.bf16.mxu0 0
    %3240 = vmatpush1.bf16.msra.mxu0 0
    %3241 = vmatprep.subr.bf16.mxu0 0
    %3242 = vmatpush1.bf16.msra.mxu0 0
    %3243 = vmatprep.subr.bf16.mxu0 0
    %3244 = vmatpush1.bf16.msra.mxu0 0
    %3245 = vmatprep.subr.bf16.mxu0 0
    %3246 = vmatpush1.bf16.msra.mxu0 0
    %3247 = vmatprep.subr.bf16.mxu0 0
    %3248 = vmatpush1.bf16.msra.mxu0 0
    %3249 = vmatprep.subr.bf16.mxu0 0
    %3250 = vmatpush1.bf16.msra.mxu0 0
    %3251 = vmatprep.subr.bf16.mxu0 0
    %3252 = vmatpush1.bf16.msra.mxu0 0
    %3253 = vmatprep.subr.bf16.mxu0 0
    %3254 = vmatpush1.bf16.msra.mxu0 0
    %3255 = vmatprep.mubr.bf16.mxu0 0
    %3256 = vmatmul.mubr.bf16.gmra.mrb[0].mxu0 %v3221
    %v3257 = vpop.f32.mrb[0].mxu0
    %v3258 = vadd.f32 0.0, %v3257
    %v3259 = vpop.f32.mrb[0].mxu0
    %v3260 = vadd.f32 0.0, %v3259
    %v3261 = vpop.f32.mrb[0].mxu0
    %v3262 = vpop.f32.mrb[0].mxu0
    %3263 = vdwg.mxu0
    %v3264 = vlaneseq
    %v3265 = vshrl.u32 %v3264, 7
    %v3266 = vsub.s32 6, %v3265
    %v3267 = vrot.slane %v3211, %v3266
    %3269 = vbcast.lane.b32.xlu0 %v3267, 256
    %v3270 = vpop.permute.xlu0 %3269
    %s3272 = sor.u32 256, 8
    %3273 = vbcast.lane.b32.xlu0 %v3267, %s3272
    %v3274 = vpop.permute.xlu0 %3273
    %v3275 = vlaneseq
    %v3276 = vshrl.u32 %v3275, 7
    %v3277 = vsub.s32 7, %v3276
    %v3278 = vrot.slane %v3211, %v3277
    %3280 = vbcast.lane.b32.xlu0 %v3278, 256
    %v3281 = vpop.permute.xlu0 %3280
    %s3283 = sor.u32 256, 8
    %3284 = vbcast.lane.b32.xlu0 %v3278, %s3283
    %v3285 = vpop.permute.xlu0 %3284
    %v3286 = vlaneseq
    %v3287 = vshrl.u32 %v3286, 7
    %v3288 = vsub.s32 0, %v3287
    %v3289 = vrot.slane %v3216, %v3288
    %3291 = vbcast.lane.b32.xlu0 %v3289, 256
    %v3292 = vpop.permute.xlu0 %3291
    %s3294 = sor.u32 256, 8
    %3295 = vbcast.lane.b32.xlu0 %v3289, %s3294
    %v3296 = vpop.permute.xlu0 %3295
    %v3297 = vlaneseq
    %v3298 = vshrl.u32 %v3297, 7
    %v3299 = vsub.s32 1, %v3298
    %v3300 = vrot.slane %v3216, %v3299
    %3302 = vbcast.lane.b32.xlu0 %v3300, 256
    %v3303 = vpop.permute.xlu0 %3302
    %s3305 = sor.u32 256, 8
    %3306 = vbcast.lane.b32.xlu0 %v3300, %s3305
    %v3307 = vpop.permute.xlu0 %3306
    %v3308 = vlaneseq
    %v3309 = vshrl.u32 %v3308, 7
    %v3310 = vsub.s32 2, %v3309
    %v3311 = vrot.slane %v3216, %v3310
    %3313 = vbcast.lane.b32.xlu0 %v3311, 256
    %v3314 = vpop.permute.xlu0 %3313
    %s3316 = sor.u32 256, 8
    %3317 = vbcast.lane.b32.xlu0 %v3311, %s3316
    %v3318 = vpop.permute.xlu0 %3317
    %v3319 = vlaneseq
    %v3320 = vshrl.u32 %v3319, 7
    %v3321 = vsub.s32 3, %v3320
    %v3322 = vrot.slane %v3216, %v3321
    %3324 = vbcast.lane.b32.xlu0 %v3322, 256
    %v3325 = vpop.permute.xlu0 %3324
    %s3327 = sor.u32 256, 8
    %3328 = vbcast.lane.b32.xlu0 %v3322, %s3327
    %v3329 = vpop.permute.xlu0 %3328
    %v3331 = vcombine.high %v3211, %v3211
    %v3333 = vunpack.c.l.s4 1966171168
    %v3334 = vunpack.c.0.s8 %v3333
    %v3335 = vlaneseq
    %v3336 = vshrl.u32 %v3335, 7
    %v3337 = vsub.s32 %v3334, %v3336
    %v3338 = vrot.slane %v3211, %v3337
    %v3340 = vunpack.c.l.s4 1966171168
    %v3341 = vunpack.c.0.s8 %v3340
    %v3342 = vlaneseq
    %v3343 = vshrl.u32 %v3342, 7
    %v3344 = vsub.s32 %v3341, %v3343
    %v3345 = vrot.slane %v3331, %v3344
    %v3346 = vcombine.high %v3338, %v3338
    %v3347 = vcombine.high %v3345, %v3345
    %v3349 = vunpack.c.l.s4 1966171168
    %v3350 = vunpack.c.0.s8 %v3349
    %v3351 = vlaneseq
    %v3352 = vshrl.u32 %v3351, 7
    %v3353 = vsub.s32 %v3350, %v3352
    %v3354 = vrot.slane %v3338, %v3353
    %v3356 = vunpack.c.l.s4 1966171168
    %v3357 = vunpack.c.0.s8 %v3356
    %v3358 = vlaneseq
    %v3359 = vshrl.u32 %v3358, 7
    %v3360 = vsub.s32 %v3357, %v3359
    %v3361 = vrot.slane %v3345, %v3360
    %v3363 = vunpack.c.l.s4 1966171168
    %v3364 = vunpack.c.0.s8 %v3363
    %v3365 = vlaneseq
    %v3366 = vshrl.u32 %v3365, 7
    %v3367 = vsub.s32 %v3364, %v3366
    %v3368 = vrot.slane %v3346, %v3367
    %v3370 = vunpack.c.l.s4 1966171168
    %v3371 = vunpack.c.0.s8 %v3370
    %v3372 = vlaneseq
    %v3373 = vshrl.u32 %v3372, 7
    %v3374 = vsub.s32 %v3371, %v3373
    %v3375 = vrot.slane %v3347, %v3374
    %v3376 = vcombine.high %v3354, %v3354
    %v3377 = vcombine.high %v3368, %v3368
    %v3378 = vlaneseq
    %v3379 = vshrl.u32 %v3378, 7
    %v3380 = vsub.s32 0, %v3379
    %v3381 = vrot.slane %v3354, %v3380
    %v3382 = vlaneseq
    %v3383 = vshrl.u32 %v3382, 7
    %v3384 = vsub.s32 0, %v3383
    %v3385 = vrot.slane %v3368, %v3384
    %v3386 = vlaneseq
    %v3387 = vshrl.u32 %v3386, 7
    %v3388 = vsub.s32 0, %v3387
    %v3389 = vrot.slane %v3376, %v3388
    %v3390 = vlaneseq
    %v3391 = vshrl.u32 %v3390, 7
    %v3392 = vsub.s32 0, %v3391
    %v3393 = vrot.slane %v3377, %v3392
    %v3394 = vlaneseq
    %v3395 = vshrl.u32 %v3394, 7
    %v3396 = vsub.s32 0, %v3395
    %v3397 = vrot.slane %v3361, %v3396
    %v3398 = vlaneseq
    %v3399 = vshrl.u32 %v3398, 7
    %v3400 = vsub.s32 0, %v3399
    %v3401 = vrot.slane %v3375, %v3400
    %v3408 = vadd.f32 %v3270, %v3381
    %v3409 = vadd.f32 %v3274, %v3381
    %v3410 = vadd.f32 %v3281, %v3385
    %v3411 = vadd.f32 %v3285, %v3385
    %v3412 = vadd.f32 %v3292, %v3389
    %v3413 = vadd.f32 %v3296, %v3389
    %v3414 = vadd.f32 %v3303, %v3393
    %v3415 = vadd.f32 %v3307, %v3393
    %v3416 = vadd.f32 %v3314, %v3397
    %v3417 = vadd.f32 %v3318, %v3397
    %v3418 = vadd.f32 %v3325, %v3401
    %v3419 = vadd.f32 %v3329, %v3401
    %3421 = vrot.lane.b32.xlu0 %v3258, 116
    %v3422 = vpop.permute.xlu0 %3421
    %3424 = vrot.lane.b32.xlu0 %v3258, 104
    %v3425 = vpop.permute.xlu0 %3424
    %3427 = vrot.lane.b32.xlu0 %v3258, 92
    %v3428 = vpop.permute.xlu0 %3427
    %3430 = vrot.lane.b32.xlu0 %v3258, 80
    %v3431 = vpop.permute.xlu0 %3430
    %3433 = vrot.lane.b32.xlu0 %v3258, 68
    %v3434 = vpop.permute.xlu0 %3433
    %3436 = vrot.lane.b32.xlu0 %v3258, 56
    %v3437 = vpop.permute.xlu0 %3436
    %3439 = vrot.lane.b32.xlu0 %v3258, 44
    %v3440 = vpop.permute.xlu0 %3439
    %3442 = vrot.lane.b32.xlu0 %v3258, 32
    %v3443 = vpop.permute.xlu0 %3442
    %3445 = vrot.lane.b32.xlu0 %v3258, 20
    %v3446 = vpop.permute.xlu0 %3445
    %3449 = vrot.lane.b32.xlu0 %v3258, 8
    %v3450 = vpop.permute.xlu0 %3449
    %3451 = vrot.lane.b32.xlu0 %v3260, 8
    %v3452 = vpop.permute.xlu0 %3451
    %v3453 = vsel %vm429, %v3450, %v3452
    %3455 = vrot.lane.b32.xlu0 %v3260, 124
    %v3456 = vpop.permute.xlu0 %3455
    %v3458 = vcombine.low %v3258, %v3425
    %v3459 = vcombine.high %v3258, %v3425
    %v3461 = vunpack.c.l.s4 1983009808
    %v3462 = vunpack.c.0.s8 %v3461
    %v3463 = vlaneseq
    %v3464 = vshrl.u32 %v3463, 7
    %v3465 = vsub.s32 %v3462, %v3464
    %v3466 = vrot.slane %v3458, %v3465
    %v3468 = vunpack.c.l.s4 1983009808
    %v3469 = vunpack.c.0.s8 %v3468
    %v3470 = vlaneseq
    %v3471 = vshrl.u32 %v3470, 7
    %v3472 = vsub.s32 %v3469, %v3471
    %v3473 = vrot.slane %v3459, %v3472
    %v3474 = vcombine.low %v3422, %v3428
    %v3475 = vcombine.high %v3422, %v3428
    %v3477 = vunpack.c.l.s4 1983009808
    %v3478 = vunpack.c.0.s8 %v3477
    %v3479 = vlaneseq
    %v3480 = vshrl.u32 %v3479, 7
    %v3481 = vsub.s32 %v3478, %v3480
    %v3482 = vrot.slane %v3474, %v3481
    %v3484 = vunpack.c.l.s4 1983009808
    %v3485 = vunpack.c.0.s8 %v3484
    %v3486 = vlaneseq
    %v3487 = vshrl.u32 %v3486, 7
    %v3488 = vsub.s32 %v3485, %v3487
    %v3489 = vrot.slane %v3475, %v3488
    %v3490 = vcombine.low %v3431, %v3437
    %v3491 = vcombine.high %v3431, %v3437
    %v3493 = vunpack.c.l.s4 1983009808
    %v3494 = vunpack.c.0.s8 %v3493
    %v3495 = vlaneseq
    %v3496 = vshrl.u32 %v3495, 7
    %v3497 = vsub.s32 %v3494, %v3496
    %v3498 = vrot.slane %v3490, %v3497
    %v3500 = vunpack.c.l.s4 1983009808
    %v3501 = vunpack.c.0.s8 %v3500
    %v3502 = vlaneseq
    %v3503 = vshrl.u32 %v3502, 7
    %v3504 = vsub.s32 %v3501, %v3503
    %v3505 = vrot.slane %v3491, %v3504
    %v3506 = vcombine.low %v3434, %v3440
    %v3507 = vcombine.high %v3434, %v3440
    %v3509 = vunpack.c.l.s4 1983009808
    %v3510 = vunpack.c.0.s8 %v3509
    %v3511 = vlaneseq
    %v3512 = vshrl.u32 %v3511, 7
    %v3513 = vsub.s32 %v3510, %v3512
    %v3514 = vrot.slane %v3506, %v3513
    %v3516 = vunpack.c.l.s4 1983009808
    %v3517 = vunpack.c.0.s8 %v3516
    %v3518 = vlaneseq
    %v3519 = vshrl.u32 %v3518, 7
    %v3520 = vsub.s32 %v3517, %v3519
    %v3521 = vrot.slane %v3507, %v3520
    %v3522 = vcombine.low %v3466, %v3482
    %v3523 = vcombine.high %v3466, %v3482
    %v3525 = vunpack.c.l.s4 1934713408
    %v3526 = vunpack.c.0.s8 %v3525
    %v3527 = vlaneseq
    %v3528 = vshrl.u32 %v3527, 7
    %v3529 = vsub.s32 %v3526, %v3528
    %v3530 = vrot.slane %v3522, %v3529
    %v3532 = vunpack.c.l.s4 1934713408
    %v3533 = vunpack.c.0.s8 %v3532
    %v3534 = vlaneseq
    %v3535 = vshrl.u32 %v3534, 7
    %v3536 = vsub.s32 %v3533, %v3535
    %v3537 = vrot.slane %v3523, %v3536
    %v3538 = vcombine.low %v3473, %v3489
    %v3540 = vunpack.c.l.s4 1934713408
    %v3541 = vunpack.c.0.s8 %v3540
    %v3542 = vlaneseq
    %v3543 = vshrl.u32 %v3542, 7
    %v3544 = vsub.s32 %v3541, %v3543
    %v3545 = vrot.slane %v3538, %v3544
    %v3546 = vcombine.low %v3498, %v3514
    %v3547 = vcombine.high %v3498, %v3514
    %v3549 = vunpack.c.l.s4 1934713408
    %v3550 = vunpack.c.0.s8 %v3549
    %v3551 = vlaneseq
    %v3552 = vshrl.u32 %v3551, 7
    %v3553 = vsub.s32 %v3550, %v3552
    %v3554 = vrot.slane %v3546, %v3553
    %v3556 = vunpack.c.l.s4 1934713408
    %v3557 = vunpack.c.0.s8 %v3556
    %v3558 = vlaneseq
    %v3559 = vshrl.u32 %v3558, 7
    %v3560 = vsub.s32 %v3557, %v3559
    %v3561 = vrot.slane %v3547, %v3560
    %v3562 = vcombine.low %v3505, %v3521
    %v3564 = vunpack.c.l.s4 1934713408
    %v3565 = vunpack.c.0.s8 %v3564
    %v3566 = vlaneseq
    %v3567 = vshrl.u32 %v3566, 7
    %v3568 = vsub.s32 %v3565, %v3567
    %v3569 = vrot.slane %v3562, %v3568
    %v3570 = vcombine.low %v3530, %v3554
    %v3571 = vcombine.high %v3530, %v3554
    %v3572 = vcombine.low %v3537, %v3561
    %v3573 = vcombine.high %v3537, %v3561
    %v3574 = vcombine.low %v3545, %v3569
    %v3575 = vcombine.high %v3545, %v3569
    %v3576 = vcombine.low %v3443, %v3453
    %v3577 = vcombine.high %v3443, %v3453
    %v3579 = vunpack.c.l.s4 1983009808
    %v3580 = vunpack.c.0.s8 %v3579
    %v3581 = vlaneseq
    %v3582 = vshrl.u32 %v3581, 7
    %v3583 = vsub.s32 %v3580, %v3582
    %v3584 = vrot.slane %v3576, %v3583
    %v3586 = vunpack.c.l.s4 1983009808
    %v3587 = vunpack.c.0.s8 %v3586
    %v3588 = vlaneseq
    %v3589 = vshrl.u32 %v3588, 7
    %v3590 = vsub.s32 %v3587, %v3589
    %v3591 = vrot.slane %v3577, %v3590
    %v3592 = vcombine.low %v3446, %v3456
    %v3593 = vcombine.high %v3446, %v3456
    %v3595 = vunpack.c.l.s4 1983009808
    %v3596 = vunpack.c.0.s8 %v3595
    %v3597 = vlaneseq
    %v3598 = vshrl.u32 %v3597, 7
    %v3599 = vsub.s32 %v3596, %v3598
    %v3600 = vrot.slane %v3592, %v3599
    %v3602 = vunpack.c.l.s4 1983009808
    %v3603 = vunpack.c.0.s8 %v3602
    %v3604 = vlaneseq
    %v3605 = vshrl.u32 %v3604, 7
    %v3606 = vsub.s32 %v3603, %v3605
    %v3607 = vrot.slane %v3593, %v3606
    %v3608 = vcombine.low %v3584, %v3600
    %v3609 = vcombine.high %v3584, %v3600
    %v3611 = vunpack.c.l.s4 1934713408
    %v3612 = vunpack.c.0.s8 %v3611
    %v3613 = vlaneseq
    %v3614 = vshrl.u32 %v3613, 7
    %v3615 = vsub.s32 %v3612, %v3614
    %v3616 = vrot.slane %v3608, %v3615
    %v3618 = vunpack.c.l.s4 1934713408
    %v3619 = vunpack.c.0.s8 %v3618
    %v3620 = vlaneseq
    %v3621 = vshrl.u32 %v3620, 7
    %v3622 = vsub.s32 %v3619, %v3621
    %v3623 = vrot.slane %v3609, %v3622
    %v3624 = vcombine.low %v3591, %v3607
    %v3626 = vunpack.c.l.s4 1934713408
    %v3627 = vunpack.c.0.s8 %v3626
    %v3628 = vlaneseq
    %v3629 = vshrl.u32 %v3628, 7
    %v3630 = vsub.s32 %v3627, %v3629
    %v3631 = vrot.slane %v3624, %v3630
    %v3632 = vcombine.high %v3616, 0.0
    %v3633 = vcombine.high %v3623, 0.0
    %v3634 = vcombine.high %v3631, 0.0
    %v3635 = vadd.f32 %v3408, %v3570
    %v3636 = vadd.f32 %v3409, %v3616
    %v3637 = vadd.f32 %v3410, %v3571
    %v3638 = vadd.f32 %v3411, %v3632
    %v3639 = vadd.f32 %v3412, %v3572
    %v3640 = vadd.f32 %v3413, %v3623
    %v3641 = vadd.f32 %v3414, %v3573
    %v3642 = vadd.f32 %v3415, %v3633
    %v3643 = vadd.f32 %v3416, %v3574
    %v3644 = vadd.f32 %v3417, %v3631
    %v3645 = vadd.f32 %v3418, %v3575
    %v3646 = vadd.f32 %v3419, %v3634
    %vm3647 = vcmp.gt.f32.partialorder %v3635, 0.0
    %vm3648 = vcmp.gt.f32.partialorder %v3636, 0.0
    %vm3649 = vcmp.gt.f32.partialorder %v3637, 0.0
    %vm3650 = vcmp.gt.f32.partialorder %v3638, 0.0
    %vm3651 = vcmp.gt.f32.partialorder %v3639, 0.0
    %vm3652 = vcmp.gt.f32.partialorder %v3640, 0.0
    %vm3653 = vcmp.gt.f32.partialorder %v3641, 0.0
    %vm3654 = vcmp.gt.f32.partialorder %v3642, 0.0
    %vm3655 = vcmp.gt.f32.partialorder %v3643, 0.0
    %vm3656 = vcmp.gt.f32.partialorder %v3644, 0.0
    %vm3657 = vcmp.gt.f32.partialorder %v3645, 0.0
    %vm3658 = vcmp.gt.f32.partialorder %v3646, 0.0
    %v3659 = vmul.f32 %v3635, 0.2
    %v3660 = vmul.f32 %v3636, 0.2
    %v3661 = vmul.f32 %v3637, 0.2
    %v3662 = vmul.f32 %v3638, 0.2
    %v3663 = vmul.f32 %v3639, 0.2
    %v3664 = vmul.f32 %v3640, 0.2
    %v3665 = vmul.f32 %v3641, 0.2
    %v3666 = vmul.f32 %v3642, 0.2
    %v3667 = vmul.f32 %v3643, 0.2
    %v3668 = vmul.f32 %v3644, 0.2
    %v3669 = vmul.f32 %v3645, 0.2
    %v3670 = vmul.f32 %v3646, 0.2
    %v3671 = vsel %vm3647, %v3635, %v3659
    %v3672 = vsel %vm3648, %v3636, %v3660
    %v3673 = vsel %vm3649, %v3637, %v3661
    %v3674 = vsel %vm3650, %v3638, %v3662
    %v3675 = vsel %vm3651, %v3639, %v3663
    %v3676 = vsel %vm3652, %v3640, %v3664
    %v3677 = vsel %vm3653, %v3641, %v3665
    %v3678 = vsel %vm3654, %v3642, %v3666
    %v3679 = vsel %vm3655, %v3643, %v3667
    %v3680 = vsel %vm3657, %v3645, %v3669
    %v3681 = vcombine.low %v3671, %v3675
    %v3682 = vcombine.high %v3671, %v3675
    %v3684 = vunpack.c.l.s4 1983009808
    %v3685 = vunpack.c.0.s8 %v3684
    %v3686 = vlaneseq
    %v3687 = vshrl.u32 %v3686, 7
    %v3688 = vsub.s32 %v3685, %v3687
    %v3689 = vrot.slane %v3681, %v3688
    %v3691 = vunpack.c.l.s4 1983009808
    %v3692 = vunpack.c.0.s8 %v3691
    %v3693 = vlaneseq
    %v3694 = vshrl.u32 %v3693, 7
    %v3695 = vsub.s32 %v3692, %v3694
    %v3696 = vrot.slane %v3682, %v3695
    %v3697 = vcombine.low %v3673, %v3677
    %v3698 = vcombine.high %v3673, %v3677
    %v3700 = vunpack.c.l.s4 1983009808
    %v3701 = vunpack.c.0.s8 %v3700
    %v3702 = vlaneseq
    %v3703 = vshrl.u32 %v3702, 7
    %v3704 = vsub.s32 %v3701, %v3703
    %v3705 = vrot.slane %v3697, %v3704
    %v3707 = vunpack.c.l.s4 1983009808
    %v3708 = vunpack.c.0.s8 %v3707
    %v3709 = vlaneseq
    %v3710 = vshrl.u32 %v3709, 7
    %v3711 = vsub.s32 %v3708, %v3710
    %v3712 = vrot.slane %v3698, %v3711
    %v3713 = vcombine.high %v3679, 0.0
    %v3715 = vunpack.c.l.s4 1983009808
    %v3716 = vunpack.c.0.s8 %v3715
    %v3717 = vlaneseq
    %v3718 = vshrl.u32 %v3717, 7
    %v3719 = vsub.s32 %v3716, %v3718
    %v3720 = vrot.slane %v3679, %v3719
    %v3722 = vunpack.c.l.s4 1983009808
    %v3723 = vunpack.c.0.s8 %v3722
    %v3724 = vlaneseq
    %v3725 = vshrl.u32 %v3724, 7
    %v3726 = vsub.s32 %v3723, %v3725
    %v3727 = vrot.slane %v3713, %v3726
    %v3728 = vcombine.high %v3680, 0.0
    %v3730 = vunpack.c.l.s4 1983009808
    %v3731 = vunpack.c.0.s8 %v3730
    %v3732 = vlaneseq
    %v3733 = vshrl.u32 %v3732, 7
    %v3734 = vsub.s32 %v3731, %v3733
    %v3735 = vrot.slane %v3680, %v3734
    %v3737 = vunpack.c.l.s4 1983009808
    %v3738 = vunpack.c.0.s8 %v3737
    %v3739 = vlaneseq
    %v3740 = vshrl.u32 %v3739, 7
    %v3741 = vsub.s32 %v3738, %v3740
    %v3742 = vrot.slane %v3728, %v3741
    %v3743 = vcombine.low %v3689, %v3705
    %v3744 = vcombine.high %v3689, %v3705
    %v3746 = vunpack.c.l.s4 1934713408
    %v3747 = vunpack.c.0.s8 %v3746
    %v3748 = vlaneseq
    %v3749 = vshrl.u32 %v3748, 7
    %v3750 = vsub.s32 %v3747, %v3749
    %v3751 = vrot.slane %v3743, %v3750
    %v3753 = vunpack.c.l.s4 1934713408
    %v3754 = vunpack.c.0.s8 %v3753
    %v3755 = vlaneseq
    %v3756 = vshrl.u32 %v3755, 7
    %v3757 = vsub.s32 %v3754, %v3756
    %v3758 = vrot.slane %v3744, %v3757
    %v3759 = vcombine.low %v3696, %v3712
    %v3760 = vcombine.high %v3696, %v3712
    %v3762 = vunpack.c.l.s4 1934713408
    %v3763 = vunpack.c.0.s8 %v3762
    %v3764 = vlaneseq
    %v3765 = vshrl.u32 %v3764, 7
    %v3766 = vsub.s32 %v3763, %v3765
    %v3767 = vrot.slane %v3759, %v3766
    %v3769 = vunpack.c.l.s4 1934713408
    %v3770 = vunpack.c.0.s8 %v3769
    %v3771 = vlaneseq
    %v3772 = vshrl.u32 %v3771, 7
    %v3773 = vsub.s32 %v3770, %v3772
    %v3774 = vrot.slane %v3760, %v3773
    %v3775 = vcombine.low %v3720, %v3735
    %v3776 = vcombine.high %v3720, %v3735
    %v3778 = vunpack.c.l.s4 1934713408
    %v3779 = vunpack.c.0.s8 %v3778
    %v3780 = vlaneseq
    %v3781 = vshrl.u32 %v3780, 7
    %v3782 = vsub.s32 %v3779, %v3781
    %v3783 = vrot.slane %v3775, %v3782
    %v3785 = vunpack.c.l.s4 1934713408
    %v3786 = vunpack.c.0.s8 %v3785
    %v3787 = vlaneseq
    %v3788 = vshrl.u32 %v3787, 7
    %v3789 = vsub.s32 %v3786, %v3788
    %v3790 = vrot.slane %v3776, %v3789
    %v3791 = vcombine.low %v3727, %v3742
    %v3792 = vcombine.high %v3727, %v3742
    %v3794 = vunpack.c.l.s4 1934713408
    %v3795 = vunpack.c.0.s8 %v3794
    %v3796 = vlaneseq
    %v3797 = vshrl.u32 %v3796, 7
    %v3798 = vsub.s32 %v3795, %v3797
    %v3799 = vrot.slane %v3791, %v3798
    %v3801 = vunpack.c.l.s4 1934713408
    %v3802 = vunpack.c.0.s8 %v3801
    %v3803 = vlaneseq
    %v3804 = vshrl.u32 %v3803, 7
    %v3805 = vsub.s32 %v3802, %v3804
    %v3806 = vrot.slane %v3792, %v3805
    %v3807 = vcombine.low %v3751, %v3783
    %v3808 = vcombine.high %v3751, %v3783
    %v3809 = vcombine.low %v3758, %v3790
    %v3810 = vcombine.high %v3758, %v3790
    %v3811 = vcombine.low %v3767, %v3799
    %v3812 = vcombine.high %v3767, %v3799
    %v3813 = vcombine.low %v3774, %v3806
    %v3814 = vcombine.high %v3774, %v3806
    %v3815 = vcombine.low %v3672, %v3676
    %v3817 = vunpack.c.l.s4 1983009808
    %v3818 = vunpack.c.0.s8 %v3817
    %v3819 = vlaneseq
    %v3820 = vshrl.u32 %v3819, 7
    %v3821 = vsub.s32 %v3818, %v3820
    %v3822 = vrot.slane %v3815, %v3821
    %v3823 = vcombine.low %v3674, %v3678
    %v3825 = vunpack.c.l.s4 1983009808
    %v3826 = vunpack.c.0.s8 %v3825
    %v3827 = vlaneseq
    %v3828 = vshrl.u32 %v3827, 7
    %v3829 = vsub.s32 %v3826, %v3828
    %v3830 = vrot.slane %v3823, %v3829
    %v3831 = vsel %vm3656, %v3644, %v3668
    %v3833 = vunpack.c.l.s4 1983009808
    %v3834 = vunpack.c.0.s8 %v3833
    %v3835 = vlaneseq
    %v3836 = vshrl.u32 %v3835, 7
    %v3837 = vsub.s32 %v3834, %v3836
    %v3838 = vrot.slane %v3831, %v3837
    %v3839 = vsel %vm3658, %v3646, %v3670
    %v3841 = vunpack.c.l.s4 1983009808
    %v3842 = vunpack.c.0.s8 %v3841
    %v3843 = vlaneseq
    %v3844 = vshrl.u32 %v3843, 7
    %v3845 = vsub.s32 %v3842, %v3844
    %v3846 = vrot.slane %v3839, %v3845
    %v3847 = vcombine.low %v3822, %v3830
    %v3848 = vcombine.high %v3822, %v3830
    %v3850 = vunpack.c.l.s4 1934713408
    %v3851 = vunpack.c.0.s8 %v3850
    %v3852 = vlaneseq
    %v3853 = vshrl.u32 %v3852, 7
    %v3854 = vsub.s32 %v3851, %v3853
    %v3855 = vrot.slane %v3847, %v3854
    %v3857 = vunpack.c.l.s4 1934713408
    %v3858 = vunpack.c.0.s8 %v3857
    %v3859 = vlaneseq
    %v3860 = vshrl.u32 %v3859, 7
    %v3861 = vsub.s32 %v3858, %v3860
    %v3862 = vrot.slane %v3848, %v3861
    %v3863 = vcombine.low %v3838, %v3846
    %v3864 = vcombine.high %v3838, %v3846
    %v3866 = vunpack.c.l.s4 1934713408
    %v3867 = vunpack.c.0.s8 %v3866
    %v3868 = vlaneseq
    %v3869 = vshrl.u32 %v3868, 7
    %v3870 = vsub.s32 %v3867, %v3869
    %v3871 = vrot.slane %v3863, %v3870
    %v3873 = vunpack.c.l.s4 1934713408
    %v3874 = vunpack.c.0.s8 %v3873
    %v3875 = vlaneseq
    %v3876 = vshrl.u32 %v3875, 7
    %v3877 = vsub.s32 %v3874, %v3876
    %v3878 = vrot.slane %v3864, %v3877
    %v3879 = vcombine.low %v3855, %v3871
    %v3880 = vcombine.high %v3855, %v3871
    %v3881 = vcombine.low %v3862, %v3878
    %v3882 = vcombine.high %v3862, %v3878
    %3884 = vrot.lane.b32.xlu0 %v3808, 12
    %v3885 = vpop.permute.xlu0 %3884
    %3888 = vrot.lane.b32.xlu0 %v3809, 24
    %v3889 = vpop.permute.xlu0 %3888
    %3892 = vrot.lane.b32.xlu0 %v3810, 36
    %v3893 = vpop.permute.xlu0 %3892
    %3896 = vrot.lane.b32.xlu0 %v3811, 48
    %v3897 = vpop.permute.xlu0 %3896
    %3900 = vrot.lane.b32.xlu0 %v3812, 60
    %v3901 = vpop.permute.xlu0 %3900
    %3904 = vrot.lane.b32.xlu0 %v3813, 72
    %v3905 = vpop.permute.xlu0 %3904
    %3908 = vrot.lane.b32.xlu0 %v3814, 84
    %v3909 = vpop.permute.xlu0 %3908
    %3912 = vrot.lane.b32.xlu0 %v3879, 96
    %v3913 = vpop.permute.xlu0 %3912
    %3916 = vrot.lane.b32.xlu0 %v3880, 108
    %v3917 = vpop.permute.xlu0 %3916
    %3920 = vrot.lane.b32.xlu0 %v3881, 120
    %v3921 = vpop.permute.xlu0 %3920
    %3924 = vrot.lane.b32.xlu0 %v3882, 4
    %v3925 = vpop.permute.xlu0 %3924
    %v3927 = vsel %vm904, %v3807, %v3885
    %v3928 = vsel %vm906, %v3927, %v3889
    %v3929 = vsel %vm908, %v3928, %v3893
    %v3930 = vsel %vm910, %v3929, %v3897
    %v3931 = vsel %vm912, %v3930, %v3901
    %v3932 = vsel %vm914, %v3931, %v3905
    %v3933 = vsel %vm916, %v3932, %v3909
    %v3934 = vsel %vm918, %v3933, %v3913
    %v3935 = vsel %vm920, %v3934, %v3917
    %v3936 = vsel %vm922, %v3935, %v3921
    %v3937 = vsel %vm97, %v3921, %v3925
    %v3939 = vsel %vm925, %v3123, 0
    %v3942 = vsel %vm929, %v3936, 0
    %v3945 = vsel %vm929, %v3937, 0
    %3947 = vmatprep.subr.mxu0 %v3945
    %3948 = vmatpush1.msra.mxu0 %v3942
    %3949 = vmatprep.subr.mxu0 0.0
    %3950 = vmatpush1.msra.mxu0 0.0
    %3951 = vmatprep.subr.mxu0 0.0
    %3952 = vmatpush1.msra.mxu0 0.0
    %3953 = vmatprep.subr.mxu0 0.0
    %3954 = vmatpush1.msra.mxu0 0.0
    %3955 = vmatprep.subr.mxu0 0.0
    %3956 = vmatpush1.msra.mxu0 0.0
    %3957 = vmatprep.subr.mxu0 0.0
    %3958 = vmatpush1.msra.mxu0 0.0
    %3959 = vmatprep.subr.mxu0 0.0
    %3960 = vmatpush1.msra.mxu0 0.0
    %3961 = vmatprep.subr.mxu0 0.0
    %3962 = vmatpush1.msra.mxu0 0.0
    %3963 = vmatprep.subr.mxu0 0.0
    %3964 = vmatpush1.msra.mxu0 0.0
    %3965 = vmatprep.subr.mxu0 0.0
    %3966 = vmatpush1.msra.mxu0 0.0
    %3967 = vmatprep.subr.mxu0 0.0
    %3968 = vmatpush1.msra.mxu0 0.0
    %3969 = vmatprep.subr.mxu0 0.0
    %3970 = vmatpush1.msra.mxu0 0.0
    %3971 = vmatprep.subr.mxu0 0.0
    %3972 = vmatpush1.msra.mxu0 0.0
    %3973 = vmatprep.subr.mxu0 0.0
    %3974 = vmatpush1.msra.mxu0 0.0
    %3975 = vmatprep.subr.mxu0 0.0
    %3976 = vmatpush1.msra.mxu0 0.0
    %3977 = vmatprep.subr.mxu0 0.0
    %3978 = vmatpush1.msra.mxu0 0.0
    %3979 = vmatprep.subr.mxu0 0.0
    %3980 = vmatpush1.msra.mxu0 0.0
    %3981 = vmatprep.subr.mxu0 0.0
    %3982 = vmatpush1.msra.mxu0 0.0
    %3983 = vmatprep.subr.mxu0 0.0
    %3984 = vmatpush1.msra.mxu0 0.0
    %3985 = vmatprep.subr.mxu0 0.0
    %3986 = vmatpush1.msra.mxu0 0.0
    %3987 = vmatprep.subr.mxu0 0.0
    %3988 = vmatpush1.msra.mxu0 0.0
    %3989 = vmatprep.subr.mxu0 0.0
    %3990 = vmatpush1.msra.mxu0 0.0
    %3991 = vmatprep.subr.mxu0 0.0
    %3992 = vmatpush1.msra.mxu0 0.0
    %3993 = vmatprep.subr.mxu0 0.0
    %3994 = vmatpush1.msra.mxu0 0.0
    %3995 = vmatprep.subr.mxu0 0.0
    %3996 = vmatpush1.msra.mxu0 0.0
    %3997 = vmatprep.subr.mxu0 0.0
    %3998 = vmatpush1.msra.mxu0 0.0
    %3999 = vmatprep.subr.mxu0 0.0
    %4000 = vmatpush1.msra.mxu0 0.0
    %4001 = vmatprep.subr.mxu0 0.0
    %4002 = vmatpush1.msra.mxu0 0.0
    %4003 = vmatprep.subr.mxu0 0.0
    %4004 = vmatpush1.msra.mxu0 0.0
    %4005 = vmatprep.subr.mxu0 0.0
    %4006 = vmatpush1.msra.mxu0 0.0
    %4007 = vmatprep.subr.mxu0 0.0
    %4008 = vmatpush1.msra.mxu0 0.0
    %4009 = vmatprep.subr.mxu0 0.0
    %4010 = vmatpush1.msra.mxu0 0.0
    %4011 = vmatprep.mubr.f32.mxu0 0.0
    %4012 = vmatmul.mubr.f32.gmra.mrb[0].mxu0 %v3939
    %v4013 = vpop.f32.mrb[0].mxu0
    %v4014 = vadd.f32 0.0, %v4013
    %v4015 = vpop.f32.mrb[0].mxu0
    %v4016 = vadd.f32 0.0, %v4015
    %4017 = vdwg.mxu0
    %v4018 = vsel %vm1029, %v4014, -1e+09
    %v4019 = vsel %vm1030, %v4016, -1e+09
    %4021 = vrot.lane.b32.xlu0 %v4018, 116
    %v4022 = vpop.permute.xlu0 %4021
    %4024 = vrot.lane.b32.xlu0 %v4018, 104
    %v4025 = vpop.permute.xlu0 %4024
    %4027 = vrot.lane.b32.xlu0 %v4018, 92
    %v4028 = vpop.permute.xlu0 %4027
    %4030 = vrot.lane.b32.xlu0 %v4018, 80
    %v4031 = vpop.permute.xlu0 %4030
    %4033 = vrot.lane.b32.xlu0 %v4018, 68
    %v4034 = vpop.permute.xlu0 %4033
    %4036 = vrot.lane.b32.xlu0 %v4018, 56
    %v4037 = vpop.permute.xlu0 %4036
    %4039 = vrot.lane.b32.xlu0 %v4018, 44
    %v4040 = vpop.permute.xlu0 %4039
    %4042 = vrot.lane.b32.xlu0 %v4018, 32
    %v4043 = vpop.permute.xlu0 %4042
    %4045 = vrot.lane.b32.xlu0 %v4018, 20
    %v4046 = vpop.permute.xlu0 %4045
    %4049 = vrot.lane.b32.xlu0 %v4018, 8
    %v4050 = vpop.permute.xlu0 %4049
    %4051 = vrot.lane.b32.xlu0 %v4019, 8
    %v4052 = vpop.permute.xlu0 %4051
    %v4053 = vsel %vm429, %v4050, %v4052
    %4055 = vrot.lane.b32.xlu0 %v4019, 124
    %v4056 = vpop.permute.xlu0 %4055
    %v4058 = vcombine.low %v4018, %v4025
    %v4060 = vunpack.c.l.s4 1983009808
    %v4061 = vunpack.c.0.s8 %v4060
    %v4062 = vlaneseq
    %v4063 = vshrl.u32 %v4062, 7
    %v4064 = vsub.s32 %v4061, %v4063
    %v4065 = vrot.slane %v4058, %v4064
    %v4066 = vcombine.low %v4022, %v4028
    %v4068 = vunpack.c.l.s4 1983009808
    %v4069 = vunpack.c.0.s8 %v4068
    %v4070 = vlaneseq
    %v4071 = vshrl.u32 %v4070, 7
    %v4072 = vsub.s32 %v4069, %v4071
    %v4073 = vrot.slane %v4066, %v4072
    %v4074 = vcombine.low %v4031, %v4037
    %v4076 = vunpack.c.l.s4 1983009808
    %v4077 = vunpack.c.0.s8 %v4076
    %v4078 = vlaneseq
    %v4079 = vshrl.u32 %v4078, 7
    %v4080 = vsub.s32 %v4077, %v4079
    %v4081 = vrot.slane %v4074, %v4080
    %v4082 = vcombine.low %v4034, %v4040
    %v4084 = vunpack.c.l.s4 1983009808
    %v4085 = vunpack.c.0.s8 %v4084
    %v4086 = vlaneseq
    %v4087 = vshrl.u32 %v4086, 7
    %v4088 = vsub.s32 %v4085, %v4087
    %v4089 = vrot.slane %v4082, %v4088
    %v4090 = vcombine.low %v4065, %v4073
    %v4092 = vunpack.c.l.s4 1934713408
    %v4093 = vunpack.c.0.s8 %v4092
    %v4094 = vlaneseq
    %v4095 = vshrl.u32 %v4094, 7
    %v4096 = vsub.s32 %v4093, %v4095
    %v4097 = vrot.slane %v4090, %v4096
    %v4098 = vcombine.low %v4081, %v4089
    %v4100 = vunpack.c.l.s4 1934713408
    %v4101 = vunpack.c.0.s8 %v4100
    %v4102 = vlaneseq
    %v4103 = vshrl.u32 %v4102, 7
    %v4104 = vsub.s32 %v4101, %v4103
    %v4105 = vrot.slane %v4098, %v4104
    %v4106 = vcombine.low %v4097, %v4105
    %v4107 = vcombine.high %v4097, %v4105
    %v4108 = vcombine.low %v4043, %v4053
    %v4110 = vunpack.c.l.s4 1983009808
    %v4111 = vunpack.c.0.s8 %v4110
    %v4112 = vlaneseq
    %v4113 = vshrl.u32 %v4112, 7
    %v4114 = vsub.s32 %v4111, %v4113
    %v4115 = vrot.slane %v4108, %v4114
    %v4116 = vcombine.low %v4046, %v4056
    %v4118 = vunpack.c.l.s4 1983009808
    %v4119 = vunpack.c.0.s8 %v4118
    %v4120 = vlaneseq
    %v4121 = vshrl.u32 %v4120, 7
    %v4122 = vsub.s32 %v4119, %v4121
    %v4123 = vrot.slane %v4116, %v4122
    %v4124 = vcombine.low %v4115, %v4123
    %v4126 = vunpack.c.l.s4 1934713408
    %v4127 = vunpack.c.0.s8 %v4126
    %v4128 = vlaneseq
    %v4129 = vshrl.u32 %v4128, 7
    %v4130 = vsub.s32 %v4127, %v4129
    %v4131 = vrot.slane %v4124, %v4130
    %v4132 = vcombine.high %v4131, 0.0
    %v4133 = vsel %vm904, %v4106, -inf
    %4134 = vmax.xlane.f32.xlu0 %v4133
    %v4135 = vpop.xlane.xlu0 %4134
    %v4136 = vsel %vm1149, %v4131, -inf
    %4137 = vmax.xlane.f32.xlu0 %v4136
    %v4138 = vpop.xlane.xlu0 %4137
    %v4139 = vsel %vm904, %v4107, -inf
    %4140 = vmax.xlane.f32.xlu0 %v4139
    %v4141 = vpop.xlane.xlu0 %4140
    %v4142 = vsel %vm1149, %v4132, -inf
    %4143 = vmax.xlane.f32.xlu0 %v4142
    %v4144 = vpop.xlane.xlu0 %4143
    %v4145 = vsub.f32 %v4106, %v4135
    %v4146 = vsub.f32 %v4131, %v4138
    %v4147 = vsub.f32 %v4107, %v4141
    %v4148 = vsub.f32 %v4132, %v4144
    %v4149 = vmul.f32 %v4145, 1.442695
    %v4150 = vpow.pop %v4149
    %v4151 = vmul.f32 %v4146, 1.442695
    %v4152 = vpow.pop %v4151
    %v4153 = vmul.f32 %v4147, 1.442695
    %v4154 = vpow.pop %v4153
    %v4155 = vmul.f32 %v4148, 1.442695
    %v4156 = vpow.pop %v4155
    %v4157 = vsel %vm904, %v4150, 0.0
    %4158 = vadd.xlane.f32.xlu0 %v4157
    %v4159 = vpop.xlane.xlu0 %4158
    %v4160 = vsel %vm1149, %v4152, 0.0
    %4161 = vadd.xlane.f32.xlu0 %v4160
    %v4162 = vpop.xlane.xlu0 %4161
    %v4163 = vsel %vm904, %v4154, 0.0
    %4164 = vadd.xlane.f32.xlu0 %v4163
    %v4165 = vpop.xlane.xlu0 %4164
    %v4166 = vsel %vm1149, %v4156, 0.0
    %4167 = vadd.xlane.f32.xlu0 %v4166
    %v4168 = vpop.xlane.xlu0 %4167
    %v4169 = vrcp.pop %v4159
    %v4170 = vrcp.pop %v4162
    %v4171 = vrcp.pop %v4165
    %v4172 = vrcp.pop %v4168
    %v4173 = vmul.f32 %v4150, %v4169
    %v4174 = vmul.f32 %v4152, %v4170
    %v4175 = vmul.f32 %v4154, %v4171
    %v4176 = vmul.f32 %v4156, %v4172
    %v4177 = vpack.c.bf16 %v4174, %v4173
    %v4178 = vpack.c.bf16 %v4176, %v4175
    %v4179 = vpack.c.bf16 %v3211, %v3211
    %v4181 = vsel %vm904, %v4179, 0
    %v4184 = vsel %vm904, %v4177, 0
    %4186 = vmatprep.subr.bf16.mxu0 0
    %4187 = vmatpush1.bf16.xpose.msra.mxu0 %v4184
    %4188 = vmatprep.subr.bf16.mxu0 0
    %4189 = vmatpush1.bf16.xpose.msra.mxu0 0
    %4190 = vmatprep.subr.bf16.mxu0 0
    %4191 = vmatpush1.bf16.xpose.msra.mxu0 0
    %4192 = vmatprep.subr.bf16.mxu0 0
    %4193 = vmatpush1.bf16.xpose.msra.mxu0 0
    %4194 = vmatprep.subr.bf16.mxu0 0
    %4195 = vmatpush1.bf16.xpose.msra.mxu0 0
    %4196 = vmatprep.subr.bf16.mxu0 0
    %4197 = vmatpush1.bf16.xpose.msra.mxu0 0
    %4198 = vmatprep.subr.bf16.mxu0 0
    %4199 = vmatpush1.bf16.xpose.msra.mxu0 0
    %4200 = vmatprep.subr.bf16.mxu0 0
    %4201 = vmatpush1.bf16.xpose.msra.mxu0 0
    %4202 = vmatprep.subr.bf16.mxu0 0
    %4203 = vmatpush1.bf16.xpose.msra.mxu0 0
    %4204 = vmatprep.subr.bf16.mxu0 0
    %4205 = vmatpush1.bf16.xpose.msra.mxu0 0
    %4206 = vmatprep.subr.bf16.mxu0 0
    %4207 = vmatpush1.bf16.xpose.msra.mxu0 0
    %4208 = vmatprep.subr.bf16.mxu0 0
    %4209 = vmatpush1.bf16.xpose.msra.mxu0 0
    %4210 = vmatprep.subr.bf16.mxu0 0
    %4211 = vmatpush1.bf16.xpose.msra.mxu0 0
    %4212 = vmatprep.subr.bf16.mxu0 0
    %4213 = vmatpush1.bf16.xpose.msra.mxu0 0
    %4214 = vmatprep.subr.bf16.mxu0 0
    %4215 = vmatpush1.bf16.xpose.msra.mxu0 0
    %4216 = vmatprep.subr.bf16.mxu0 0
    %4217 = vmatpush1.bf16.xpose.msra.mxu0 0
    %4218 = vmatprep.mubr.bf16.mxu0 0
    %4219 = vmatmul.mubr.bf16.gmra.mrb[0].mxu0 %v4181
    %v4220 = vpop.f32.mrb[0].mxu0
    %v4221 = vadd.f32 0.0, %v4220
    %v4222 = vpop.f32.mrb[0].mxu0
    %v4223 = vpop.f32.mrb[0].mxu0
    %v4224 = vpop.f32.mrb[0].mxu0
    %4225 = vdwg.mxu0
    %v4226 = vshrl.u32 %v4179, 16
    %v4228 = vrot.slane %v4226, 1
    %v4229 = vshll.u32 %v4179, 16
    %v4231 = vrot.slane %v4229, 2
    %v4232 = vor.u32 %v4228, %v4231
    %v4234 = vsel %vm904, %v4232, 0
    %v4237 = vsel %vm904, %v4178, 0
    %4239 = vmatprep.subr.bf16.mxu0 0
    %4240 = vmatpush1.bf16.xpose.msra.mxu0 %v4237
    %4241 = vmatprep.subr.bf16.mxu0 0
    %4242 = vmatpush1.bf16.xpose.msra.mxu0 0
    %4243 = vmatprep.subr.bf16.mxu0 0
    %4244 = vmatpush1.bf16.xpose.msra.mxu0 0
    %4245 = vmatprep.subr.bf16.mxu0 0
    %4246 = vmatpush1.bf16.xpose.msra.mxu0 0
    %4247 = vmatprep.subr.bf16.mxu0 0
    %4248 = vmatpush1.bf16.xpose.msra.mxu0 0
    %4249 = vmatprep.subr.bf16.mxu0 0
    %4250 = vmatpush1.bf16.xpose.msra.mxu0 0
    %4251 = vmatprep.subr.bf16.mxu0 0
    %4252 = vmatpush1.bf16.xpose.msra.mxu0 0
    %4253 = vmatprep.subr.bf16.mxu0 0
    %4254 = vmatpush1.bf16.xpose.msra.mxu0 0
    %4255 = vmatprep.subr.bf16.mxu0 0
    %4256 = vmatpush1.bf16.xpose.msra.mxu0 0
    %4257 = vmatprep.subr.bf16.mxu0 0
    %4258 = vmatpush1.bf16.xpose.msra.mxu0 0
    %4259 = vmatprep.subr.bf16.mxu0 0
    %4260 = vmatpush1.bf16.xpose.msra.mxu0 0
    %4261 = vmatprep.subr.bf16.mxu0 0
    %4262 = vmatpush1.bf16.xpose.msra.mxu0 0
    %4263 = vmatprep.subr.bf16.mxu0 0
    %4264 = vmatpush1.bf16.xpose.msra.mxu0 0
    %4265 = vmatprep.subr.bf16.mxu0 0
    %4266 = vmatpush1.bf16.xpose.msra.mxu0 0
    %4267 = vmatprep.subr.bf16.mxu0 0
    %4268 = vmatpush1.bf16.xpose.msra.mxu0 0
    %4269 = vmatprep.subr.bf16.mxu0 0
    %4270 = vmatpush1.bf16.xpose.msra.mxu0 0
    %4271 = vmatprep.mubr.bf16.mxu0 0
    %4272 = vmatmul.mubr.bf16.gmra.mrb[0].mxu0 %v4234
    %v4273 = vpop.f32.mrb[0].mxu0
    %v4274 = vadd.f32 0.0, %v4273
    %v4275 = vpop.f32.mrb[0].mxu0
    %v4276 = vpop.f32.mrb[0].mxu0
    %v4277 = vpop.f32.mrb[0].mxu0
    %4278 = vdwg.mxu0
    %v4280 = vrot.slane %v4274, 5
    %v4282 = vsel %vm1296, %v4221, %v4280
    %4284 = vset.pattern.permute.xlu0 0
    %4285 = vperm.xlu0 %4284, %v3124
    %v4286 = vpop.permute.xlu0 %4285
    %v4288 = vadd.f32 %v4282, %v4286
    %v4289 = vld [vmem:[#allocation8 + $0xd8] sm:$0x3f]
    %v4290 = vld [vmem:[#allocation8 + $0xe0] sm:$0x3f]
    %v4291 = vld [vmem:[#allocation8 + $0xe8] sm:$0x3f]
    %v4293 = vsel %vm904, %v4288, 0
    %4295 = vmatprep.subr.mxu0 0.0
    %4296 = vmatpush1.msra.mxu0 %v74
    %4297 = vmatprep.subr.mxu0 0.0
    %4298 = vmatpush1.msra.mxu0 %v1311
    %4299 = vmatprep.subr.mxu0 0.0
    %4300 = vmatpush1.msra.mxu0 0.0
    %4301 = vmatprep.subr.mxu0 0.0
    %4302 = vmatpush1.msra.mxu0 0.0
    %4303 = vmatprep.subr.mxu0 0.0
    %4304 = vmatpush1.msra.mxu0 0.0
    %4305 = vmatprep.subr.mxu0 0.0
    %4306 = vmatpush1.msra.mxu0 0.0
    %4307 = vmatprep.subr.mxu0 0.0
    %4308 = vmatpush1.msra.mxu0 0.0
    %4309 = vmatprep.subr.mxu0 0.0
    %4310 = vmatpush1.msra.mxu0 0.0
    %4311 = vmatprep.subr.mxu0 0.0
    %4312 = vmatpush1.msra.mxu0 0.0
    %4313 = vmatprep.subr.mxu0 0.0
    %4314 = vmatpush1.msra.mxu0 0.0
    %4315 = vmatprep.subr.mxu0 0.0
    %4316 = vmatpush1.msra.mxu0 0.0
    %4317 = vmatprep.subr.mxu0 0.0
    %4318 = vmatpush1.msra.mxu0 0.0
    %4319 = vmatprep.subr.mxu0 0.0
    %4320 = vmatpush1.msra.mxu0 0.0
    %4321 = vmatprep.subr.mxu0 0.0
    %4322 = vmatpush1.msra.mxu0 0.0
    %4323 = vmatprep.subr.mxu0 0.0
    %4324 = vmatpush1.msra.mxu0 0.0
    %4325 = vmatprep.subr.mxu0 0.0
    %4326 = vmatpush1.msra.mxu0 0.0
    %4327 = vmatprep.subr.mxu0 0.0
    %4328 = vmatpush1.msra.mxu0 0.0
    %4329 = vmatprep.subr.mxu0 0.0
    %4330 = vmatpush1.msra.mxu0 0.0
    %4331 = vmatprep.subr.mxu0 0.0
    %4332 = vmatpush1.msra.mxu0 0.0
    %4333 = vmatprep.subr.mxu0 0.0
    %4334 = vmatpush1.msra.mxu0 0.0
    %4335 = vmatprep.subr.mxu0 0.0
    %4336 = vmatpush1.msra.mxu0 0.0
    %4337 = vmatprep.subr.mxu0 0.0
    %4338 = vmatpush1.msra.mxu0 0.0
    %4339 = vmatprep.subr.mxu0 0.0
    %4340 = vmatpush1.msra.mxu0 0.0
    %4341 = vmatprep.subr.mxu0 0.0
    %4342 = vmatpush1.msra.mxu0 0.0
    %4343 = vmatprep.subr.mxu0 0.0
    %4344 = vmatpush1.msra.mxu0 0.0
    %4345 = vmatprep.subr.mxu0 0.0
    %4346 = vmatpush1.msra.mxu0 0.0
    %4347 = vmatprep.subr.mxu0 0.0
    %4348 = vmatpush1.msra.mxu0 0.0
    %4349 = vmatprep.subr.mxu0 0.0
    %4350 = vmatpush1.msra.mxu0 0.0
    %4351 = vmatprep.subr.mxu0 0.0
    %4352 = vmatpush1.msra.mxu0 0.0
    %4353 = vmatprep.subr.mxu0 0.0
    %4354 = vmatpush1.msra.mxu0 0.0
    %4355 = vmatprep.subr.mxu0 0.0
    %4356 = vmatpush1.msra.mxu0 0.0
    %4357 = vmatprep.subr.mxu0 0.0
    %4358 = vmatpush1.msra.mxu0 0.0
    %4359 = vmatprep.mubr.f32.mxu0 0.0
    %4360 = vmatmul.mubr.f32.gmra.mrb[0].mxu0 %v4293
    %v4361 = vpop.f32.mrb[0].mxu0
    %v4362 = vadd.f32 0.0, %v4361
    %v4363 = vpop.f32.mrb[0].mxu0
    %4364 = vdwg.mxu0
    %v4366 = vsel %vm1383, %v4362, 0
    %4368 = vmatprep.subr.mxu0 0.0
    %4369 = vmatpush1.msra.mxu0 %v1388
    %4370 = vmatprep.subr.mxu0 0.0
    %4371 = vmatpush1.msra.mxu0 0.0
    %4372 = vmatprep.subr.mxu0 0.0
    %4373 = vmatpush1.msra.mxu0 0.0
    %4374 = vmatprep.subr.mxu0 0.0
    %4375 = vmatpush1.msra.mxu0 0.0
    %4376 = vmatprep.subr.mxu0 0.0
    %4377 = vmatpush1.msra.mxu0 0.0
    %4378 = vmatprep.subr.mxu0 0.0
    %4379 = vmatpush1.msra.mxu0 0.0
    %4380 = vmatprep.subr.mxu0 0.0
    %4381 = vmatpush1.msra.mxu0 0.0
    %4382 = vmatprep.subr.mxu0 0.0
    %4383 = vmatpush1.msra.mxu0 0.0
    %4384 = vmatprep.subr.mxu0 0.0
    %4385 = vmatpush1.msra.mxu0 0.0
    %4386 = vmatprep.subr.mxu0 0.0
    %4387 = vmatpush1.msra.mxu0 0.0
    %4388 = vmatprep.subr.mxu0 0.0
    %4389 = vmatpush1.msra.mxu0 0.0
    %4390 = vmatprep.subr.mxu0 0.0
    %4391 = vmatpush1.msra.mxu0 0.0
    %4392 = vmatprep.subr.mxu0 0.0
    %4393 = vmatpush1.msra.mxu0 0.0
    %4394 = vmatprep.subr.mxu0 0.0
    %4395 = vmatpush1.msra.mxu0 0.0
    %4396 = vmatprep.subr.mxu0 0.0
    %4397 = vmatpush1.msra.mxu0 0.0
    %4398 = vmatprep.subr.mxu0 0.0
    %4399 = vmatpush1.msra.mxu0 0.0
    %4400 = vmatprep.subr.mxu0 0.0
    %4401 = vmatpush1.msra.mxu0 0.0
    %4402 = vmatprep.subr.mxu0 0.0
    %4403 = vmatpush1.msra.mxu0 0.0
    %4404 = vmatprep.subr.mxu0 0.0
    %4405 = vmatpush1.msra.mxu0 0.0
    %4406 = vmatprep.subr.mxu0 0.0
    %4407 = vmatpush1.msra.mxu0 0.0
    %4408 = vmatprep.subr.mxu0 0.0
    %4409 = vmatpush1.msra.mxu0 0.0
    %4410 = vmatprep.subr.mxu0 0.0
    %4411 = vmatpush1.msra.mxu0 0.0
    %4412 = vmatprep.subr.mxu0 0.0
    %4413 = vmatpush1.msra.mxu0 0.0
    %4414 = vmatprep.subr.mxu0 0.0
    %4415 = vmatpush1.msra.mxu0 0.0
    %4416 = vmatprep.subr.mxu0 0.0
    %4417 = vmatpush1.msra.mxu0 0.0
    %4418 = vmatprep.subr.mxu0 0.0
    %4419 = vmatpush1.msra.mxu0 0.0
    %4420 = vmatprep.subr.mxu0 0.0
    %4421 = vmatpush1.msra.mxu0 0.0
    %4422 = vmatprep.subr.mxu0 0.0
    %4423 = vmatpush1.msra.mxu0 0.0
    %4424 = vmatprep.subr.mxu0 0.0
    %4425 = vmatpush1.msra.mxu0 0.0
    %4426 = vmatprep.subr.mxu0 0.0
    %4427 = vmatpush1.msra.mxu0 0.0
    %4428 = vmatprep.subr.mxu0 0.0
    %4429 = vmatpush1.msra.mxu0 0.0
    %4430 = vmatprep.subr.mxu0 0.0
    %4431 = vmatpush1.msra.mxu0 0.0
    %4432 = vmatprep.mubr.f32.mxu0 0.0
    %4433 = vmatmul.mubr.f32.gmra.mrb[0].mxu0 %v4366
    %v4434 = vpop.f32.mrb[0].mxu0
    %v4435 = vadd.f32 0.0, %v4434
    %v4436 = vpop.f32.mrb[0].mxu0
    %4437 = vdwg.mxu0
    %4439 = vset.pattern.permute.xlu0 0
    %4440 = vperm.xlu0 %4439, %v4291
    %v4441 = vpop.permute.xlu0 %4440
    %v4443 = vmul.f32 %v4435, %v4441
    %v4444 = vsub.f32 %v4288, %v4443
    %v4445 = vmul.f32 %v4444, %v4444
    %v4447 = vsel %vm904, %v4445, 0
    %4449 = vmatprep.subr.mxu0 0.0
    %4450 = vmatpush1.msra.mxu0 %v74
    %4451 = vmatprep.subr.mxu0 0.0
    %4452 = vmatpush1.msra.mxu0 %v1311
    %4453 = vmatprep.subr.mxu0 0.0
    %4454 = vmatpush1.msra.mxu0 0.0
    %4455 = vmatprep.subr.mxu0 0.0
    %4456 = vmatpush1.msra.mxu0 0.0
    %4457 = vmatprep.subr.mxu0 0.0
    %4458 = vmatpush1.msra.mxu0 0.0
    %4459 = vmatprep.subr.mxu0 0.0
    %4460 = vmatpush1.msra.mxu0 0.0
    %4461 = vmatprep.subr.mxu0 0.0
    %4462 = vmatpush1.msra.mxu0 0.0
    %4463 = vmatprep.subr.mxu0 0.0
    %4464 = vmatpush1.msra.mxu0 0.0
    %4465 = vmatprep.subr.mxu0 0.0
    %4466 = vmatpush1.msra.mxu0 0.0
    %4467 = vmatprep.subr.mxu0 0.0
    %4468 = vmatpush1.msra.mxu0 0.0
    %4469 = vmatprep.subr.mxu0 0.0
    %4470 = vmatpush1.msra.mxu0 0.0
    %4471 = vmatprep.subr.mxu0 0.0
    %4472 = vmatpush1.msra.mxu0 0.0
    %4473 = vmatprep.subr.mxu0 0.0
    %4474 = vmatpush1.msra.mxu0 0.0
    %4475 = vmatprep.subr.mxu0 0.0
    %4476 = vmatpush1.msra.mxu0 0.0
    %4477 = vmatprep.subr.mxu0 0.0
    %4478 = vmatpush1.msra.mxu0 0.0
    %4479 = vmatprep.subr.mxu0 0.0
    %4480 = vmatpush1.msra.mxu0 0.0
    %4481 = vmatprep.subr.mxu0 0.0
    %4482 = vmatpush1.msra.mxu0 0.0
    %4483 = vmatprep.subr.mxu0 0.0
    %4484 = vmatpush1.msra.mxu0 0.0
    %4485 = vmatprep.subr.mxu0 0.0
    %4486 = vmatpush1.msra.mxu0 0.0
    %4487 = vmatprep.subr.mxu0 0.0
    %4488 = vmatpush1.msra.mxu0 0.0
    %4489 = vmatprep.subr.mxu0 0.0
    %4490 = vmatpush1.msra.mxu0 0.0
    %4491 = vmatprep.subr.mxu0 0.0
    %4492 = vmatpush1.msra.mxu0 0.0
    %4493 = vmatprep.subr.mxu0 0.0
    %4494 = vmatpush1.msra.mxu0 0.0
    %4495 = vmatprep.subr.mxu0 0.0
    %4496 = vmatpush1.msra.mxu0 0.0
    %4497 = vmatprep.subr.mxu0 0.0
    %4498 = vmatpush1.msra.mxu0 0.0
    %4499 = vmatprep.subr.mxu0 0.0
    %4500 = vmatpush1.msra.mxu0 0.0
    %4501 = vmatprep.subr.mxu0 0.0
    %4502 = vmatpush1.msra.mxu0 0.0
    %4503 = vmatprep.subr.mxu0 0.0
    %4504 = vmatpush1.msra.mxu0 0.0
    %4505 = vmatprep.subr.mxu0 0.0
    %4506 = vmatpush1.msra.mxu0 0.0
    %4507 = vmatprep.subr.mxu0 0.0
    %4508 = vmatpush1.msra.mxu0 0.0
    %4509 = vmatprep.subr.mxu0 0.0
    %4510 = vmatpush1.msra.mxu0 0.0
    %4511 = vmatprep.subr.mxu0 0.0
    %4512 = vmatpush1.msra.mxu0 0.0
    %4513 = vmatprep.mubr.f32.mxu0 0.0
    %4514 = vmatmul.mubr.f32.gmra.mrb[0].mxu0 %v4447
    %v4515 = vpop.f32.mrb[0].mxu0
    %v4516 = vadd.f32 1e-05, %v4515
    %v4517 = vpop.f32.mrb[0].mxu0
    %4518 = vdwg.mxu0
    %v4519 = vrsqrt.pop %v4516
    %v4521 = vsel %vm1383, %v4519, 0
    %4523 = vmatprep.subr.mxu0 0.0
    %4524 = vmatpush1.msra.mxu0 %v1388
    %4525 = vmatprep.subr.mxu0 0.0
    %4526 = vmatpush1.msra.mxu0 0.0
    %4527 = vmatprep.subr.mxu0 0.0
    %4528 = vmatpush1.msra.mxu0 0.0
    %4529 = vmatprep.subr.mxu0 0.0
    %4530 = vmatpush1.msra.mxu0 0.0
    %4531 = vmatprep.subr.mxu0 0.0
    %4532 = vmatpush1.msra.mxu0 0.0
    %4533 = vmatprep.subr.mxu0 0.0
    %4534 = vmatpush1.msra.mxu0 0.0
    %4535 = vmatprep.subr.mxu0 0.0
    %4536 = vmatpush1.msra.mxu0 0.0
    %4537 = vmatprep.subr.mxu0 0.0
    %4538 = vmatpush1.msra.mxu0 0.0
    %4539 = vmatprep.subr.mxu0 0.0
    %4540 = vmatpush1.msra.mxu0 0.0
    %4541 = vmatprep.subr.mxu0 0.0
    %4542 = vmatpush1.msra.mxu0 0.0
    %4543 = vmatprep.subr.mxu0 0.0
    %4544 = vmatpush1.msra.mxu0 0.0
    %4545 = vmatprep.subr.mxu0 0.0
    %4546 = vmatpush1.msra.mxu0 0.0
    %4547 = vmatprep.subr.mxu0 0.0
    %4548 = vmatpush1.msra.mxu0 0.0
    %4549 = vmatprep.subr.mxu0 0.0
    %4550 = vmatpush1.msra.mxu0 0.0
    %4551 = vmatprep.subr.mxu0 0.0
    %4552 = vmatpush1.msra.mxu0 0.0
    %4553 = vmatprep.subr.mxu0 0.0
    %4554 = vmatpush1.msra.mxu0 0.0
    %4555 = vmatprep.subr.mxu0 0.0
    %4556 = vmatpush1.msra.mxu0 0.0
    %4557 = vmatprep.subr.mxu0 0.0
    %4558 = vmatpush1.msra.mxu0 0.0
    %4559 = vmatprep.subr.mxu0 0.0
    %4560 = vmatpush1.msra.mxu0 0.0
    %4561 = vmatprep.subr.mxu0 0.0
    %4562 = vmatpush1.msra.mxu0 0.0
    %4563 = vmatprep.subr.mxu0 0.0
    %4564 = vmatpush1.msra.mxu0 0.0
    %4565 = vmatprep.subr.mxu0 0.0
    %4566 = vmatpush1.msra.mxu0 0.0
    %4567 = vmatprep.subr.mxu0 0.0
    %4568 = vmatpush1.msra.mxu0 0.0
    %4569 = vmatprep.subr.mxu0 0.0
    %4570 = vmatpush1.msra.mxu0 0.0
    %4571 = vmatprep.subr.mxu0 0.0
    %4572 = vmatpush1.msra.mxu0 0.0
    %4573 = vmatprep.subr.mxu0 0.0
    %4574 = vmatpush1.msra.mxu0 0.0
    %4575 = vmatprep.subr.mxu0 0.0
    %4576 = vmatpush1.msra.mxu0 0.0
    %4577 = vmatprep.subr.mxu0 0.0
    %4578 = vmatpush1.msra.mxu0 0.0
    %4579 = vmatprep.subr.mxu0 0.0
    %4580 = vmatpush1.msra.mxu0 0.0
    %4581 = vmatprep.subr.mxu0 0.0
    %4582 = vmatpush1.msra.mxu0 0.0
    %4583 = vmatprep.subr.mxu0 0.0
    %4584 = vmatpush1.msra.mxu0 0.0
    %4585 = vmatprep.subr.mxu0 0.0
    %4586 = vmatpush1.msra.mxu0 0.0
    %4587 = vmatprep.mubr.f32.mxu0 0.0
    %4588 = vmatmul.mubr.f32.gmra.mrb[0].mxu0 %v4521
    %v4589 = vpop.f32.mrb[0].mxu0
    %v4590 = vadd.f32 0.0, %v4589
    %v4591 = vpop.f32.mrb[0].mxu0
    %4592 = vdwg.mxu0
    %4594 = vset.pattern.permute.xlu0 0
    %4595 = vperm.xlu0 %4594, %v4289
    %v4596 = vpop.permute.xlu0 %4595
    %v4598 = vmul.f32 %v4596, %v4444
    %v4599 = vmul.f32 %v4598, %v4590
    %4601 = vset.pattern.permute.xlu0 0
    %4602 = vperm.xlu0 %4601, %v4290
    %v4603 = vpop.permute.xlu0 %4602
    %v4605 = vadd.f32 %v4599, %v4603
    %v4606 = vmax.f32 %v4605, 0.0
    %v4607 = vsel %vm904, %v72, 0
    %v4610 = vsel %vm104, %v78, 0
    %4612 = vmatprep.subr.mxu0 0.0
    %4613 = vmatpush1.msra.mxu0 %v77
    %4614 = vmatprep.subr.mxu0 0.0
    %4615 = vmatpush1.msra.mxu0 %v4610
    %4616 = vmatprep.subr.mxu0 0.0
    %4617 = vmatpush1.msra.mxu0 0.0
    %4618 = vmatprep.subr.mxu0 0.0
    %4619 = vmatpush1.msra.mxu0 0.0
    %4620 = vmatprep.subr.mxu0 0.0
    %4621 = vmatpush1.msra.mxu0 0.0
    %4622 = vmatprep.subr.mxu0 0.0
    %4623 = vmatpush1.msra.mxu0 0.0
    %4624 = vmatprep.subr.mxu0 0.0
    %4625 = vmatpush1.msra.mxu0 0.0
    %4626 = vmatprep.subr.mxu0 0.0
    %4627 = vmatpush1.msra.mxu0 0.0
    %4628 = vmatprep.subr.mxu0 0.0
    %4629 = vmatpush1.msra.mxu0 0.0
    %4630 = vmatprep.subr.mxu0 0.0
    %4631 = vmatpush1.msra.mxu0 0.0
    %4632 = vmatprep.subr.mxu0 0.0
    %4633 = vmatpush1.msra.mxu0 0.0
    %4634 = vmatprep.subr.mxu0 0.0
    %4635 = vmatpush1.msra.mxu0 0.0
    %4636 = vmatprep.subr.mxu0 0.0
    %4637 = vmatpush1.msra.mxu0 0.0
    %4638 = vmatprep.subr.mxu0 0.0
    %4639 = vmatpush1.msra.mxu0 0.0
    %4640 = vmatprep.subr.mxu0 0.0
    %4641 = vmatpush1.msra.mxu0 0.0
    %4642 = vmatprep.subr.mxu0 0.0
    %4643 = vmatpush1.msra.mxu0 0.0
    %4644 = vmatprep.subr.mxu0 0.0
    %4645 = vmatpush1.msra.mxu0 0.0
    %4646 = vmatprep.subr.mxu0 0.0
    %4647 = vmatpush1.msra.mxu0 0.0
    %4648 = vmatprep.subr.mxu0 0.0
    %4649 = vmatpush1.msra.mxu0 0.0
    %4650 = vmatprep.subr.mxu0 0.0
    %4651 = vmatpush1.msra.mxu0 0.0
    %4652 = vmatprep.subr.mxu0 0.0
    %4653 = vmatpush1.msra.mxu0 0.0
    %4654 = vmatprep.subr.mxu0 0.0
    %4655 = vmatpush1.msra.mxu0 0.0
    %4656 = vmatprep.subr.mxu0 0.0
    %4657 = vmatpush1.msra.mxu0 0.0
    %4658 = vmatprep.subr.mxu0 0.0
    %4659 = vmatpush1.msra.mxu0 0.0
    %4660 = vmatprep.subr.mxu0 0.0
    %4661 = vmatpush1.msra.mxu0 0.0
    %4662 = vmatprep.subr.mxu0 0.0
    %4663 = vmatpush1.msra.mxu0 0.0
    %4664 = vmatprep.subr.mxu0 0.0
    %4665 = vmatpush1.msra.mxu0 0.0
    %4666 = vmatprep.subr.mxu0 0.0
    %4667 = vmatpush1.msra.mxu0 0.0
    %4668 = vmatprep.subr.mxu0 0.0
    %4669 = vmatpush1.msra.mxu0 0.0
    %4670 = vmatprep.subr.mxu0 0.0
    %4671 = vmatpush1.msra.mxu0 0.0
    %4672 = vmatprep.subr.mxu0 0.0
    %4673 = vmatpush1.msra.mxu0 0.0
    %4674 = vmatprep.subr.mxu0 0.0
    %4675 = vmatpush1.msra.mxu0 0.0
    %4676 = vmatprep.mubr.f32.mxu0 0.0
    %4677 = vmatmul.mubr.f32.gmra.mrb[0].mxu0 %v4607
    %v4678 = vpop.f32.mrb[0].mxu0
    %v4679 = vadd.f32 0.0, %v4678
    %v4680 = vpop.f32.mrb[0].mxu0
    %4681 = vdwg.mxu0
    %v4682 = vsel %vm904, %v1628, 0
    %4684 = vmatprep.subr.mxu0 0.0
    %4685 = vmatpush1.msra.mxu0 %v77
    %4686 = vmatprep.subr.mxu0 0.0
    %4687 = vmatpush1.msra.mxu0 %v4610
    %4688 = vmatprep.subr.mxu0 0.0
    %4689 = vmatpush1.msra.mxu0 0.0
    %4690 = vmatprep.subr.mxu0 0.0
    %4691 = vmatpush1.msra.mxu0 0.0
    %4692 = vmatprep.subr.mxu0 0.0
    %4693 = vmatpush1.msra.mxu0 0.0
    %4694 = vmatprep.subr.mxu0 0.0
    %4695 = vmatpush1.msra.mxu0 0.0
    %4696 = vmatprep.subr.mxu0 0.0
    %4697 = vmatpush1.msra.mxu0 0.0
    %4698 = vmatprep.subr.mxu0 0.0
    %4699 = vmatpush1.msra.mxu0 0.0
    %4700 = vmatprep.subr.mxu0 0.0
    %4701 = vmatpush1.msra.mxu0 0.0
    %4702 = vmatprep.subr.mxu0 0.0
    %4703 = vmatpush1.msra.mxu0 0.0
    %4704 = vmatprep.subr.mxu0 0.0
    %4705 = vmatpush1.msra.mxu0 0.0
    %4706 = vmatprep.subr.mxu0 0.0
    %4707 = vmatpush1.msra.mxu0 0.0
    %4708 = vmatprep.subr.mxu0 0.0
    %4709 = vmatpush1.msra.mxu0 0.0
    %4710 = vmatprep.subr.mxu0 0.0
    %4711 = vmatpush1.msra.mxu0 0.0
    %4712 = vmatprep.subr.mxu0 0.0
    %4713 = vmatpush1.msra.mxu0 0.0
    %4714 = vmatprep.subr.mxu0 0.0
    %4715 = vmatpush1.msra.mxu0 0.0
    %4716 = vmatprep.subr.mxu0 0.0
    %4717 = vmatpush1.msra.mxu0 0.0
    %4718 = vmatprep.subr.mxu0 0.0
    %4719 = vmatpush1.msra.mxu0 0.0
    %4720 = vmatprep.subr.mxu0 0.0
    %4721 = vmatpush1.msra.mxu0 0.0
    %4722 = vmatprep.subr.mxu0 0.0
    %4723 = vmatpush1.msra.mxu0 0.0
    %4724 = vmatprep.subr.mxu0 0.0
    %4725 = vmatpush1.msra.mxu0 0.0
    %4726 = vmatprep.subr.mxu0 0.0
    %4727 = vmatpush1.msra.mxu0 0.0
    %4728 = vmatprep.subr.mxu0 0.0
    %4729 = vmatpush1.msra.mxu0 0.0
    %4730 = vmatprep.subr.mxu0 0.0
    %4731 = vmatpush1.msra.mxu0 0.0
    %4732 = vmatprep.subr.mxu0 0.0
    %4733 = vmatpush1.msra.mxu0 0.0
    %4734 = vmatprep.subr.mxu0 0.0
    %4735 = vmatpush1.msra.mxu0 0.0
    %4736 = vmatprep.subr.mxu0 0.0
    %4737 = vmatpush1.msra.mxu0 0.0
    %4738 = vmatprep.subr.mxu0 0.0
    %4739 = vmatpush1.msra.mxu0 0.0
    %4740 = vmatprep.subr.mxu0 0.0
    %4741 = vmatpush1.msra.mxu0 0.0
    %4742 = vmatprep.subr.mxu0 0.0
    %4743 = vmatpush1.msra.mxu0 0.0
    %4744 = vmatprep.subr.mxu0 0.0
    %4745 = vmatpush1.msra.mxu0 0.0
    %4746 = vmatprep.subr.mxu0 0.0
    %4747 = vmatpush1.msra.mxu0 0.0
    %4748 = vmatprep.mubr.f32.mxu0 0.0
    %4749 = vmatmul.mubr.f32.gmra.mrb[0].mxu0 %v4682
    %v4750 = vpop.f32.mrb[0].mxu0
    %v4751 = vadd.f32 0.0, %v4750
    %v4752 = vpop.f32.mrb[0].mxu0
    %4753 = vdwg.mxu0
    %v4754 = vsel %vm904, %v3117, 0
    %4756 = vmatprep.subr.mxu0 0.0
    %4757 = vmatpush1.msra.mxu0 %v77
    %4758 = vmatprep.subr.mxu0 0.0
    %4759 = vmatpush1.msra.mxu0 %v4610
    %4760 = vmatprep.subr.mxu0 0.0
    %4761 = vmatpush1.msra.mxu0 0.0
    %4762 = vmatprep.subr.mxu0 0.0
    %4763 = vmatpush1.msra.mxu0 0.0
    %4764 = vmatprep.subr.mxu0 0.0
    %4765 = vmatpush1.msra.mxu0 0.0
    %4766 = vmatprep.subr.mxu0 0.0
    %4767 = vmatpush1.msra.mxu0 0.0
    %4768 = vmatprep.subr.mxu0 0.0
    %4769 = vmatpush1.msra.mxu0 0.0
    %4770 = vmatprep.subr.mxu0 0.0
    %4771 = vmatpush1.msra.mxu0 0.0
    %4772 = vmatprep.subr.mxu0 0.0
    %4773 = vmatpush1.msra.mxu0 0.0
    %4774 = vmatprep.subr.mxu0 0.0
    %4775 = vmatpush1.msra.mxu0 0.0
    %4776 = vmatprep.subr.mxu0 0.0
    %4777 = vmatpush1.msra.mxu0 0.0
    %4778 = vmatprep.subr.mxu0 0.0
    %4779 = vmatpush1.msra.mxu0 0.0
    %4780 = vmatprep.subr.mxu0 0.0
    %4781 = vmatpush1.msra.mxu0 0.0
    %4782 = vmatprep.subr.mxu0 0.0
    %4783 = vmatpush1.msra.mxu0 0.0
    %4784 = vmatprep.subr.mxu0 0.0
    %4785 = vmatpush1.msra.mxu0 0.0
    %4786 = vmatprep.subr.mxu0 0.0
    %4787 = vmatpush1.msra.mxu0 0.0
    %4788 = vmatprep.subr.mxu0 0.0
    %4789 = vmatpush1.msra.mxu0 0.0
    %4790 = vmatprep.subr.mxu0 0.0
    %4791 = vmatpush1.msra.mxu0 0.0
    %4792 = vmatprep.subr.mxu0 0.0
    %4793 = vmatpush1.msra.mxu0 0.0
    %4794 = vmatprep.subr.mxu0 0.0
    %4795 = vmatpush1.msra.mxu0 0.0
    %4796 = vmatprep.subr.mxu0 0.0
    %4797 = vmatpush1.msra.mxu0 0.0
    %4798 = vmatprep.subr.mxu0 0.0
    %4799 = vmatpush1.msra.mxu0 0.0
    %4800 = vmatprep.subr.mxu0 0.0
    %4801 = vmatpush1.msra.mxu0 0.0
    %4802 = vmatprep.subr.mxu0 0.0
    %4803 = vmatpush1.msra.mxu0 0.0
    %4804 = vmatprep.subr.mxu0 0.0
    %4805 = vmatpush1.msra.mxu0 0.0
    %4806 = vmatprep.subr.mxu0 0.0
    %4807 = vmatpush1.msra.mxu0 0.0
    %4808 = vmatprep.subr.mxu0 0.0
    %4809 = vmatpush1.msra.mxu0 0.0
    %4810 = vmatprep.subr.mxu0 0.0
    %4811 = vmatpush1.msra.mxu0 0.0
    %4812 = vmatprep.subr.mxu0 0.0
    %4813 = vmatpush1.msra.mxu0 0.0
    %4814 = vmatprep.subr.mxu0 0.0
    %4815 = vmatpush1.msra.mxu0 0.0
    %4816 = vmatprep.subr.mxu0 0.0
    %4817 = vmatpush1.msra.mxu0 0.0
    %4818 = vmatprep.subr.mxu0 0.0
    %4819 = vmatpush1.msra.mxu0 0.0
    %4820 = vmatprep.mubr.f32.mxu0 0.0
    %4821 = vmatmul.mubr.f32.gmra.mrb[0].mxu0 %v4754
    %v4822 = vpop.f32.mrb[0].mxu0
    %v4823 = vadd.f32 0.0, %v4822
    %v4824 = vpop.f32.mrb[0].mxu0
    %4825 = vdwg.mxu0
    %v4827 = vsel %vm904, %v4606, 0
    %4829 = vmatprep.subr.mxu0 0.0
    %4830 = vmatpush1.msra.mxu0 %v77
    %4831 = vmatprep.subr.mxu0 0.0
    %4832 = vmatpush1.msra.mxu0 %v4610
    %4833 = vmatprep.subr.mxu0 0.0
    %4834 = vmatpush1.msra.mxu0 0.0
    %4835 = vmatprep.subr.mxu0 0.0
    %4836 = vmatpush1.msra.mxu0 0.0
    %4837 = vmatprep.subr.mxu0 0.0
    %4838 = vmatpush1.msra.mxu0 0.0
    %4839 = vmatprep.subr.mxu0 0.0
    %4840 = vmatpush1.msra.mxu0 0.0
    %4841 = vmatprep.subr.mxu0 0.0
    %4842 = vmatpush1.msra.mxu0 0.0
    %4843 = vmatprep.subr.mxu0 0.0
    %4844 = vmatpush1.msra.mxu0 0.0
    %4845 = vmatprep.subr.mxu0 0.0
    %4846 = vmatpush1.msra.mxu0 0.0
    %4847 = vmatprep.subr.mxu0 0.0
    %4848 = vmatpush1.msra.mxu0 0.0
    %4849 = vmatprep.subr.mxu0 0.0
    %4850 = vmatpush1.msra.mxu0 0.0
    %4851 = vmatprep.subr.mxu0 0.0
    %4852 = vmatpush1.msra.mxu0 0.0
    %4853 = vmatprep.subr.mxu0 0.0
    %4854 = vmatpush1.msra.mxu0 0.0
    %4855 = vmatprep.subr.mxu0 0.0
    %4856 = vmatpush1.msra.mxu0 0.0
    %4857 = vmatprep.subr.mxu0 0.0
    %4858 = vmatpush1.msra.mxu0 0.0
    %4859 = vmatprep.subr.mxu0 0.0
    %4860 = vmatpush1.msra.mxu0 0.0
    %4861 = vmatprep.subr.mxu0 0.0
    %4862 = vmatpush1.msra.mxu0 0.0
    %4863 = vmatprep.subr.mxu0 0.0
    %4864 = vmatpush1.msra.mxu0 0.0
    %4865 = vmatprep.subr.mxu0 0.0
    %4866 = vmatpush1.msra.mxu0 0.0
    %4867 = vmatprep.subr.mxu0 0.0
    %4868 = vmatpush1.msra.mxu0 0.0
    %4869 = vmatprep.subr.mxu0 0.0
    %4870 = vmatpush1.msra.mxu0 0.0
    %4871 = vmatprep.subr.mxu0 0.0
    %4872 = vmatpush1.msra.mxu0 0.0
    %4873 = vmatprep.subr.mxu0 0.0
    %4874 = vmatpush1.msra.mxu0 0.0
    %4875 = vmatprep.subr.mxu0 0.0
    %4876 = vmatpush1.msra.mxu0 0.0
    %4877 = vmatprep.subr.mxu0 0.0
    %4878 = vmatpush1.msra.mxu0 0.0
    %4879 = vmatprep.subr.mxu0 0.0
    %4880 = vmatpush1.msra.mxu0 0.0
    %4881 = vmatprep.subr.mxu0 0.0
    %4882 = vmatpush1.msra.mxu0 0.0
    %4883 = vmatprep.subr.mxu0 0.0
    %4884 = vmatpush1.msra.mxu0 0.0
    %4885 = vmatprep.subr.mxu0 0.0
    %4886 = vmatpush1.msra.mxu0 0.0
    %4887 = vmatprep.subr.mxu0 0.0
    %4888 = vmatpush1.msra.mxu0 0.0
    %4889 = vmatprep.subr.mxu0 0.0
    %4890 = vmatpush1.msra.mxu0 0.0
    %4891 = vmatprep.subr.mxu0 0.0
    %4892 = vmatpush1.msra.mxu0 0.0
    %4893 = vmatprep.mubr.f32.mxu0 0.0
    %4894 = vmatmul.mubr.f32.gmra.mrb[0].mxu0 %v4827
    %v4895 = vpop.f32.mrb[0].mxu0
    %v4896 = vadd.f32 0.0, %v4895
    %v4897 = vpop.f32.mrb[0].mxu0
    %4898 = vdwg.mxu0
    %v4900 = vrot.slane %v4751, 4
    %v4903 = vrot.slane %v4823, 6
    %v4905 = vsel %vm104, %v4679, %v4900
    %v4906 = vsel %vm192, %v4900, %v4903
    %4907 = vxpose.xlu0.b32.start [1/16] %v4905, 128
    %4908 = vxpose.xlu0.b32.cont [2/16] %v4906, 128
    %4909 = vxpose.xlu0.b32.cont [3/16] %v4896, 128
    %4910 = vxpose.xlu0.b32.cont [4/16] 0.0, 128
    %4911 = vxpose.xlu0.b32.cont [5/16] 0.0, 128
    %4912 = vxpose.xlu0.b32.cont [6/16] 0.0, 128
    %4913 = vxpose.xlu0.b32.cont [7/16] 0.0, 128
    %4914 = vxpose.xlu0.b32.cont [8/16] 0.0, 128
    %4915 = vxpose.xlu0.b32.cont [9/16] 0.0, 128
    %4916 = vxpose.xlu0.b32.cont [10/16] 0.0, 128
    %4917 = vxpose.xlu0.b32.cont [11/16] 0.0, 128
    %4918 = vxpose.xlu0.b32.cont [12/16] 0.0, 128
    %4919 = vxpose.xlu0.b32.cont [13/16] 0.0, 128
    %4920 = vxpose.xlu0.b32.cont [14/16] 0.0, 128
    %4921 = vxpose.xlu0.b32.cont [15/16] 0.0, 128
    %4922 = vxpose.xlu0.b32.end [16/16] 0.0, 128
    %v4923 = vpop.trf.xlu0
    %v4924 = vpop.trf.xlu0
    %v4925 = vpop.trf.xlu0
    %v4926 = vpop.trf.xlu0
    %v4927 = vpop.trf.xlu0
    %v4928 = vpop.trf.xlu0
    %v4929 = vpop.trf.xlu0
    %v4930 = vpop.trf.xlu0
    %v4931 = vpop.trf.xlu0
    %v4932 = vpop.trf.xlu0
    %v4933 = vpop.trf.xlu0
    %v4934 = vpop.trf.xlu0
    %v4935 = vpop.trf.xlu0
    %v4936 = vpop.trf.xlu0
    %v4937 = vpop.trf.xlu0
    %v4938 = vpop.trf.xlu0
    %v4939 = vld [vmem:[#allocation8 + $0xf0] sm:$0xff]
    %v4940 = vld [vmem:[#allocation8 + $0xf8] sm:$0xff]
    %v4941 = vld [vmem:[#allocation8 + $0x100] sm:$0x3f]
    %v4942 = vld [vmem:[#allocation8 + $0x108] sm:$0x1]
    %v4943 = vlaneseq
    %v4944 = vshrl.u32 %v4943, 7
    %v4945 = vsub.s32 0, %v4944
    %v4946 = vrot.slane %v4942, %v4945
    %vm4947 = vcmask 179200
    %v4949 = vsel %vm4947, %v4923, 0
    %v4952 = vsel %vm929, %v4941, 0
    %4954 = vmatprep.subr.mxu0 0.0
    %4955 = vmatpush1.msra.mxu0 %v4939
    %4956 = vmatprep.subr.mxu0 0.0
    %4957 = vmatpush1.msra.mxu0 %v4940
    %4958 = vmatprep.subr.mxu0 0.0
    %4959 = vmatpush1.msra.mxu0 %v4952
    %4960 = vmatprep.subr.mxu0 0.0
    %4961 = vmatpush1.msra.mxu0 0.0
    %4962 = vmatprep.subr.mxu0 0.0
    %4963 = vmatpush1.msra.mxu0 0.0
    %4964 = vmatprep.subr.mxu0 0.0
    %4965 = vmatpush1.msra.mxu0 0.0
    %4966 = vmatprep.subr.mxu0 0.0
    %4967 = vmatpush1.msra.mxu0 0.0
    %4968 = vmatprep.subr.mxu0 0.0
    %4969 = vmatpush1.msra.mxu0 0.0
    %4970 = vmatprep.subr.mxu0 0.0
    %4971 = vmatpush1.msra.mxu0 0.0
    %4972 = vmatprep.subr.mxu0 0.0
    %4973 = vmatpush1.msra.mxu0 0.0
    %4974 = vmatprep.subr.mxu0 0.0
    %4975 = vmatpush1.msra.mxu0 0.0
    %4976 = vmatprep.subr.mxu0 0.0
    %4977 = vmatpush1.msra.mxu0 0.0
    %4978 = vmatprep.subr.mxu0 0.0
    %4979 = vmatpush1.msra.mxu0 0.0
    %4980 = vmatprep.subr.mxu0 0.0
    %4981 = vmatpush1.msra.mxu0 0.0
    %4982 = vmatprep.subr.mxu0 0.0
    %4983 = vmatpush1.msra.mxu0 0.0
    %4984 = vmatprep.subr.mxu0 0.0
    %4985 = vmatpush1.msra.mxu0 0.0
    %4986 = vmatprep.subr.mxu0 0.0
    %4987 = vmatpush1.msra.mxu0 0.0
    %4988 = vmatprep.subr.mxu0 0.0
    %4989 = vmatpush1.msra.mxu0 0.0
    %4990 = vmatprep.subr.mxu0 0.0
    %4991 = vmatpush1.msra.mxu0 0.0
    %4992 = vmatprep.subr.mxu0 0.0
    %4993 = vmatpush1.msra.mxu0 0.0
    %4994 = vmatprep.subr.mxu0 0.0
    %4995 = vmatpush1.msra.mxu0 0.0
    %4996 = vmatprep.subr.mxu0 0.0
    %4997 = vmatpush1.msra.mxu0 0.0
    %4998 = vmatprep.subr.mxu0 0.0
    %4999 = vmatpush1.msra.mxu0 0.0
    %5000 = vmatprep.subr.mxu0 0.0
    %5001 = vmatpush1.msra.mxu0 0.0
    %5002 = vmatprep.subr.mxu0 0.0
    %5003 = vmatpush1.msra.mxu0 0.0
    %5004 = vmatprep.subr.mxu0 0.0
    %5005 = vmatpush1.msra.mxu0 0.0
    %5006 = vmatprep.subr.mxu0 0.0
    %5007 = vmatpush1.msra.mxu0 0.0
    %5008 = vmatprep.subr.mxu0 0.0
    %5009 = vmatpush1.msra.mxu0 0.0
    %5010 = vmatprep.subr.mxu0 0.0
    %5011 = vmatpush1.msra.mxu0 0.0
    %5012 = vmatprep.subr.mxu0 0.0
    %5013 = vmatpush1.msra.mxu0 0.0
    %5014 = vmatprep.subr.mxu0 0.0
    %5015 = vmatpush1.msra.mxu0 0.0
    %5016 = vmatprep.subr.mxu0 0.0
    %5017 = vmatpush1.msra.mxu0 0.0
    %5018 = vmatprep.mubr.f32.mxu0 0.0
    %5019 = vmatmul.mubr.f32.gmra.mrb[0].mxu0 %v4949
    %v5020 = vpop.f32.mrb[0].mxu0
    %v5021 = vadd.f32 %v4946, %v5020
    %v5022 = vpop.f32.mrb[0].mxu0
    %5023 = vdwg.mxu0
    %v5024 = vmax.f32 %v5021, 0.0
    %v5025 = vld [vmem:[#allocation8 + $0x110] sm:$0xff]
    %v5026 = vld [vmem:[#allocation8 + $0x118] sm:$0xff]
    %v5027 = vld [vmem:[#allocation8 + $0x120] sm:$0x1]
    %v5028 = vlaneseq
    %v5029 = vshrl.u32 %v5028, 7
    %v5030 = vsub.s32 0, %v5029
    %v5031 = vrot.slane %v5027, %v5030
    %vm5032 = vcmask 130048
    %v5034 = vsel %vm5032, %v5024, 0
    %5036 = vmatprep.subr.mxu0 0.0
    %5037 = vmatpush1.msra.mxu0 %v5025
    %5038 = vmatprep.subr.mxu0 0.0
    %5039 = vmatpush1.msra.mxu0 %v5026
    %5040 = vmatprep.subr.mxu0 0.0
    %5041 = vmatpush1.msra.mxu0 0.0
    %5042 = vmatprep.subr.mxu0 0.0
    %5043 = vmatpush1.msra.mxu0 0.0
    %5044 = vmatprep.subr.mxu0 0.0
    %5045 = vmatpush1.msra.mxu0 0.0
    %5046 = vmatprep.subr.mxu0 0.0
    %5047 = vmatpush1.msra.mxu0 0.0
    %5048 = vmatprep.subr.mxu0 0.0
    %5049 = vmatpush1.msra.mxu0 0.0
    %5050 = vmatprep.subr.mxu0 0.0
    %5051 = vmatpush1.msra.mxu0 0.0
    %5052 = vmatprep.subr.mxu0 0.0
    %5053 = vmatpush1.msra.mxu0 0.0
    %5054 = vmatprep.subr.mxu0 0.0
    %5055 = vmatpush1.msra.mxu0 0.0
    %5056 = vmatprep.subr.mxu0 0.0
    %5057 = vmatpush1.msra.mxu0 0.0
    %5058 = vmatprep.subr.mxu0 0.0
    %5059 = vmatpush1.msra.mxu0 0.0
    %5060 = vmatprep.subr.mxu0 0.0
    %5061 = vmatpush1.msra.mxu0 0.0
    %5062 = vmatprep.subr.mxu0 0.0
    %5063 = vmatpush1.msra.mxu0 0.0
    %5064 = vmatprep.subr.mxu0 0.0
    %5065 = vmatpush1.msra.mxu0 0.0
    %5066 = vmatprep.subr.mxu0 0.0
    %5067 = vmatpush1.msra.mxu0 0.0
    %5068 = vmatprep.subr.mxu0 0.0
    %5069 = vmatpush1.msra.mxu0 0.0
    %5070 = vmatprep.subr.mxu0 0.0
    %5071 = vmatpush1.msra.mxu0 0.0
    %5072 = vmatprep.subr.mxu0 0.0
    %5073 = vmatpush1.msra.mxu0 0.0
    %5074 = vmatprep.subr.mxu0 0.0
    %5075 = vmatpush1.msra.mxu0 0.0
    %5076 = vmatprep.subr.mxu0 0.0
    %5077 = vmatpush1.msra.mxu0 0.0
    %5078 = vmatprep.subr.mxu0 0.0
    %5079 = vmatpush1.msra.mxu0 0.0
    %5080 = vmatprep.subr.mxu0 0.0
    %5081 = vmatpush1.msra.mxu0 0.0
    %5082 = vmatprep.subr.mxu0 0.0
    %5083 = vmatpush1.msra.mxu0 0.0
    %5084 = vmatprep.subr.mxu0 0.0
    %5085 = vmatpush1.msra.mxu0 0.0
    %5086 = vmatprep.subr.mxu0 0.0
    %5087 = vmatpush1.msra.mxu0 0.0
    %5088 = vmatprep.subr.mxu0 0.0
    %5089 = vmatpush1.msra.mxu0 0.0
    %5090 = vmatprep.subr.mxu0 0.0
    %5091 = vmatpush1.msra.mxu0 0.0
    %5092 = vmatprep.subr.mxu0 0.0
    %5093 = vmatpush1.msra.mxu0 0.0
    %5094 = vmatprep.subr.mxu0 0.0
    %5095 = vmatpush1.msra.mxu0 0.0
    %5096 = vmatprep.subr.mxu0 0.0
    %5097 = vmatpush1.msra.mxu0 0.0
    %5098 = vmatprep.subr.mxu0 0.0
    %5099 = vmatpush1.msra.mxu0 0.0
    %5100 = vmatprep.mubr.f32.mxu0 0.0
    %5101 = vmatmul.mubr.f32.gmra.mrb[0].mxu0 %v5034
    %v5102 = vpop.f32.mrb[0].mxu0
    %v5103 = vadd.f32 %v5031, %v5102
    %v5104 = vpop.f32.mrb[0].mxu0
    %5105 = vdwg.mxu0
    %v5106 = vmax.f32 %v5103, 0.0
    %v5107 = vld [vmem:[#allocation8 + $0x128] sm:$0xff]
    %v5108 = vld [vmem:[#allocation8 + $0x130] sm:$0x1]
    %v5109 = vlaneseq
    %v5110 = vshrl.u32 %v5109, 7
    %v5111 = vsub.s32 0, %v5110
    %v5112 = vrot.slane %v5108, %v5111
    %v5114 = vsel %vm429, %v5106, 0
    %5116 = vmatprep.subr.mxu0 0.0
    %5117 = vmatpush1.msra.mxu0 %v5107
    %5118 = vmatprep.subr.mxu0 0.0
    %5119 = vmatpush1.msra.mxu0 0.0
    %5120 = vmatprep.subr.mxu0 0.0
    %5121 = vmatpush1.msra.mxu0 0.0
    %5122 = vmatprep.subr.mxu0 0.0
    %5123 = vmatpush1.msra.mxu0 0.0
    %5124 = vmatprep.subr.mxu0 0.0
    %5125 = vmatpush1.msra.mxu0 0.0
    %5126 = vmatprep.subr.mxu0 0.0
    %5127 = vmatpush1.msra.mxu0 0.0
    %5128 = vmatprep.subr.mxu0 0.0
    %5129 = vmatpush1.msra.mxu0 0.0
    %5130 = vmatprep.subr.mxu0 0.0
    %5131 = vmatpush1.msra.mxu0 0.0
    %5132 = vmatprep.subr.mxu0 0.0
    %5133 = vmatpush1.msra.mxu0 0.0
    %5134 = vmatprep.subr.mxu0 0.0
    %5135 = vmatpush1.msra.mxu0 0.0
    %5136 = vmatprep.subr.mxu0 0.0
    %5137 = vmatpush1.msra.mxu0 0.0
    %5138 = vmatprep.subr.mxu0 0.0
    %5139 = vmatpush1.msra.mxu0 0.0
    %5140 = vmatprep.subr.mxu0 0.0
    %5141 = vmatpush1.msra.mxu0 0.0
    %5142 = vmatprep.subr.mxu0 0.0
    %5143 = vmatpush1.msra.mxu0 0.0
    %5144 = vmatprep.subr.mxu0 0.0
    %5145 = vmatpush1.msra.mxu0 0.0
    %5146 = vmatprep.subr.mxu0 0.0
    %5147 = vmatpush1.msra.mxu0 0.0
    %5148 = vmatprep.subr.mxu0 0.0
    %5149 = vmatpush1.msra.mxu0 0.0
    %5150 = vmatprep.subr.mxu0 0.0
    %5151 = vmatpush1.msra.mxu0 0.0
    %5152 = vmatprep.subr.mxu0 0.0
    %5153 = vmatpush1.msra.mxu0 0.0
    %5154 = vmatprep.subr.mxu0 0.0
    %5155 = vmatpush1.msra.mxu0 0.0
    %5156 = vmatprep.subr.mxu0 0.0
    %5157 = vmatpush1.msra.mxu0 0.0
    %5158 = vmatprep.subr.mxu0 0.0
    %5159 = vmatpush1.msra.mxu0 0.0
    %5160 = vmatprep.subr.mxu0 0.0
    %5161 = vmatpush1.msra.mxu0 0.0
    %5162 = vmatprep.subr.mxu0 0.0
    %5163 = vmatpush1.msra.mxu0 0.0
    %5164 = vmatprep.subr.mxu0 0.0
    %5165 = vmatpush1.msra.mxu0 0.0
    %5166 = vmatprep.subr.mxu0 0.0
    %5167 = vmatpush1.msra.mxu0 0.0
    %5168 = vmatprep.subr.mxu0 0.0
    %5169 = vmatpush1.msra.mxu0 0.0
    %5170 = vmatprep.subr.mxu0 0.0
    %5171 = vmatpush1.msra.mxu0 0.0
    %5172 = vmatprep.subr.mxu0 0.0
    %5173 = vmatpush1.msra.mxu0 0.0
    %5174 = vmatprep.subr.mxu0 0.0
    %5175 = vmatpush1.msra.mxu0 0.0
    %5176 = vmatprep.subr.mxu0 0.0
    %5177 = vmatpush1.msra.mxu0 0.0
    %5178 = vmatprep.subr.mxu0 0.0
    %5179 = vmatpush1.msra.mxu0 0.0
    %5180 = vmatprep.mubr.f32.mxu0 0.0
    %5181 = vmatmul.mubr.f32.gmra.mrb[0].mxu0 %v5114
    %v5182 = vpop.f32.mrb[0].mxu0
    %v5183 = vadd.f32 %v5112, %v5182
    %v5184 = vpop.f32.mrb[0].mxu0
    %5185 = vdwg.mxu0
    %v5186 = vld [vmem:[#allocation8 + $0x138] sm:$0xff]
    %v5187 = vld [vmem:[#allocation8 + $0x140] sm:$0xff]
    %v5188 = vld [vmem:[#allocation8 + $0x148] sm:$0x3f]
    %v5189 = vld [vmem:[#allocation8 + $0x150] sm:$0x1]
    %v5190 = vlaneseq
    %v5191 = vshrl.u32 %v5190, 7
    %v5192 = vsub.s32 0, %v5191
    %v5193 = vrot.slane %v5189, %v5192
    %v5195 = vsel %vm929, %v5188, 0
    %5197 = vmatprep.subr.mxu0 0.0
    %5198 = vmatpush1.msra.mxu0 %v5186
    %5199 = vmatprep.subr.mxu0 0.0
    %5200 = vmatpush1.msra.mxu0 %v5187
    %5201 = vmatprep.subr.mxu0 0.0
    %5202 = vmatpush1.msra.mxu0 %v5195
    %5203 = vmatprep.subr.mxu0 0.0
    %5204 = vmatpush1.msra.mxu0 0.0
    %5205 = vmatprep.subr.mxu0 0.0
    %5206 = vmatpush1.msra.mxu0 0.0
    %5207 = vmatprep.subr.mxu0 0.0
    %5208 = vmatpush1.msra.mxu0 0.0
    %5209 = vmatprep.subr.mxu0 0.0
    %5210 = vmatpush1.msra.mxu0 0.0
    %5211 = vmatprep.subr.mxu0 0.0
    %5212 = vmatpush1.msra.mxu0 0.0
    %5213 = vmatprep.subr.mxu0 0.0
    %5214 = vmatpush1.msra.mxu0 0.0
    %5215 = vmatprep.subr.mxu0 0.0
    %5216 = vmatpush1.msra.mxu0 0.0
    %5217 = vmatprep.subr.mxu0 0.0
    %5218 = vmatpush1.msra.mxu0 0.0
    %5219 = vmatprep.subr.mxu0 0.0
    %5220 = vmatpush1.msra.mxu0 0.0
    %5221 = vmatprep.subr.mxu0 0.0
    %5222 = vmatpush1.msra.mxu0 0.0
    %5223 = vmatprep.subr.mxu0 0.0
    %5224 = vmatpush1.msra.mxu0 0.0
    %5225 = vmatprep.subr.mxu0 0.0
    %5226 = vmatpush1.msra.mxu0 0.0
    %5227 = vmatprep.subr.mxu0 0.0
    %5228 = vmatpush1.msra.mxu0 0.0
    %5229 = vmatprep.subr.mxu0 0.0
    %5230 = vmatpush1.msra.mxu0 0.0
    %5231 = vmatprep.subr.mxu0 0.0
    %5232 = vmatpush1.msra.mxu0 0.0
    %5233 = vmatprep.subr.mxu0 0.0
    %5234 = vmatpush1.msra.mxu0 0.0
    %5235 = vmatprep.subr.mxu0 0.0
    %5236 = vmatpush1.msra.mxu0 0.0
    %5237 = vmatprep.subr.mxu0 0.0
    %5238 = vmatpush1.msra.mxu0 0.0
    %5239 = vmatprep.subr.mxu0 0.0
    %5240 = vmatpush1.msra.mxu0 0.0
    %5241 = vmatprep.subr.mxu0 0.0
    %5242 = vmatpush1.msra.mxu0 0.0
    %5243 = vmatprep.subr.mxu0 0.0
    %5244 = vmatpush1.msra.mxu0 0.0
    %5245 = vmatprep.subr.mxu0 0.0
    %5246 = vmatpush1.msra.mxu0 0.0
    %5247 = vmatprep.subr.mxu0 0.0
    %5248 = vmatpush1.msra.mxu0 0.0
    %5249 = vmatprep.subr.mxu0 0.0
    %5250 = vmatpush1.msra.mxu0 0.0
    %5251 = vmatprep.subr.mxu0 0.0
    %5252 = vmatpush1.msra.mxu0 0.0
    %5253 = vmatprep.subr.mxu0 0.0
    %5254 = vmatpush1.msra.mxu0 0.0
    %5255 = vmatprep.subr.mxu0 0.0
    %5256 = vmatpush1.msra.mxu0 0.0
    %5257 = vmatprep.subr.mxu0 0.0
    %5258 = vmatpush1.msra.mxu0 0.0
    %5259 = vmatprep.subr.mxu0 0.0
    %5260 = vmatpush1.msra.mxu0 0.0
    %5261 = vmatprep.mubr.f32.mxu0 0.0
    %5262 = vmatmul.mubr.f32.gmra.mrb[0].mxu0 %v4949
    %v5263 = vpop.f32.mrb[0].mxu0
    %v5264 = vadd.f32 %v5193, %v5263
    %v5265 = vpop.f32.mrb[0].mxu0
    %5266 = vdwg.mxu0
    %v5267 = vmax.f32 %v5264, 0.0
    %v5268 = vld [vmem:[#allocation8 + $0x158] sm:$0xff]
    %v5269 = vld [vmem:[#allocation8 + $0x160] sm:$0xff]
    %v5270 = vld [vmem:[#allocation8 + $0x168] sm:$0xff]
    %v5271 = vld [vmem:[#allocation8 + $0x170] sm:$0xff]
    %v5272 = vld [vmem:[#allocation8 + $0x178] sm:$0xff]
    %v5273 = vld [vmem:[#allocation8 + $0x180] sm:$0xff]
    %v5274 = vld [vmem:[#allocation8 + $0x188] sm:$0xff]
    %v5275 = vld [vmem:[#allocation8 + $0x190] sm:$0xff]
    %v5276 = vld [vmem:[#allocation8 + $0x198] sm:$0x1]
    %v5277 = vlaneseq
    %v5278 = vshrl.u32 %v5277, 7
    %v5279 = vsub.s32 0, %v5278
    %v5280 = vrot.slane %v5276, %v5279
    %vm5281 = vcmask 523264
    %v5283 = vsel %vm5281, %v5267, 0
    %5285 = vmatprep.subr.mxu0 0.0
    %5286 = vmatpush1.msra.mxu0 %v5268
    %5287 = vmatprep.subr.mxu0 0.0
    %5288 = vmatpush1.msra.mxu0 %v5269
    %5289 = vmatprep.subr.mxu0 0.0
    %5290 = vmatpush1.msra.mxu0 %v5270
    %5291 = vmatprep.subr.mxu0 0.0
    %5292 = vmatpush1.msra.mxu0 %v5271
    %5293 = vmatprep.subr.mxu0 0.0
    %5294 = vmatpush1.msra.mxu0 %v5272
    %5295 = vmatprep.subr.mxu0 0.0
    %5296 = vmatpush1.msra.mxu0 %v5273
    %5297 = vmatprep.subr.mxu0 0.0
    %5298 = vmatpush1.msra.mxu0 %v5274
    %5299 = vmatprep.subr.mxu0 0.0
    %5300 = vmatpush1.msra.mxu0 %v5275
    %5301 = vmatprep.subr.mxu0 0.0
    %5302 = vmatpush1.msra.mxu0 0.0
    %5303 = vmatprep.subr.mxu0 0.0
    %5304 = vmatpush1.msra.mxu0 0.0
    %5305 = vmatprep.subr.mxu0 0.0
    %5306 = vmatpush1.msra.mxu0 0.0
    %5307 = vmatprep.subr.mxu0 0.0
    %5308 = vmatpush1.msra.mxu0 0.0
    %5309 = vmatprep.subr.mxu0 0.0
    %5310 = vmatpush1.msra.mxu0 0.0
    %5311 = vmatprep.subr.mxu0 0.0
    %5312 = vmatpush1.msra.mxu0 0.0
    %5313 = vmatprep.subr.mxu0 0.0
    %5314 = vmatpush1.msra.mxu0 0.0
    %5315 = vmatprep.subr.mxu0 0.0
    %5316 = vmatpush1.msra.mxu0 0.0
    %5317 = vmatprep.subr.mxu0 0.0
    %5318 = vmatpush1.msra.mxu0 0.0
    %5319 = vmatprep.subr.mxu0 0.0
    %5320 = vmatpush1.msra.mxu0 0.0
    %5321 = vmatprep.subr.mxu0 0.0
    %5322 = vmatpush1.msra.mxu0 0.0
    %5323 = vmatprep.subr.mxu0 0.0
    %5324 = vmatpush1.msra.mxu0 0.0
    %5325 = vmatprep.subr.mxu0 0.0
    %5326 = vmatpush1.msra.mxu0 0.0
    %5327 = vmatprep.subr.mxu0 0.0
    %5328 = vmatpush1.msra.mxu0 0.0
    %5329 = vmatprep.subr.mxu0 0.0
    %5330 = vmatpush1.msra.mxu0 0.0
    %5331 = vmatprep.subr.mxu0 0.0
    %5332 = vmatpush1.msra.mxu0 0.0
    %5333 = vmatprep.subr.mxu0 0.0
    %5334 = vmatpush1.msra.mxu0 0.0
    %5335 = vmatprep.subr.mxu0 0.0
    %5336 = vmatpush1.msra.mxu0 0.0
    %5337 = vmatprep.subr.mxu0 0.0
    %5338 = vmatpush1.msra.mxu0 0.0
    %5339 = vmatprep.subr.mxu0 0.0
    %5340 = vmatpush1.msra.mxu0 0.0
    %5341 = vmatprep.subr.mxu0 0.0
    %5342 = vmatpush1.msra.mxu0 0.0
    %5343 = vmatprep.subr.mxu0 0.0
    %5344 = vmatpush1.msra.mxu0 0.0
    %5345 = vmatprep.subr.mxu0 0.0
    %5346 = vmatpush1.msra.mxu0 0.0
    %5347 = vmatprep.subr.mxu0 0.0
    %5348 = vmatpush1.msra.mxu0 0.0
    %5349 = vmatprep.mubr.f32.mxu0 0.0
    %5350 = vmatmul.mubr.f32.gmra.mrb[0].mxu0 %v5283
    %v5351 = vpop.f32.mrb[0].mxu0
    %v5352 = vadd.f32 %v5280, %v5351
    %v5353 = vpop.f32.mrb[0].mxu0
    %5354 = vdwg.mxu0
    %v5355 = vmax.f32 %v5352, 0.0
    %v5356 = vld [vmem:[#allocation8 + $0x1a0] sm:$0xff]
    %v5357 = vld [vmem:[#allocation8 + $0x1a8] sm:$0xff]
    %v5358 = vld [vmem:[#allocation8 + $0x1b0] sm:$0xff]
    %v5359 = vld [vmem:[#allocation8 + $0x1b8] sm:$0xff]
    %v5360 = vld [vmem:[#allocation8 + $0x1c0] sm:$0xff]
    %v5361 = vld [vmem:[#allocation8 + $0x1c8] sm:$0xff]
    %v5362 = vld [vmem:[#allocation8 + $0x1d0] sm:$0xff]
    %v5363 = vld [vmem:[#allocation8 + $0x1d8] sm:$0xff]
    %v5364 = vld [vmem:[#allocation8 + $0x1e0] sm:$0x1]
    %v5365 = vlaneseq
    %v5366 = vshrl.u32 %v5365, 7
    %v5367 = vsub.s32 0, %v5366
    %v5368 = vrot.slane %v5364, %v5367
    %v5370 = vsel %vm5281, %v5355, 0
    %5372 = vmatprep.subr.mxu0 0.0
    %5373 = vmatpush1.msra.mxu0 %v5356
    %5374 = vmatprep.subr.mxu0 0.0
    %5375 = vmatpush1.msra.mxu0 %v5357
    %5376 = vmatprep.subr.mxu0 0.0
    %5377 = vmatpush1.msra.mxu0 %v5358
    %5378 = vmatprep.subr.mxu0 0.0
    %5379 = vmatpush1.msra.mxu0 %v5359
    %5380 = vmatprep.subr.mxu0 0.0
    %5381 = vmatpush1.msra.mxu0 %v5360
    %5382 = vmatprep.subr.mxu0 0.0
    %5383 = vmatpush1.msra.mxu0 %v5361
    %5384 = vmatprep.subr.mxu0 0.0
    %5385 = vmatpush1.msra.mxu0 %v5362
    %5386 = vmatprep.subr.mxu0 0.0
    %5387 = vmatpush1.msra.mxu0 %v5363
    %5388 = vmatprep.subr.mxu0 0.0
    %5389 = vmatpush1.msra.mxu0 0.0
    %5390 = vmatprep.subr.mxu0 0.0
    %5391 = vmatpush1.msra.mxu0 0.0
    %5392 = vmatprep.subr.mxu0 0.0
    %5393 = vmatpush1.msra.mxu0 0.0
    %5394 = vmatprep.subr.mxu0 0.0
    %5395 = vmatpush1.msra.mxu0 0.0
    %5396 = vmatprep.subr.mxu0 0.0
    %5397 = vmatpush1.msra.mxu0 0.0
    %5398 = vmatprep.subr.mxu0 0.0
    %5399 = vmatpush1.msra.mxu0 0.0
    %5400 = vmatprep.subr.mxu0 0.0
    %5401 = vmatpush1.msra.mxu0 0.0
    %5402 = vmatprep.subr.mxu0 0.0
    %5403 = vmatpush1.msra.mxu0 0.0
    %5404 = vmatprep.subr.mxu0 0.0
    %5405 = vmatpush1.msra.mxu0 0.0
    %5406 = vmatprep.subr.mxu0 0.0
    %5407 = vmatpush1.msra.mxu0 0.0
    %5408 = vmatprep.subr.mxu0 0.0
    %5409 = vmatpush1.msra.mxu0 0.0
    %5410 = vmatprep.subr.mxu0 0.0
    %5411 = vmatpush1.msra.mxu0 0.0
    %5412 = vmatprep.subr.mxu0 0.0
    %5413 = vmatpush1.msra.mxu0 0.0
    %5414 = vmatprep.subr.mxu0 0.0
    %5415 = vmatpush1.msra.mxu0 0.0
    %5416 = vmatprep.subr.mxu0 0.0
    %5417 = vmatpush1.msra.mxu0 0.0
    %5418 = vmatprep.subr.mxu0 0.0
    %5419 = vmatpush1.msra.mxu0 0.0
    %5420 = vmatprep.subr.mxu0 0.0
    %5421 = vmatpush1.msra.mxu0 0.0
    %5422 = vmatprep.subr.mxu0 0.0
    %5423 = vmatpush1.msra.mxu0 0.0
    %5424 = vmatprep.subr.mxu0 0.0
    %5425 = vmatpush1.msra.mxu0 0.0
    %5426 = vmatprep.subr.mxu0 0.0
    %5427 = vmatpush1.msra.mxu0 0.0
    %5428 = vmatprep.subr.mxu0 0.0
    %5429 = vmatpush1.msra.mxu0 0.0
    %5430 = vmatprep.subr.mxu0 0.0
    %5431 = vmatpush1.msra.mxu0 0.0
    %5432 = vmatprep.subr.mxu0 0.0
    %5433 = vmatpush1.msra.mxu0 0.0
    %5434 = vmatprep.subr.mxu0 0.0
    %5435 = vmatpush1.msra.mxu0 0.0
    %5436 = vmatprep.mubr.f32.mxu0 0.0
    %5437 = vmatmul.mubr.f32.gmra.mrb[0].mxu0 %v5370
    %v5438 = vpop.f32.mrb[0].mxu0
    %v5439 = vadd.f32 %v5368, %v5438
    %v5440 = vpop.f32.mrb[0].mxu0
    %5441 = vdwg.mxu0
    %v5442 = vsel %vm192, %v5439, 0.0
    %5443 = vadd.xlane.f32.xlu0 %v5442
    %v5444 = vpop.xlane.xlu0 %5443
    %v5445 = vmul.f32 %v5444, 0.125
    %5447 = vset.pattern.permute.xlu0 0
    %5448 = vperm.xlu0 %5447, %v5183
    %v5449 = vpop.permute.xlu0 %5448
    %v5451 = vadd.f32 %v5449, %v5439
    %v5452 = vsub.f32 %v5451, %v5445
    %vm5453 = vcmp.eq.f32.partialorder %v79, 0.0
    %v5454 = vsel %vm5453, -1e+08, %v5452
    %5455 = vst [vmem:[#allocation10] sm:$0x3] %v5454
    // Predicated region
    $region34: #{tpu_custom_call.1} parent=1 // pred_check
      _
    $region35: #{tpu_custom_call.1} parent=1 // pred_check_branch
      %5457 = sbr.rel (0) target = $region37
    $region36: #{tpu_custom_call.1} parent=1 // pred_region
      %s5459 = ssub.s32 32, 32
      %5460 = vsyncadd [#allocation4], %s5459
      %s5462 = sshll.u32 [#allocation10], 4
      %s5463 = int_to_ptr.vmem [resolvable:$true] %s5462
      %5465 = dma.vmem_to_hbm [thread:$0]  %s5463, 32, %s4, [#allocation4]
    $region37: #{tpu_custom_call.1} parent=1 // pred_fallthru
      _
    // Predicated region
    $region38: #{tpu_custom_call.1} parent=1 // pred_check
      _
    $region39: #{tpu_custom_call.1} parent=1 // pred_check_branch
      %5467 = sbr.rel (0) target = $region41
    $region40: #{tpu_custom_call.1} parent=1 // pred_region
      %5468 = dma.done [#allocation4], 32
    $region41: #{tpu_custom_call.1} parent=1 // pred_fallthru
      _
    %5469 = vsyncpa [#allocation3], 1
    %5470 = vsyncpa [#allocation6], 1
    %5471 = vsyncpa [#allocation9], 1
    %5472 = vsyncpa [#allocation4], 1

</llo_original>
